<compile_context>
chip_gen: v7x
topology: tpu7x:2x2x1
jax: 0.10.0
libtpu: 0.0.40
codegen_flags: <defaults>
</compile_context>

<pallas_src>
import functools

import jax
import jax.numpy as jnp
import numpy as np
from jax import lax
from jax.experimental import pallas as pl
from jax.experimental.pallas import tpu as pltpu

_HIGHEST = jax.lax.Precision.HIGHEST


def _sigmoid(x):
    # written out explicitly so kernel and reference use the identical formula
    return 1.0 / (1.0 + jnp.exp(-x))


# ---------------------------------------------------------------------------
# Fused kernel: one grid step processes `tb` batch elements end-to-end.
# ---------------------------------------------------------------------------
def _tsp_fused_kernel(ba2_ref, bd2_ref,                     # SMEM scalars
                      cities_ref,                           # (tb, n, 2)
                      w1x_ref, w1y_ref, b1_ref,             # encoder layer 1 (K=2)
                      w2_ref, b2_ref,                       # encoder layer 2
                      wa1_ref, ba1_ref, wa2_ref,            # attention MLP (wa2 as (1,H) row)
                      wda_ref, wdb_ref, bd1_ref, wd2_ref,   # pairwise decoder (wd2 as (1,H) row)
                      attn_ref, pp_ref,                     # outputs: (tb, n), (tb, n, n)
                      a_sc,                                  # VMEM scratch (tb, n, H)
                      *, tb, n, ti):
    m = tb * n

    # ---- city_encoder ------------------------------------------------------
    x = cities_ref[...].reshape(m, 2)
    # K=2 contraction on the VPU: an MXU pass would waste >98% of the array.
    h = jnp.maximum(
        x[:, 0:1] * w1x_ref[...] + x[:, 1:2] * w1y_ref[...] + b1_ref[...], 0.0)   # (m, H)
    emb = jnp.dot(h, w2_ref[...], precision=_HIGHEST,
                  preferred_element_type=jnp.float32) + b2_ref[...]               # (m, E)

    # ---- attention + per-batch softmax --------------------------------------
    a = jnp.maximum(
        jnp.dot(emb, wa1_ref[...], precision=_HIGHEST,
                preferred_element_type=jnp.float32) + ba1_ref[...], 0.0)           # (m, H)
    # (m,H)@(H,1) would light a single MXU output lane; do VPU mul + XLU reduce.
    logits = jnp.sum(a.reshape(tb, n, -1) * wa2_ref[...], axis=-1) + ba2_ref[0]    # (tb, n)
    mx = jnp.max(logits, axis=-1, keepdims=True)
    ex = jnp.exp(logits - mx)
    attn_ref[...] = ex / jnp.sum(ex, axis=-1, keepdims=True)

    # ---- pairwise decoder ----------------------------------------------------
    # relu(emb_i @ W1a + emb_j @ W1b + b1) for all (i, j), computed in i-blocks
    # of `ti` rows so the (tb, ti, n, H) intermediate stays bounded in VMEM.
    a_sc[...] = jnp.dot(emb, wda_ref[...], precision=_HIGHEST,
                        preferred_element_type=jnp.float32).reshape(tb, n, -1)     # term for emb_i
    cterm = jnp.dot(emb, wdb_ref[...], precision=_HIGHEST,
                    preferred_element_type=jnp.float32).reshape(tb, n, -1)         # term for emb_j
    bd1 = bd1_ref[...]                                                             # (1, H)
    wd2 = wd2_ref[...]                                                             # (1, H)
    bd2 = bd2_ref[0]
    cterm_b = cterm[:, None, :, :]                                                 # hoisted broadcast view

    def do_block(i0, ai):
        z = jnp.maximum(ai[:, :, None, :] + cterm_b + bd1, 0.0)                    # (tb, ti, n, H)
        # Final (H -> 1) projection on the VPU/XLU, not a 1-column MXU matmul.
        s = jnp.sum(z * wd2, axis=-1) + bd2                                        # (tb, ti, n)
        p = _sigmoid(s)
        rows = lax.broadcasted_iota(jnp.int32, (tb, ti, n), 1) + i0
        cols = lax.broadcasted_iota(jnp.int32, (tb, ti, n), 2)
        return jnp.where(rows == cols, 0.0, p)                                     # zero diagonal

    n_blocks = n // ti
    if n_blocks <= 8:
        # Static unroll: Python ints -> fully static slices, no dynamic indexing.
        for ib in range(n_blocks):
            i0 = ib * ti
            pp_ref[:, i0:i0 + ti, :] = do_block(i0, a_sc[:, i0:i0 + ti, :])
    else:
        @pl.loop(0, n_blocks)
        def _(ib):
            i0 = pl.multiple_of(ib * ti, ti)
            pp_ref[:, pl.ds(i0, ti), :] = do_block(i0, a_sc[:, pl.ds(i0, ti), :])


# ---------------------------------------------------------------------------
# Wrapper
# ---------------------------------------------------------------------------
def tsp_embedding_net_forward(cities, params, *, tb=None, ti=None):
    """Returns (attention (B, N), path_probs (B, N, N)) — torch-module semantics."""
    B, N, _ = cities.shape
    H = params["enc_w1"].shape[1]
    E = params["enc_w2"].shape[1]

    # Batch tile: pack several batch elements per grid step so the MXU sees
    # tb*N-row matmuls and the per-grid-step overhead is amortized.
    if tb is None:
        tb = B
        if B * N > 1024:                         # keep tiles VMEM-friendly for big B
            for cand in range(B - 1, 0, -1):
                if B % cand == 0 and cand % 8 == 0 and cand * N <= 1024:
                    tb = cand
                    break
    assert B % tb == 0 and (tb == B or tb % 8 == 0)

    # i-tile: bound the (tb, ti, N, H) decoder intermediate to ~8 MiB so it fits
    # the scoped-VMEM default on every generation (incl. v7x's 64 MiB VMEM).
    if ti is None:
        ti = N
        while tb * ti * N * H * 4 > (8 << 20) and ti % 2 == 0:
            ti //= 2
    assert N % ti == 0

    f32 = jnp.float32
    w1x = params["enc_w1"][0:1, :]                  # (1, H)
    w1y = params["enc_w1"][1:2, :]                  # (1, H)
    wa2_row = params["att_w2"].reshape(1, H)        # (1, H) row form
    wd2_row = params["dec_w2"].reshape(1, H)        # (1, H) row form
    ba2 = params["att_b2"].reshape(1)               # scalar -> SMEM
    bd2 = params["dec_b2"].reshape(1)               # scalar -> SMEM

    full = lambda arr: pl.BlockSpec(arr.shape, lambda b: (0,) * arr.ndim)
    smem = pl.BlockSpec(memory_space=pltpu.MemorySpace.SMEM)

    kernel = functools.partial(_tsp_fused_kernel, tb=tb, n=N, ti=ti)

    attention, path_probs = pl.pallas_call(
        kernel,
        out_shape=(jax.ShapeDtypeStruct((B, N), f32),
                   jax.ShapeDtypeStruct((B, N, N), f32)),
        grid=(B // tb,),
        in_specs=[smem, smem,
                  pl.BlockSpec((tb, N, 2), lambda b: (b, 0, 0)),
                  full(w1x), full(w1y), full(params["enc_b1"]),
                  full(params["enc_w2"]), full(params["enc_b2"]),
                  full(params["att_w1"]), full(params["att_b1"]), full(wa2_row),
                  full(params["dec_w1a"]), full(params["dec_w1b"]),
                  full(params["dec_b1"]), full(wd2_row)],
        out_specs=(pl.BlockSpec((tb, N), lambda b: (b, 0)),
                   pl.BlockSpec((tb, N, N), lambda b: (b, 0, 0))),
        scratch_shapes=[pltpu.VMEM((tb, N, H), f32)],
        compiler_params=pltpu.CompilerParams(
            dimension_semantics=("parallel",)),   # v7x: batch tiles split across TCs
    )(ba2, bd2, cities,
      w1x, w1y, params["enc_b1"], params["enc_w2"], params["enc_b2"],
      params["att_w1"], params["att_b1"], wa2_row,
      params["dec_w1a"], params["dec_w1b"], params["dec_b1"], wd2_row)

    return attention, path_probs


# ---------------------------------------------------------------------------
# Deterministic parameter init (PyTorch Linear default: U(-1/sqrt(fan_in), ...))
# ---------------------------------------------------------------------------
def init_params(key, embedding_dim=32, hidden_dim=64):
    def linear(k, fan_in, fan_out):
        k1, k2 = jax.random.split(k)
        bound = 1.0 / float(np.sqrt(fan_in))
        w = jax.random.uniform(k1, (fan_in, fan_out), jnp.float32, -bound, bound)
        b = jax.random.uniform(k2, (1, fan_out), jnp.float32, -bound, bound)
        return w, b

    E, H = embedding_dim, hidden_dim
    ks = jax.random.split(key, 6)
    enc_w1, enc_b1 = linear(ks[0], 2, H)
    enc_w2, enc_b2 = linear(ks[1], H, E)
    att_w1, att_b1 = linear(ks[2], E, H)
    att_w2, att_b2 = linear(ks[3], H, 1)
    dec_w1, dec_b1 = linear(ks[4], 2 * E, H)
    dec_w2, dec_b2 = linear(ks[5], H, 1)

    return dict(
        enc_w1=enc_w1, enc_b1=enc_b1, enc_w2=enc_w2, enc_b2=enc_b2,
        att_w1=att_w1, att_b1=att_b1, att_w2=att_w2, att_b2=att_b2,
        dec_w1a=dec_w1[:E], dec_w1b=dec_w1[E:], dec_b1=dec_b1,
        dec_w2=dec_w2, dec_b2=dec_b2,
    )


# ---------------------------------------------------------------------------
# Pure-JAX reference (mirrors the torch forward; HIGHEST-precision f32 matmuls)
# ---------------------------------------------------------------------------
def reference_forward(cities, p):
    hp = _HIGHEST
    h = jnp.maximum(jnp.dot(cities, p["enc_w1"], precision=hp) + p["enc_b1"], 0.0)
    emb = jnp.dot(h, p["enc_w2"], precision=hp) + p["enc_b2"]
    a = jnp.maximum(jnp.dot(emb, p["att_w1"], precision=hp) + p["att_b1"], 0.0)
    logits = (jnp.dot(a, p["att_w2"], precision=hp) + p["att_b2"])[..., 0]
    attention = jax.nn.softmax(logits, axis=1)

    A = jnp.dot(emb, p["dec_w1a"], precision=hp)
    C = jnp.dot(emb, p["dec_w1b"], precision=hp)
    z = jnp.maximum(A[:, :, None, :] + C[:, None, :, :] + p["dec_b1"], 0.0)
    s = jnp.dot(z, p["dec_w2"], precision=hp)[..., 0] + p["dec_b2"][0, 0]
    pp = _sigmoid(s)
    eye = jnp.eye(cities.shape[1], dtype=bool)
    pp = jnp.where(eye[None, :, :], 0.0, pp)
    return attention, pp


if __name__ == "__main__":
    B, N = 2, 8
    E, H = 32, 64  # small embedding_dim / hidden_dim (module defaults are 128/256)

    key = jax.random.PRNGKey(0)
    k_param, k_city = jax.random.split(key)
    params = init_params(k_param, embedding_dim=E, hidden_dim=H)
    cities = jax.random.uniform(k_city, (B, N, 2), jnp.float32)

    attention, path_probs = tsp_embedding_net_forward(cities, params)
    attention = jax.block_until_ready(attention)
    path_probs = jax.block_until_ready(path_probs)

    ref_att, ref_pp = reference_forward(cities, params)
    assert attention.shape == (B, N) and path_probs.shape == (B, N, N)
    # f32-tight tolerance: kernel and reference both use full-precision matmuls.
    np.testing.assert_allclose(np.asarray(attention), np.asarray(ref_att), atol=2e-5, rtol=2e-5)
    np.testing.assert_allclose(np.asarray(path_probs), np.asarray(ref_pp), atol=2e-5, rtol=2e-5)

    print("KERNEL_OK")
</pallas_src>

<mosaic_0001>
module attributes {stable_mosaic.version = 11 : i64} {
  func.func @_tsp_fused_kernel(%arg0: i32, %arg1: memref<1xf32, #tpu.memory_space<smem>>, %arg2: memref<1xf32, #tpu.memory_space<smem>>, %arg3: memref<2x8x2xf32, #tpu.memory_space<vmem>>, %arg4: memref<1x64xf32, #tpu.memory_space<vmem>>, %arg5: memref<1x64xf32, #tpu.memory_space<vmem>>, %arg6: memref<1x64xf32, #tpu.memory_space<vmem>>, %arg7: memref<64x32xf32, #tpu.memory_space<vmem>>, %arg8: memref<1x32xf32, #tpu.memory_space<vmem>>, %arg9: memref<32x64xf32, #tpu.memory_space<vmem>>, %arg10: memref<1x64xf32, #tpu.memory_space<vmem>>, %arg11: memref<1x64xf32, #tpu.memory_space<vmem>>, %arg12: memref<32x64xf32, #tpu.memory_space<vmem>>, %arg13: memref<32x64xf32, #tpu.memory_space<vmem>>, %arg14: memref<1x64xf32, #tpu.memory_space<vmem>>, %arg15: memref<1x64xf32, #tpu.memory_space<vmem>>, %arg16: memref<2x8xf32, #tpu.memory_space<vmem>>, %arg17: memref<2x8x8xf32, #tpu.memory_space<vmem>>, %arg18: memref<2x8x64xf32, #tpu.memory_space<vmem>>) attributes {dimension_semantics = [#tpu.dimension_semantics<parallel>], iteration_bounds = array<i64: 1>, scalar_prefetch = 0 : i64, scratch_operands = 1 : i64, tpu.core_type = #tpu.core_type<tc>, window_params = [{transform_indices = @transform_0, window_bounds = array<i64: 1>}, {transform_indices = @transform_1, window_bounds = array<i64: 1>}, {transform_indices = @transform_2, window_bounds = array<i64: 2, 8, 2>}, {pipeline_mode = #tpu.pipeline_mode<synchronous>, transform_indices = @transform_3, window_bounds = array<i64: 1, 64>}, {pipeline_mode = #tpu.pipeline_mode<synchronous>, transform_indices = @transform_4, window_bounds = array<i64: 1, 64>}, {pipeline_mode = #tpu.pipeline_mode<synchronous>, transform_indices = @transform_5, window_bounds = array<i64: 1, 64>}, {pipeline_mode = #tpu.pipeline_mode<synchronous>, transform_indices = @transform_6, window_bounds = array<i64: 64, 32>}, {pipeline_mode = #tpu.pipeline_mode<synchronous>, transform_indices = @transform_7, window_bounds = array<i64: 1, 32>}, {pipeline_mode = #tpu.pipeline_mode<synchronous>, transform_indices = @transform_8, window_bounds = array<i64: 32, 64>}, {pipeline_mode = #tpu.pipeline_mode<synchronous>, transform_indices = @transform_9, window_bounds = array<i64: 1, 64>}, {pipeline_mode = #tpu.pipeline_mode<synchronous>, transform_indices = @transform_10, window_bounds = array<i64: 1, 64>}, {pipeline_mode = #tpu.pipeline_mode<synchronous>, transform_indices = @transform_11, window_bounds = array<i64: 32, 64>}, {pipeline_mode = #tpu.pipeline_mode<synchronous>, transform_indices = @transform_12, window_bounds = array<i64: 32, 64>}, {pipeline_mode = #tpu.pipeline_mode<synchronous>, transform_indices = @transform_13, window_bounds = array<i64: 1, 64>}, {pipeline_mode = #tpu.pipeline_mode<synchronous>, transform_indices = @transform_14, window_bounds = array<i64: 1, 64>}, {transform_indices = @transform_15, window_bounds = array<i64: 2, 8>}, {transform_indices = @transform_16, window_bounds = array<i64: 2, 8, 8>}]} {
    %c0 = arith.constant 0 : index
    %c0_0 = arith.constant 0 : index
    %c0_1 = arith.constant 0 : index
    %0 = vector.load %arg3[%c0, %c0_0, %c0_1] : memref<2x8x2xf32, #tpu.memory_space<vmem>>, vector<2x8x2xf32>
    %1 = vector.shape_cast %0 : vector<2x8x2xf32> to vector<16x2xf32>
    %2 = vector.extract_strided_slice %1 {offsets = [0, 0], sizes = [16, 1], strides = [1, 1]} : vector<16x2xf32> to vector<16x1xf32>
    %c0_2 = arith.constant 0 : index
    %c0_3 = arith.constant 0 : index
    %3 = vector.load %arg4[%c0_2, %c0_3] : memref<1x64xf32, #tpu.memory_space<vmem>>, vector<1x64xf32>
    %4 = vector.broadcast %2 : vector<16x1xf32> to vector<16x64xf32>
    %5 = vector.broadcast %3 : vector<1x64xf32> to vector<16x64xf32>
    %6 = arith.mulf %4, %5 : vector<16x64xf32>
    %7 = vector.extract_strided_slice %1 {offsets = [0, 1], sizes = [16, 1], strides = [1, 1]} : vector<16x2xf32> to vector<16x1xf32>
    %c0_4 = arith.constant 0 : index
    %c0_5 = arith.constant 0 : index
    %8 = vector.load %arg5[%c0_4, %c0_5] : memref<1x64xf32, #tpu.memory_space<vmem>>, vector<1x64xf32>
    %9 = vector.broadcast %7 : vector<16x1xf32> to vector<16x64xf32>
    %10 = vector.broadcast %8 : vector<1x64xf32> to vector<16x64xf32>
    %11 = arith.mulf %9, %10 : vector<16x64xf32>
    %12 = arith.addf %6, %11 : vector<16x64xf32>
    %c0_6 = arith.constant 0 : index
    %c0_7 = arith.constant 0 : index
    %13 = vector.load %arg6[%c0_6, %c0_7] : memref<1x64xf32, #tpu.memory_space<vmem>>, vector<1x64xf32>
    %14 = vector.broadcast %13 : vector<1x64xf32> to vector<16x64xf32>
    %15 = arith.addf %12, %14 : vector<16x64xf32>
    %cst = arith.constant 0.000000e+00 : f32
    %16 = vector.broadcast %cst : f32 to vector<16x64xf32>
    %17 = arith.maximumf %15, %16 : vector<16x64xf32>
    %c0_8 = arith.constant 0 : index
    %c0_9 = arith.constant 0 : index
    %18 = vector.load %arg7[%c0_8, %c0_9] : memref<64x32xf32, #tpu.memory_space<vmem>>, vector<64x32xf32>
    %cst_10 = arith.constant dense<0.000000e+00> : vector<16x32xf32>
    %19 = tpu.matmul %17, %18, %cst_10 {dimension_numbers = #tpu.dot_dimension_numbers<[1], [0], [0], [1], [0, 0, 1, 1], [], []>, precision = #tpu.contract_precision<fp32>} : vector<16x64xf32>, vector<64x32xf32>, vector<16x32xf32> -> vector<16x32xf32>
    %c0_11 = arith.constant 0 : index
    %c0_12 = arith.constant 0 : index
    %20 = vector.load %arg8[%c0_11, %c0_12] : memref<1x32xf32, #tpu.memory_space<vmem>>, vector<1x32xf32>
    %21 = vector.broadcast %20 : vector<1x32xf32> to vector<16x32xf32>
    %22 = arith.addf %19, %21 : vector<16x32xf32>
    %c0_13 = arith.constant 0 : index
    %c0_14 = arith.constant 0 : index
    %23 = vector.load %arg9[%c0_13, %c0_14] : memref<32x64xf32, #tpu.memory_space<vmem>>, vector<32x64xf32>
    %cst_15 = arith.constant dense<0.000000e+00> : vector<16x64xf32>
    %24 = tpu.matmul %22, %23, %cst_15 {dimension_numbers = #tpu.dot_dimension_numbers<[1], [0], [0], [1], [0, 0, 1, 1], [], []>, precision = #tpu.contract_precision<fp32>} : vector<16x32xf32>, vector<32x64xf32>, vector<16x64xf32> -> vector<16x64xf32>
    %c0_16 = arith.constant 0 : index
    %c0_17 = arith.constant 0 : index
    %25 = vector.load %arg10[%c0_16, %c0_17] : memref<1x64xf32, #tpu.memory_space<vmem>>, vector<1x64xf32>
    %26 = vector.broadcast %25 : vector<1x64xf32> to vector<16x64xf32>
    %27 = arith.addf %24, %26 : vector<16x64xf32>
    %cst_18 = arith.constant 0.000000e+00 : f32
    %28 = vector.broadcast %cst_18 : f32 to vector<16x64xf32>
    %29 = arith.maximumf %27, %28 : vector<16x64xf32>
    %30 = vector.shape_cast %29 : vector<16x64xf32> to vector<2x8x64xf32>
    %c0_19 = arith.constant 0 : index
    %c0_20 = arith.constant 0 : index
    %31 = vector.load %arg11[%c0_19, %c0_20] : memref<1x64xf32, #tpu.memory_space<vmem>>, vector<1x64xf32>
    %32 = vector.shape_cast %31 : vector<1x64xf32> to vector<1x1x64xf32>
    %33 = vector.broadcast %32 : vector<1x1x64xf32> to vector<2x8x64xf32>
    %34 = arith.mulf %30, %33 : vector<2x8x64xf32>
    %cst_21 = arith.constant dense<0.000000e+00> : vector<2x8xf32>
    %35 = vector.multi_reduction <add>, %34, %cst_21 [2] : vector<2x8x64xf32> to vector<2x8xf32>
    %c0_22 = arith.constant 0 : index
    %36 = memref.load %arg1[%c0_22] : memref<1xf32, #tpu.memory_space<smem>>
    %37 = vector.broadcast %36 : f32 to vector<2x8xf32>
    %38 = arith.addf %35, %37 : vector<2x8xf32>
    %cst_23 = arith.constant dense<0xFF800000> : vector<2xf32>
    %39 = vector.multi_reduction <maximumf>, %38, %cst_23 [1] : vector<2x8xf32> to vector<2xf32>
    %40 = vector.shape_cast %39 : vector<2xf32> to vector<2x1xf32>
    %41 = vector.broadcast %40 : vector<2x1xf32> to vector<2x8xf32>
    %42 = arith.subf %38, %41 : vector<2x8xf32>
    %43 = math.exp %42 : vector<2x8xf32>
    %cst_24 = arith.constant dense<0.000000e+00> : vector<2xf32>
    %44 = vector.multi_reduction <add>, %43, %cst_24 [1] : vector<2x8xf32> to vector<2xf32>
    %45 = vector.shape_cast %44 : vector<2xf32> to vector<2x1xf32>
    %46 = vector.broadcast %45 : vector<2x1xf32> to vector<2x8xf32>
    %47 = arith.divf %43, %46 : vector<2x8xf32>
    %c0_25 = arith.constant 0 : index
    %c0_26 = arith.constant 0 : index
    %48 = vector.load %arg16[%c0_25, %c0_26] : memref<2x8xf32, #tpu.memory_space<vmem>>, vector<2x8xf32>
    tpu.vector_store %arg16[%c0_25, %c0_26], %47 {strides = array<i32>} : memref<2x8xf32, #tpu.memory_space<vmem>>, vector<2x8xf32>,
    %c0_27 = arith.constant 0 : index
    %c0_28 = arith.constant 0 : index
    %49 = vector.load %arg12[%c0_27, %c0_28] : memref<32x64xf32, #tpu.memory_space<vmem>>, vector<32x64xf32>
    %cst_29 = arith.constant dense<0.000000e+00> : vector<16x64xf32>
    %50 = tpu.matmul %22, %49, %cst_29 {dimension_numbers = #tpu.dot_dimension_numbers<[1], [0], [0], [1], [0, 0, 1, 1], [], []>, precision = #tpu.contract_precision<fp32>} : vector<16x32xf32>, vector<32x64xf32>, vector<16x64xf32> -> vector<16x64xf32>
    %51 = vector.shape_cast %50 : vector<16x64xf32> to vector<2x8x64xf32>
    %c0_30 = arith.constant 0 : index
    %c0_31 = arith.constant 0 : index
    %c0_32 = arith.constant 0 : index
    %52 = vector.load %arg18[%c0_30, %c0_31, %c0_32] : memref<2x8x64xf32, #tpu.memory_space<vmem>>, vector<2x8x64xf32>
    tpu.vector_store %arg18[%c0_30, %c0_31, %c0_32], %51 {strides = array<i32>} : memref<2x8x64xf32, #tpu.memory_space<vmem>>, vector<2x8x64xf32>,
    %c0_33 = arith.constant 0 : index
    %c0_34 = arith.constant 0 : index
    %53 = vector.load %arg13[%c0_33, %c0_34] : memref<32x64xf32, #tpu.memory_space<vmem>>, vector<32x64xf32>
    %cst_35 = arith.constant dense<0.000000e+00> : vector<16x64xf32>
    %54 = tpu.matmul %22, %53, %cst_35 {dimension_numbers = #tpu.dot_dimension_numbers<[1], [0], [0], [1], [0, 0, 1, 1], [], []>, precision = #tpu.contract_precision<fp32>} : vector<16x32xf32>, vector<32x64xf32>, vector<16x64xf32> -> vector<16x64xf32>
    %55 = vector.shape_cast %54 : vector<16x64xf32> to vector<2x8x64xf32>
    %c0_36 = arith.constant 0 : index
    %c0_37 = arith.constant 0 : index
    %56 = vector.load %arg14[%c0_36, %c0_37] : memref<1x64xf32, #tpu.memory_space<vmem>>, vector<1x64xf32>
    %c0_38 = arith.constant 0 : index
    %c0_39 = arith.constant 0 : index
    %57 = vector.load %arg15[%c0_38, %c0_39] : memref<1x64xf32, #tpu.memory_space<vmem>>, vector<1x64xf32>
    %c0_40 = arith.constant 0 : index
    %58 = memref.load %arg2[%c0_40] : memref<1xf32, #tpu.memory_space<smem>>
    %59 = vector.shape_cast %55 : vector<2x8x64xf32> to vector<2x1x8x64xf32>
    %c0_41 = arith.constant 0 : index
    %c0_42 = arith.constant 0 : index
    %c0_43 = arith.constant 0 : index
    %60 = vector.load %arg18[%c0_41, %c0_42, %c0_43] : memref<2x8x64xf32, #tpu.memory_space<vmem>>, vector<2x8x64xf32>
    %61 = vector.shape_cast %60 : vector<2x8x64xf32> to vector<2x8x1x64xf32>
    %62 = vector.broadcast %61 : vector<2x8x1x64xf32> to vector<2x8x8x64xf32>
    %63 = vector.broadcast %59 : vector<2x1x8x64xf32> to vector<2x8x8x64xf32>
    %64 = arith.addf %62, %63 : vector<2x8x8x64xf32>
    %65 = vector.shape_cast %56 : vector<1x64xf32> to vector<1x1x1x64xf32>
    %66 = vector.broadcast %65 : vector<1x1x1x64xf32> to vector<2x8x8x64xf32>
    %67 = arith.addf %64, %66 : vector<2x8x8x64xf32>
    %cst_44 = arith.constant 0.000000e+00 : f32
    %68 = vector.broadcast %cst_44 : f32 to vector<2x8x8x64xf32>
    %69 = arith.maximumf %67, %68 : vector<2x8x8x64xf32>
    %70 = vector.shape_cast %57 : vector<1x64xf32> to vector<1x1x1x64xf32>
    %71 = vector.broadcast %70 : vector<1x1x1x64xf32> to vector<2x8x8x64xf32>
    %72 = arith.mulf %69, %71 : vector<2x8x8x64xf32>
    %cst_45 = arith.constant dense<0.000000e+00> : vector<2x8x8xf32>
    %73 = vector.multi_reduction <add>, %72, %cst_45 [3] : vector<2x8x8x64xf32> to vector<2x8x8xf32>
    %74 = vector.broadcast %58 : f32 to vector<2x8x8xf32>
    %75 = arith.addf %73, %74 : vector<2x8x8xf32>
    %cst_46 = arith.constant 0.000000e+00 : f32
    %76 = vector.broadcast %cst_46 : f32 to vector<2x8x8xf32>
    %77 = arith.subf %76, %75 : vector<2x8x8xf32>
    %78 = math.exp %77 : vector<2x8x8xf32>
    %cst_47 = arith.constant 1.000000e+00 : f32
    %79 = vector.broadcast %cst_47 : f32 to vector<2x8x8xf32>
    %80 = arith.addf %79, %78 : vector<2x8x8xf32>
    %cst_48 = arith.constant 1.000000e+00 : f32
    %81 = vector.broadcast %cst_48 : f32 to vector<2x8x8xf32>
    %82 = arith.divf %81, %80 : vector<2x8x8xf32>
    %83 = tpu.iota {dimensions = array<i32: 1>} : vector<2x8x8xi32>
    %c0_i32 = arith.constant 0 : i32
    %84 = vector.broadcast %c0_i32 : i32 to vector<2x8x8xi32>
    %85 = arith.addi %83, %84 : vector<2x8x8xi32>
    %86 = tpu.iota {dimensions = array<i32: 2>} : vector<2x8x8xi32>
    %87 = arith.cmpi eq, %85, %86 : vector<2x8x8xi32>
    %cst_49 = arith.constant 0.000000e+00 : f32
    %88 = vector.broadcast %cst_49 : f32 to vector<2x8x8xf32>
    %89 = arith.select %87, %88, %82 : vector<2x8x8xi1>, vector<2x8x8xf32>
    %c0_50 = arith.constant 0 : index
    %c0_51 = arith.constant 0 : index
    %c0_52 = arith.constant 0 : index
    %90 = vector.load %arg17[%c0_50, %c0_51, %c0_52] : memref<2x8x8xf32, #tpu.memory_space<vmem>>, vector<2x8x8xf32>
    tpu.vector_store %arg17[%c0_50, %c0_51, %c0_52], %89 {strides = array<i32>} : memref<2x8x8xf32, #tpu.memory_space<vmem>>, vector<2x8x8xf32>,
    return
  }
  func.func @transform_0(%arg0: i32) -> i32 {
    %c0_i32 = arith.constant 0 : i32
    %c0_i32_0 = arith.constant 0 : i32
    return %c0_i32 : i32
  }
  func.func @transform_1(%arg0: i32) -> i32 {
    %c0_i32 = arith.constant 0 : i32
    %c0_i32_0 = arith.constant 0 : i32
    return %c0_i32 : i32
  }
  func.func @transform_2(%arg0: i32) -> (i32, i32, i32) {
    %c0_i32 = arith.constant 0 : i32
    %c0_i32_0 = arith.constant 0 : i32
    %c0_i32_1 = arith.constant 0 : i32
    return %arg0, %c0_i32, %c0_i32_0 : i32, i32, i32
  }
  func.func @transform_3(%arg0: i32) -> (i32, i32) {
    %c0_i32 = arith.constant 0 : i32
    %c0_i32_0 = arith.constant 0 : i32
    %c0_i32_1 = arith.constant 0 : i32
    return %c0_i32, %c0_i32_0 : i32, i32
  }
  func.func @transform_4(%arg0: i32) -> (i32, i32) {
    %c0_i32 = arith.constant 0 : i32
    %c0_i32_0 = arith.constant 0 : i32
    %c0_i32_1 = arith.constant 0 : i32
    return %c0_i32, %c0_i32_0 : i32, i32
  }
  func.func @transform_5(%arg0: i32) -> (i32, i32) {
    %c0_i32 = arith.constant 0 : i32
    %c0_i32_0 = arith.constant 0 : i32
    %c0_i32_1 = arith.constant 0 : i32
    return %c0_i32, %c0_i32_0 : i32, i32
  }
  func.func @transform_6(%arg0: i32) -> (i32, i32) {
    %c0_i32 = arith.constant 0 : i32
    %c0_i32_0 = arith.constant 0 : i32
    %c0_i32_1 = arith.constant 0 : i32
    return %c0_i32, %c0_i32_0 : i32, i32
  }
  func.func @transform_7(%arg0: i32) -> (i32, i32) {
    %c0_i32 = arith.constant 0 : i32
    %c0_i32_0 = arith.constant 0 : i32
    %c0_i32_1 = arith.constant 0 : i32
    return %c0_i32, %c0_i32_0 : i32, i32
  }
  func.func @transform_8(%arg0: i32) -> (i32, i32) {
    %c0_i32 = arith.constant 0 : i32
    %c0_i32_0 = arith.constant 0 : i32
    %c0_i32_1 = arith.constant 0 : i32
    return %c0_i32, %c0_i32_0 : i32, i32
  }
  func.func @transform_9(%arg0: i32) -> (i32, i32) {
    %c0_i32 = arith.constant 0 : i32
    %c0_i32_0 = arith.constant 0 : i32
    %c0_i32_1 = arith.constant 0 : i32
    return %c0_i32, %c0_i32_0 : i32, i32
  }
  func.func @transform_10(%arg0: i32) -> (i32, i32) {
    %c0_i32 = arith.constant 0 : i32
    %c0_i32_0 = arith.constant 0 : i32
    %c0_i32_1 = arith.constant 0 : i32
    return %c0_i32, %c0_i32_0 : i32, i32
  }
  func.func @transform_11(%arg0: i32) -> (i32, i32) {
    %c0_i32 = arith.constant 0 : i32
    %c0_i32_0 = arith.constant 0 : i32
    %c0_i32_1 = arith.constant 0 : i32
    return %c0_i32, %c0_i32_0 : i32, i32
  }
  func.func @transform_12(%arg0: i32) -> (i32, i32) {
    %c0_i32 = arith.constant 0 : i32
    %c0_i32_0 = arith.constant 0 : i32
    %c0_i32_1 = arith.constant 0 : i32
    return %c0_i32, %c0_i32_0 : i32, i32
  }
  func.func @transform_13(%arg0: i32) -> (i32, i32) {
    %c0_i32 = arith.constant 0 : i32
    %c0_i32_0 = arith.constant 0 : i32
    %c0_i32_1 = arith.constant 0 : i32
    return %c0_i32, %c0_i32_0 : i32, i32
  }
  func.func @transform_14(%arg0: i32) -> (i32, i32) {
    %c0_i32 = arith.constant 0 : i32
    %c0_i32_0 = arith.constant 0 : i32
    %c0_i32_1 = arith.constant 0 : i32
    return %c0_i32, %c0_i32_0 : i32, i32
  }
  func.func @transform_15(%arg0: i32) -> (i32, i32) {
    %c0_i32 = arith.constant 0 : i32
    %c0_i32_0 = arith.constant 0 : i32
    return %arg0, %c0_i32 : i32, i32
  }
  func.func @transform_16(%arg0: i32) -> (i32, i32, i32) {
    %c0_i32 = arith.constant 0 : i32
    %c0_i32_0 = arith.constant 0 : i32
    %c0_i32_1 = arith.constant 0 : i32
    return %arg0, %c0_i32, %c0_i32_0 : i32, i32, i32
  }
}

</mosaic_0001>

<llo_original>
// kernel: tpu_custom_call.1
$region0: #{tpu_custom_call.1}
  #allocation0 [shape = 'u32[]', space=smem, size = 0x4, offset = 0x4, fixed_abs, tag = 'smem constant byte address 0x4 - core index']
  #allocation1 [shape = 'u32[144,128]{1,0:T(1,128)}', space=vmem, size = 0x12000, scoped, tag = 'internal scratch']
  #allocation2 [shape = 'f32[2,8,64]{2,1,0:T(8,128)}', space=vmem, size = 0x2000, scoped, tag = 'scratch operand']
  #allocation3 [shape = 'f32[1]{0:T(128)S(6)}', space=smem, size = 0x200, scoped, tag = 'scoped memory for tpu_custom_call.1']
  #allocation4 [shape = 'f32[1]{0:T(128)S(6)}', space=smem, size = 0x200, scoped, tag = 'scoped memory for tpu_custom_call.1']
  %s0 = inlined_call_operand.<no memory space> [shape: f32[1], index: 0, kind: input, shape index: {}]
  %s1 = inlined_call_operand.<no memory space> [shape: f32[1], index: 1, kind: input, shape index: {}]
  %s2 = inlined_call_operand.vmem [shape: f32[2,8,2], index: 2, kind: input, shape index: {}]
  %s3 = inlined_call_operand.vmem [shape: f32[1,64], index: 3, kind: input, shape index: {}]
  %s4 = inlined_call_operand.vmem [shape: f32[1,64], index: 4, kind: input, shape index: {}]
  %s5 = inlined_call_operand.vmem [shape: f32[1,64], index: 5, kind: input, shape index: {}]
  %s6 = inlined_call_operand.vmem [shape: f32[64,32], index: 6, kind: input, shape index: {}]
  %s7 = inlined_call_operand.vmem [shape: f32[1,32], index: 7, kind: input, shape index: {}]
  %s8 = inlined_call_operand.vmem [shape: f32[32,64], index: 8, kind: input, shape index: {}]
  %s9 = inlined_call_operand.vmem [shape: f32[1,64], index: 9, kind: input, shape index: {}]
  %s10 = inlined_call_operand.vmem [shape: f32[1,64], index: 10, kind: input, shape index: {}]
  %s11 = inlined_call_operand.vmem [shape: f32[32,64], index: 11, kind: input, shape index: {}]
  %s12 = inlined_call_operand.vmem [shape: f32[32,64], index: 12, kind: input, shape index: {}]
  %s13 = inlined_call_operand.vmem [shape: f32[1,64], index: 13, kind: input, shape index: {}]
  %s14 = inlined_call_operand.vmem [shape: f32[1,64], index: 14, kind: input, shape index: {}]
  %s15 = inlined_call_operand.hbm [shape: f32[2,8], index: 15, kind: output, shape index: {0}]
  %s16 = inlined_call_operand.hbm [shape: f32[2,8,8], index: 16, kind: output, shape index: {1}]
  %17 = xla_tuple %s15, %s16
  %s18 = sld [smem:[#allocation0]]
  $region78: #{tpu_custom_call.1} parent=0
    _
  %s20 = ssub.s32 1, %s18
  %s21 = scalar_select 0, %s20, %s18
  %22 = sst [smem:[#allocation3]] %s0
  %23 = sst [smem:[#allocation4]] %s1
  $region1: #{tpu_custom_call.1} parent=0
    #allocation5 [shape = 'u8[1024]{0}', space=vmem, size = 0x400, scoped, tag = 'output window, operand 0, single buffered']
    #allocation6 [shape = 's32[1]{0}', space=sflag, size = 0x4, scoped, tag = 'scoped memory for tpu_custom_call.1']
    #allocation7 [shape = 'u8[8192]{0}', space=vmem, size = 0x2000, scoped, tag = 'output window, operand 1, single buffered']
    #allocation8 [shape = 's32[1]{0}', space=sflag, size = 0x4, scoped, tag = 'scoped memory for tpu_custom_call.1']
    %24 = vsyncpa [#allocation6], 0
    %25 = vsyncpa [#allocation8], 0
    // Predicated region
    $region2: #{tpu_custom_call.1} parent=1 // pred_check
      _
    $region3: #{tpu_custom_call.1} parent=1 // pred_check_branch
      %27 = sbr.rel (0) target = $region5
    $region4: #{tpu_custom_call.1} parent=1 // pred_region
      _
    $region5: #{tpu_custom_call.1} parent=1 // pred_fallthru
      _
    // Predicated region
    $region6: #{tpu_custom_call.1} parent=1 // pred_check
      _
    $region7: #{tpu_custom_call.1} parent=1 // pred_check_branch
      %29 = sbr.rel (0) target = $region9
    $region8: #{tpu_custom_call.1} parent=1 // pred_region
      _
    $region9: #{tpu_custom_call.1} parent=1 // pred_fallthru
      _
    // Predicated region
    $region10: #{tpu_custom_call.1} parent=1 // pred_check
      _
    $region11: #{tpu_custom_call.1} parent=1 // pred_check_branch
      %31 = sbr.rel (0) target = $region13
    $region12: #{tpu_custom_call.1} parent=1 // pred_region
      _
    $region13: #{tpu_custom_call.1} parent=1 // pred_fallthru
      _
    // Predicated region
    $region14: #{tpu_custom_call.1} parent=1 // pred_check
      _
    $region15: #{tpu_custom_call.1} parent=1 // pred_check_branch
      %33 = sbr.rel (0) target = $region17
    $region16: #{tpu_custom_call.1} parent=1 // pred_region
      _
    $region17: #{tpu_custom_call.1} parent=1 // pred_fallthru
      _
    // Predicated region
    $region18: #{tpu_custom_call.1} parent=1 // pred_check
      _
    $region19: #{tpu_custom_call.1} parent=1 // pred_check_branch
      %35 = sbr.rel (0) target = $region21
    $region20: #{tpu_custom_call.1} parent=1 // pred_region
      _
    $region21: #{tpu_custom_call.1} parent=1 // pred_fallthru
      _
    // Predicated region
    $region22: #{tpu_custom_call.1} parent=1 // pred_check
      _
    $region23: #{tpu_custom_call.1} parent=1 // pred_check_branch
      %37 = sbr.rel (0) target = $region25
    $region24: #{tpu_custom_call.1} parent=1 // pred_region
      _
    $region25: #{tpu_custom_call.1} parent=1 // pred_fallthru
      _
    // Predicated region
    $region26: #{tpu_custom_call.1} parent=1 // pred_check
      _
    $region27: #{tpu_custom_call.1} parent=1 // pred_check_branch
      %39 = sbr.rel (0) target = $region29
    $region28: #{tpu_custom_call.1} parent=1 // pred_region
      _
    $region29: #{tpu_custom_call.1} parent=1 // pred_fallthru
      _
    // Predicated region
    $region30: #{tpu_custom_call.1} parent=1 // pred_check
      _
    $region31: #{tpu_custom_call.1} parent=1 // pred_check_branch
      %41 = sbr.rel (0) target = $region33
    $region32: #{tpu_custom_call.1} parent=1 // pred_region
      _
    $region33: #{tpu_custom_call.1} parent=1 // pred_fallthru
      _
    // Predicated region
    $region34: #{tpu_custom_call.1} parent=1 // pred_check
      _
    $region35: #{tpu_custom_call.1} parent=1 // pred_check_branch
      %43 = sbr.rel (0) target = $region37
    $region36: #{tpu_custom_call.1} parent=1 // pred_region
      _
    $region37: #{tpu_custom_call.1} parent=1 // pred_fallthru
      _
    // Predicated region
    $region38: #{tpu_custom_call.1} parent=1 // pred_check
      _
    $region39: #{tpu_custom_call.1} parent=1 // pred_check_branch
      %45 = sbr.rel (0) target = $region41
    $region40: #{tpu_custom_call.1} parent=1 // pred_region
      _
    $region41: #{tpu_custom_call.1} parent=1 // pred_fallthru
      _
    // Predicated region
    $region42: #{tpu_custom_call.1} parent=1 // pred_check
      _
    $region43: #{tpu_custom_call.1} parent=1 // pred_check_branch
      %47 = sbr.rel (0) target = $region45
    $region44: #{tpu_custom_call.1} parent=1 // pred_region
      _
    $region45: #{tpu_custom_call.1} parent=1 // pred_fallthru
      _
    // Predicated region
    $region46: #{tpu_custom_call.1} parent=1 // pred_check
      _
    $region47: #{tpu_custom_call.1} parent=1 // pred_check_branch
      %49 = sbr.rel (0) target = $region49
    $region48: #{tpu_custom_call.1} parent=1 // pred_region
      _
    $region49: #{tpu_custom_call.1} parent=1 // pred_fallthru
      _
    // Predicated region
    $region50: #{tpu_custom_call.1} parent=1 // pred_check
      _
    $region51: #{tpu_custom_call.1} parent=1 // pred_check_branch
      %51 = sbr.rel (0) target = $region53
    $region52: #{tpu_custom_call.1} parent=1 // pred_region
      _
    $region53: #{tpu_custom_call.1} parent=1 // pred_fallthru
      _
    // Predicated region
    $region54: #{tpu_custom_call.1} parent=1 // pred_check
      _
    $region55: #{tpu_custom_call.1} parent=1 // pred_check_branch
      %53 = sbr.rel (0) target = $region57
    $region56: #{tpu_custom_call.1} parent=1 // pred_region
      _
    $region57: #{tpu_custom_call.1} parent=1 // pred_fallthru
      _
    // Predicated region
    $region58: #{tpu_custom_call.1} parent=1 // pred_check
      _
    $region59: #{tpu_custom_call.1} parent=1 // pred_check_branch
      %55 = sbr.rel (0) target = $region61
    $region60: #{tpu_custom_call.1} parent=1 // pred_region
      _
    $region61: #{tpu_custom_call.1} parent=1 // pred_fallthru
      _
    %v56 = vld [vmem:[%s2] sm:$0xff]
    %v57 = vld [vmem:[%s2 + $0x8] sm:$0xff]
    %v58 = vld [vmem:[%s3] sm:$0x1]
    %60 = vset.pattern.permute.xlu0 0
    %61 = vperm.xlu0 %60, %v56
    %v62 = vpop.permute.xlu0 %61
    %65 = vset.pattern.permute.xlu0 0
    %66 = vperm.xlu0 %65, %v57
    %v67 = vpop.permute.xlu0 %66
    %v70 = vlaneseq
    %v71 = vshrl.u32 %v70, 7
    %v72 = vsub.s32 0, %v71
    %v73 = vrot.slane %v58, %v72
    %v75 = vmul.f32 %v62, %v73
    %v76 = vmul.f32 %v67, %v73
    %v77 = vld [vmem:[%s4] sm:$0x1]
    %78 = vset.pattern.permute.xlu0 1
    %79 = vperm.xlu0 %78, %v56
    %v80 = vpop.permute.xlu0 %79
    %82 = vset.pattern.permute.xlu0 1
    %83 = vperm.xlu0 %82, %v57
    %v84 = vpop.permute.xlu0 %83
    %v87 = vlaneseq
    %v88 = vshrl.u32 %v87, 7
    %v89 = vsub.s32 0, %v88
    %v90 = vrot.slane %v77, %v89
    %v92 = vmul.f32 %v80, %v90
    %v93 = vmul.f32 %v84, %v90
    %v94 = vadd.f32 %v75, %v92
    %v95 = vadd.f32 %v76, %v93
    %v96 = vld [vmem:[%s5] sm:$0x1]
    %v98 = vlaneseq
    %v99 = vshrl.u32 %v98, 7
    %v100 = vsub.s32 0, %v99
    %v101 = vrot.slane %v96, %v100
    %v103 = vadd.f32 %v94, %v101
    %v104 = vadd.f32 %v95, %v101
    %v105 = vmax.f32 %v103, 0.0
    %v106 = vmax.f32 %v104, 0.0
    %v107 = vld [vmem:[%s6] sm:$0xff]
    %v108 = vld [vmem:[%s6 + $0x8] sm:$0xff]
    %v109 = vld [vmem:[%s6 + $0x10] sm:$0xff]
    %v110 = vld [vmem:[%s6 + $0x18] sm:$0xff]
    %v111 = vld [vmem:[%s6 + $0x20] sm:$0xff]
    %v112 = vld [vmem:[%s6 + $0x28] sm:$0xff]
    %v113 = vld [vmem:[%s6 + $0x30] sm:$0xff]
    %v114 = vld [vmem:[%s6 + $0x38] sm:$0xff]
    %v115 = vld [vmem:[%s7] sm:$0x1]
    %v117 = vlaneseq
    %v118 = vshrl.u32 %v117, 7
    %v119 = vsub.s32 0, %v118
    %v120 = vrot.slane %v115, %v119
    %vm122 = vcmask 523264
    %v124 = vsel %vm122, %v105, 0
    %v127 = vsel %vm122, %v106, 0
    %129 = vmatprep.subr.mxu0 0.0
    %v130 = vand.u32 %v107, 4294901760
    %131 = vmatpush1.msra.mxu0 %v130
    %132 = vmatprep.subr.mxu0 0.0
    %v133 = vand.u32 %v108, 4294901760
    %134 = vmatpush1.msra.mxu0 %v133
    %135 = vmatprep.subr.mxu0 0.0
    %v136 = vand.u32 %v109, 4294901760
    %137 = vmatpush1.msra.mxu0 %v136
    %138 = vmatprep.subr.mxu0 0.0
    %v139 = vand.u32 %v110, 4294901760
    %140 = vmatpush1.msra.mxu0 %v139
    %141 = vmatprep.subr.mxu0 0.0
    %v142 = vand.u32 %v111, 4294901760
    %143 = vmatpush1.msra.mxu0 %v142
    %144 = vmatprep.subr.mxu0 0.0
    %v145 = vand.u32 %v112, 4294901760
    %146 = vmatpush1.msra.mxu0 %v145
    %147 = vmatprep.subr.mxu0 0.0
    %v148 = vand.u32 %v113, 4294901760
    %149 = vmatpush1.msra.mxu0 %v148
    %150 = vmatprep.subr.mxu0 0.0
    %v151 = vand.u32 %v114, 4294901760
    %152 = vmatpush1.msra.mxu0 %v151
    %153 = vmatprep.subr.mxu0 0.0
    %154 = vmatpush1.msra.mxu0 0.0
    %155 = vmatprep.subr.mxu0 0.0
    %156 = vmatpush1.msra.mxu0 0.0
    %157 = vmatprep.subr.mxu0 0.0
    %158 = vmatpush1.msra.mxu0 0.0
    %159 = vmatprep.subr.mxu0 0.0
    %160 = vmatpush1.msra.mxu0 0.0
    %161 = vmatprep.subr.mxu0 0.0
    %162 = vmatpush1.msra.mxu0 0.0
    %163 = vmatprep.subr.mxu0 0.0
    %164 = vmatpush1.msra.mxu0 0.0
    %165 = vmatprep.subr.mxu0 0.0
    %166 = vmatpush1.msra.mxu0 0.0
    %167 = vmatprep.subr.mxu0 0.0
    %168 = vmatpush1.msra.mxu0 0.0
    %169 = vmatprep.subr.mxu0 0.0
    %170 = vmatpush1.msra.mxu0 0.0
    %171 = vmatprep.subr.mxu0 0.0
    %172 = vmatpush1.msra.mxu0 0.0
    %173 = vmatprep.subr.mxu0 0.0
    %174 = vmatpush1.msra.mxu0 0.0
    %175 = vmatprep.subr.mxu0 0.0
    %176 = vmatpush1.msra.mxu0 0.0
    %177 = vmatprep.subr.mxu0 0.0
    %178 = vmatpush1.msra.mxu0 0.0
    %179 = vmatprep.subr.mxu0 0.0
    %180 = vmatpush1.msra.mxu0 0.0
    %181 = vmatprep.subr.mxu0 0.0
    %182 = vmatpush1.msra.mxu0 0.0
    %183 = vmatprep.subr.mxu0 0.0
    %184 = vmatpush1.msra.mxu0 0.0
    %185 = vmatprep.subr.mxu0 0.0
    %186 = vmatpush1.msra.mxu0 0.0
    %187 = vmatprep.subr.mxu0 0.0
    %188 = vmatpush1.msra.mxu0 0.0
    %189 = vmatprep.subr.mxu0 0.0
    %190 = vmatpush1.msra.mxu0 0.0
    %191 = vmatprep.subr.mxu0 0.0
    %192 = vmatpush1.msra.mxu0 0.0
    %193 = vmatprep.subr.mxu0 0.0
    %194 = vmatpush1.msra.mxu0 0.0
    %195 = vmatprep.subr.mxu0 0.0
    %196 = vmatpush1.msra.mxu0 0.0
    %197 = vmatprep.subr.mxu0 0.0
    %198 = vmatpush1.msra.mxu0 0.0
    %199 = vmatprep.subr.mxu0 0.0
    %200 = vmatpush1.msra.mxu0 0.0
    %201 = vmatprep.mubr.f32.mxu0 0.0
    %v202 = vand.u32 %v124, 4294901760
    %v203 = vsub.f32 %v124, %v202
    %v204 = vand.u32 %v203, 4294901760
    %v205 = vsub.f32 %v203, %v204
    %v206 = vand.u32 %v205, 4294901760
    %207 = vmatmul.mubr.f32.gmra.mrb[0].mxu0 %v206
    %v208 = vpop.f32.mrb[0].mxu0
    %v209 = vadd.f32 %v120, %v208
    %v210 = vpop.f32.mrb[0].mxu0
    %211 = vmatprep.mubr.f32.mxu0 0.0
    %v212 = vand.u32 %v127, 4294901760
    %v213 = vsub.f32 %v127, %v212
    %v214 = vand.u32 %v213, 4294901760
    %v215 = vsub.f32 %v213, %v214
    %v216 = vand.u32 %v215, 4294901760
    %217 = vmatmul.mubr.f32.gmra.mrb[0].mxu0 %v216
    %v218 = vpop.f32.mrb[0].mxu0
    %v219 = vadd.f32 %v120, %v218
    %v220 = vpop.f32.mrb[0].mxu0
    %221 = vdwg.mxu0
    %222 = vmatprep.subr.mxu0 0.0
    %v223 = vand.u32 %v107, 4294901760
    %v224 = vsub.f32 %v107, %v223
    %v225 = vand.u32 %v224, 4294901760
    %v226 = vsub.f32 %v224, %v225
    %v227 = vand.u32 %v226, 4294901760
    %228 = vmatpush1.msra.mxu0 %v227
    %229 = vmatprep.subr.mxu0 0.0
    %v230 = vand.u32 %v108, 4294901760
    %v231 = vsub.f32 %v108, %v230
    %v232 = vand.u32 %v231, 4294901760
    %v233 = vsub.f32 %v231, %v232
    %v234 = vand.u32 %v233, 4294901760
    %235 = vmatpush1.msra.mxu0 %v234
    %236 = vmatprep.subr.mxu0 0.0
    %v237 = vand.u32 %v109, 4294901760
    %v238 = vsub.f32 %v109, %v237
    %v239 = vand.u32 %v238, 4294901760
    %v240 = vsub.f32 %v238, %v239
    %v241 = vand.u32 %v240, 4294901760
    %242 = vmatpush1.msra.mxu0 %v241
    %243 = vmatprep.subr.mxu0 0.0
    %v244 = vand.u32 %v110, 4294901760
    %v245 = vsub.f32 %v110, %v244
    %v246 = vand.u32 %v245, 4294901760
    %v247 = vsub.f32 %v245, %v246
    %v248 = vand.u32 %v247, 4294901760
    %249 = vmatpush1.msra.mxu0 %v248
    %250 = vmatprep.subr.mxu0 0.0
    %v251 = vand.u32 %v111, 4294901760
    %v252 = vsub.f32 %v111, %v251
    %v253 = vand.u32 %v252, 4294901760
    %v254 = vsub.f32 %v252, %v253
    %v255 = vand.u32 %v254, 4294901760
    %256 = vmatpush1.msra.mxu0 %v255
    %257 = vmatprep.subr.mxu0 0.0
    %v258 = vand.u32 %v112, 4294901760
    %v259 = vsub.f32 %v112, %v258
    %v260 = vand.u32 %v259, 4294901760
    %v261 = vsub.f32 %v259, %v260
    %v262 = vand.u32 %v261, 4294901760
    %263 = vmatpush1.msra.mxu0 %v262
    %264 = vmatprep.subr.mxu0 0.0
    %v265 = vand.u32 %v113, 4294901760
    %v266 = vsub.f32 %v113, %v265
    %v267 = vand.u32 %v266, 4294901760
    %v268 = vsub.f32 %v266, %v267
    %v269 = vand.u32 %v268, 4294901760
    %270 = vmatpush1.msra.mxu0 %v269
    %271 = vmatprep.subr.mxu0 0.0
    %v272 = vand.u32 %v114, 4294901760
    %v273 = vsub.f32 %v114, %v272
    %v274 = vand.u32 %v273, 4294901760
    %v275 = vsub.f32 %v273, %v274
    %v276 = vand.u32 %v275, 4294901760
    %277 = vmatpush1.msra.mxu0 %v276
    %278 = vmatprep.subr.mxu0 0.0
    %279 = vmatpush1.msra.mxu0 0.0
    %280 = vmatprep.subr.mxu0 0.0
    %281 = vmatpush1.msra.mxu0 0.0
    %282 = vmatprep.subr.mxu0 0.0
    %283 = vmatpush1.msra.mxu0 0.0
    %284 = vmatprep.subr.mxu0 0.0
    %285 = vmatpush1.msra.mxu0 0.0
    %286 = vmatprep.subr.mxu0 0.0
    %287 = vmatpush1.msra.mxu0 0.0
    %288 = vmatprep.subr.mxu0 0.0
    %289 = vmatpush1.msra.mxu0 0.0
    %290 = vmatprep.subr.mxu0 0.0
    %291 = vmatpush1.msra.mxu0 0.0
    %292 = vmatprep.subr.mxu0 0.0
    %293 = vmatpush1.msra.mxu0 0.0
    %294 = vmatprep.subr.mxu0 0.0
    %295 = vmatpush1.msra.mxu0 0.0
    %296 = vmatprep.subr.mxu0 0.0
    %297 = vmatpush1.msra.mxu0 0.0
    %298 = vmatprep.subr.mxu0 0.0
    %299 = vmatpush1.msra.mxu0 0.0
    %300 = vmatprep.subr.mxu0 0.0
    %301 = vmatpush1.msra.mxu0 0.0
    %302 = vmatprep.subr.mxu0 0.0
    %303 = vmatpush1.msra.mxu0 0.0
    %304 = vmatprep.subr.mxu0 0.0
    %305 = vmatpush1.msra.mxu0 0.0
    %306 = vmatprep.subr.mxu0 0.0
    %307 = vmatpush1.msra.mxu0 0.0
    %308 = vmatprep.subr.mxu0 0.0
    %309 = vmatpush1.msra.mxu0 0.0
    %310 = vmatprep.subr.mxu0 0.0
    %311 = vmatpush1.msra.mxu0 0.0
    %312 = vmatprep.subr.mxu0 0.0
    %313 = vmatpush1.msra.mxu0 0.0
    %314 = vmatprep.subr.mxu0 0.0
    %315 = vmatpush1.msra.mxu0 0.0
    %316 = vmatprep.subr.mxu0 0.0
    %317 = vmatpush1.msra.mxu0 0.0
    %318 = vmatprep.subr.mxu0 0.0
    %319 = vmatpush1.msra.mxu0 0.0
    %320 = vmatprep.subr.mxu0 0.0
    %321 = vmatpush1.msra.mxu0 0.0
    %322 = vmatprep.subr.mxu0 0.0
    %323 = vmatpush1.msra.mxu0 0.0
    %324 = vmatprep.subr.mxu0 0.0
    %325 = vmatpush1.msra.mxu0 0.0
    %326 = vmatprep.mubr.f32.mxu0 0.0
    %v327 = vand.u32 %v124, 4294901760
    %328 = vmatmul.mubr.f32.gmra.mrb[0].mxu0 %v327
    %v329 = vpop.f32.mrb[0].mxu0
    %v330 = vadd.f32 %v209, %v329
    %v331 = vpop.f32.mrb[0].mxu0
    %332 = vmatprep.mubr.f32.mxu0 0.0
    %v333 = vand.u32 %v127, 4294901760
    %334 = vmatmul.mubr.f32.gmra.mrb[0].mxu0 %v333
    %v335 = vpop.f32.mrb[0].mxu0
    %v336 = vadd.f32 %v219, %v335
    %v337 = vpop.f32.mrb[0].mxu0
    %338 = vdwg.mxu0
    %339 = vmatprep.subr.mxu0 0.0
    %v340 = vand.u32 %v107, 4294901760
    %v341 = vsub.f32 %v107, %v340
    %342 = vmatpush1.msra.mxu0 %v341
    %343 = vmatprep.subr.mxu0 0.0
    %v344 = vand.u32 %v108, 4294901760
    %v345 = vsub.f32 %v108, %v344
    %346 = vmatpush1.msra.mxu0 %v345
    %347 = vmatprep.subr.mxu0 0.0
    %v348 = vand.u32 %v109, 4294901760
    %v349 = vsub.f32 %v109, %v348
    %350 = vmatpush1.msra.mxu0 %v349
    %351 = vmatprep.subr.mxu0 0.0
    %v352 = vand.u32 %v110, 4294901760
    %v353 = vsub.f32 %v110, %v352
    %354 = vmatpush1.msra.mxu0 %v353
    %355 = vmatprep.subr.mxu0 0.0
    %v356 = vand.u32 %v111, 4294901760
    %v357 = vsub.f32 %v111, %v356
    %358 = vmatpush1.msra.mxu0 %v357
    %359 = vmatprep.subr.mxu0 0.0
    %v360 = vand.u32 %v112, 4294901760
    %v361 = vsub.f32 %v112, %v360
    %362 = vmatpush1.msra.mxu0 %v361
    %363 = vmatprep.subr.mxu0 0.0
    %v364 = vand.u32 %v113, 4294901760
    %v365 = vsub.f32 %v113, %v364
    %366 = vmatpush1.msra.mxu0 %v365
    %367 = vmatprep.subr.mxu0 0.0
    %v368 = vand.u32 %v114, 4294901760
    %v369 = vsub.f32 %v114, %v368
    %370 = vmatpush1.msra.mxu0 %v369
    %371 = vmatprep.subr.mxu0 0.0
    %372 = vmatpush1.msra.mxu0 0.0
    %373 = vmatprep.subr.mxu0 0.0
    %374 = vmatpush1.msra.mxu0 0.0
    %375 = vmatprep.subr.mxu0 0.0
    %376 = vmatpush1.msra.mxu0 0.0
    %377 = vmatprep.subr.mxu0 0.0
    %378 = vmatpush1.msra.mxu0 0.0
    %379 = vmatprep.subr.mxu0 0.0
    %380 = vmatpush1.msra.mxu0 0.0
    %381 = vmatprep.subr.mxu0 0.0
    %382 = vmatpush1.msra.mxu0 0.0
    %383 = vmatprep.subr.mxu0 0.0
    %384 = vmatpush1.msra.mxu0 0.0
    %385 = vmatprep.subr.mxu0 0.0
    %386 = vmatpush1.msra.mxu0 0.0
    %387 = vmatprep.subr.mxu0 0.0
    %388 = vmatpush1.msra.mxu0 0.0
    %389 = vmatprep.subr.mxu0 0.0
    %390 = vmatpush1.msra.mxu0 0.0
    %391 = vmatprep.subr.mxu0 0.0
    %392 = vmatpush1.msra.mxu0 0.0
    %393 = vmatprep.subr.mxu0 0.0
    %394 = vmatpush1.msra.mxu0 0.0
    %395 = vmatprep.subr.mxu0 0.0
    %396 = vmatpush1.msra.mxu0 0.0
    %397 = vmatprep.subr.mxu0 0.0
    %398 = vmatpush1.msra.mxu0 0.0
    %399 = vmatprep.subr.mxu0 0.0
    %400 = vmatpush1.msra.mxu0 0.0
    %401 = vmatprep.subr.mxu0 0.0
    %402 = vmatpush1.msra.mxu0 0.0
    %403 = vmatprep.subr.mxu0 0.0
    %404 = vmatpush1.msra.mxu0 0.0
    %405 = vmatprep.subr.mxu0 0.0
    %406 = vmatpush1.msra.mxu0 0.0
    %407 = vmatprep.subr.mxu0 0.0
    %408 = vmatpush1.msra.mxu0 0.0
    %409 = vmatprep.subr.mxu0 0.0
    %410 = vmatpush1.msra.mxu0 0.0
    %411 = vmatprep.subr.mxu0 0.0
    %412 = vmatpush1.msra.mxu0 0.0
    %413 = vmatprep.subr.mxu0 0.0
    %414 = vmatpush1.msra.mxu0 0.0
    %415 = vmatprep.subr.mxu0 0.0
    %416 = vmatpush1.msra.mxu0 0.0
    %417 = vmatprep.subr.mxu0 0.0
    %418 = vmatpush1.msra.mxu0 0.0
    %419 = vmatprep.mubr.f32.mxu0 0.0
    %v420 = vand.u32 %v124, 4294901760
    %v421 = vsub.f32 %v124, %v420
    %422 = vmatmul.mubr.f32.gmra.mrb[0].mxu0 %v421
    %v423 = vpop.f32.mrb[0].mxu0
    %v424 = vadd.f32 %v330, %v423
    %v425 = vpop.f32.mrb[0].mxu0
    %426 = vmatprep.mubr.f32.mxu0 0.0
    %v427 = vand.u32 %v127, 4294901760
    %v428 = vsub.f32 %v127, %v427
    %429 = vmatmul.mubr.f32.gmra.mrb[0].mxu0 %v428
    %v430 = vpop.f32.mrb[0].mxu0
    %v431 = vadd.f32 %v336, %v430
    %v432 = vpop.f32.mrb[0].mxu0
    %433 = vdwg.mxu0
    %434 = vmatprep.subr.mxu0 0.0
    %v435 = vand.u32 %v107, 4294901760
    %436 = vmatpush1.msra.mxu0 %v435
    %437 = vmatprep.subr.mxu0 0.0
    %v438 = vand.u32 %v108, 4294901760
    %439 = vmatpush1.msra.mxu0 %v438
    %440 = vmatprep.subr.mxu0 0.0
    %v441 = vand.u32 %v109, 4294901760
    %442 = vmatpush1.msra.mxu0 %v441
    %443 = vmatprep.subr.mxu0 0.0
    %v444 = vand.u32 %v110, 4294901760
    %445 = vmatpush1.msra.mxu0 %v444
    %446 = vmatprep.subr.mxu0 0.0
    %v447 = vand.u32 %v111, 4294901760
    %448 = vmatpush1.msra.mxu0 %v447
    %449 = vmatprep.subr.mxu0 0.0
    %v450 = vand.u32 %v112, 4294901760
    %451 = vmatpush1.msra.mxu0 %v450
    %452 = vmatprep.subr.mxu0 0.0
    %v453 = vand.u32 %v113, 4294901760
    %454 = vmatpush1.msra.mxu0 %v453
    %455 = vmatprep.subr.mxu0 0.0
    %v456 = vand.u32 %v114, 4294901760
    %457 = vmatpush1.msra.mxu0 %v456
    %458 = vmatprep.subr.mxu0 0.0
    %459 = vmatpush1.msra.mxu0 0.0
    %460 = vmatprep.subr.mxu0 0.0
    %461 = vmatpush1.msra.mxu0 0.0
    %462 = vmatprep.subr.mxu0 0.0
    %463 = vmatpush1.msra.mxu0 0.0
    %464 = vmatprep.subr.mxu0 0.0
    %465 = vmatpush1.msra.mxu0 0.0
    %466 = vmatprep.subr.mxu0 0.0
    %467 = vmatpush1.msra.mxu0 0.0
    %468 = vmatprep.subr.mxu0 0.0
    %469 = vmatpush1.msra.mxu0 0.0
    %470 = vmatprep.subr.mxu0 0.0
    %471 = vmatpush1.msra.mxu0 0.0
    %472 = vmatprep.subr.mxu0 0.0
    %473 = vmatpush1.msra.mxu0 0.0
    %474 = vmatprep.subr.mxu0 0.0
    %475 = vmatpush1.msra.mxu0 0.0
    %476 = vmatprep.subr.mxu0 0.0
    %477 = vmatpush1.msra.mxu0 0.0
    %478 = vmatprep.subr.mxu0 0.0
    %479 = vmatpush1.msra.mxu0 0.0
    %480 = vmatprep.subr.mxu0 0.0
    %481 = vmatpush1.msra.mxu0 0.0
    %482 = vmatprep.subr.mxu0 0.0
    %483 = vmatpush1.msra.mxu0 0.0
    %484 = vmatprep.subr.mxu0 0.0
    %485 = vmatpush1.msra.mxu0 0.0
    %486 = vmatprep.subr.mxu0 0.0
    %487 = vmatpush1.msra.mxu0 0.0
    %488 = vmatprep.subr.mxu0 0.0
    %489 = vmatpush1.msra.mxu0 0.0
    %490 = vmatprep.subr.mxu0 0.0
    %491 = vmatpush1.msra.mxu0 0.0
    %492 = vmatprep.subr.mxu0 0.0
    %493 = vmatpush1.msra.mxu0 0.0
    %494 = vmatprep.subr.mxu0 0.0
    %495 = vmatpush1.msra.mxu0 0.0
    %496 = vmatprep.subr.mxu0 0.0
    %497 = vmatpush1.msra.mxu0 0.0
    %498 = vmatprep.subr.mxu0 0.0
    %499 = vmatpush1.msra.mxu0 0.0
    %500 = vmatprep.subr.mxu0 0.0
    %501 = vmatpush1.msra.mxu0 0.0
    %502 = vmatprep.subr.mxu0 0.0
    %503 = vmatpush1.msra.mxu0 0.0
    %504 = vmatprep.subr.mxu0 0.0
    %505 = vmatpush1.msra.mxu0 0.0
    %506 = vmatprep.mubr.f32.mxu0 0.0
    %v507 = vand.u32 %v124, 4294901760
    %v508 = vsub.f32 %v124, %v507
    %v509 = vand.u32 %v508, 4294901760
    %510 = vmatmul.mubr.f32.gmra.mrb[0].mxu0 %v509
    %v511 = vpop.f32.mrb[0].mxu0
    %v512 = vadd.f32 %v424, %v511
    %v513 = vpop.f32.mrb[0].mxu0
    %514 = vmatprep.mubr.f32.mxu0 0.0
    %v515 = vand.u32 %v127, 4294901760
    %v516 = vsub.f32 %v127, %v515
    %v517 = vand.u32 %v516, 4294901760
    %518 = vmatmul.mubr.f32.gmra.mrb[0].mxu0 %v517
    %v519 = vpop.f32.mrb[0].mxu0
    %v520 = vadd.f32 %v431, %v519
    %v521 = vpop.f32.mrb[0].mxu0
    %522 = vdwg.mxu0
    %523 = vmatprep.subr.mxu0 0.0
    %v524 = vand.u32 %v107, 4294901760
    %v525 = vsub.f32 %v107, %v524
    %v526 = vand.u32 %v525, 4294901760
    %527 = vmatpush1.msra.mxu0 %v526
    %528 = vmatprep.subr.mxu0 0.0
    %v529 = vand.u32 %v108, 4294901760
    %v530 = vsub.f32 %v108, %v529
    %v531 = vand.u32 %v530, 4294901760
    %532 = vmatpush1.msra.mxu0 %v531
    %533 = vmatprep.subr.mxu0 0.0
    %v534 = vand.u32 %v109, 4294901760
    %v535 = vsub.f32 %v109, %v534
    %v536 = vand.u32 %v535, 4294901760
    %537 = vmatpush1.msra.mxu0 %v536
    %538 = vmatprep.subr.mxu0 0.0
    %v539 = vand.u32 %v110, 4294901760
    %v540 = vsub.f32 %v110, %v539
    %v541 = vand.u32 %v540, 4294901760
    %542 = vmatpush1.msra.mxu0 %v541
    %543 = vmatprep.subr.mxu0 0.0
    %v544 = vand.u32 %v111, 4294901760
    %v545 = vsub.f32 %v111, %v544
    %v546 = vand.u32 %v545, 4294901760
    %547 = vmatpush1.msra.mxu0 %v546
    %548 = vmatprep.subr.mxu0 0.0
    %v549 = vand.u32 %v112, 4294901760
    %v550 = vsub.f32 %v112, %v549
    %v551 = vand.u32 %v550, 4294901760
    %552 = vmatpush1.msra.mxu0 %v551
    %553 = vmatprep.subr.mxu0 0.0
    %v554 = vand.u32 %v113, 4294901760
    %v555 = vsub.f32 %v113, %v554
    %v556 = vand.u32 %v555, 4294901760
    %557 = vmatpush1.msra.mxu0 %v556
    %558 = vmatprep.subr.mxu0 0.0
    %v559 = vand.u32 %v114, 4294901760
    %v560 = vsub.f32 %v114, %v559
    %v561 = vand.u32 %v560, 4294901760
    %562 = vmatpush1.msra.mxu0 %v561
    %563 = vmatprep.subr.mxu0 0.0
    %564 = vmatpush1.msra.mxu0 0.0
    %565 = vmatprep.subr.mxu0 0.0
    %566 = vmatpush1.msra.mxu0 0.0
    %567 = vmatprep.subr.mxu0 0.0
    %568 = vmatpush1.msra.mxu0 0.0
    %569 = vmatprep.subr.mxu0 0.0
    %570 = vmatpush1.msra.mxu0 0.0
    %571 = vmatprep.subr.mxu0 0.0
    %572 = vmatpush1.msra.mxu0 0.0
    %573 = vmatprep.subr.mxu0 0.0
    %574 = vmatpush1.msra.mxu0 0.0
    %575 = vmatprep.subr.mxu0 0.0
    %576 = vmatpush1.msra.mxu0 0.0
    %577 = vmatprep.subr.mxu0 0.0
    %578 = vmatpush1.msra.mxu0 0.0
    %579 = vmatprep.subr.mxu0 0.0
    %580 = vmatpush1.msra.mxu0 0.0
    %581 = vmatprep.subr.mxu0 0.0
    %582 = vmatpush1.msra.mxu0 0.0
    %583 = vmatprep.subr.mxu0 0.0
    %584 = vmatpush1.msra.mxu0 0.0
    %585 = vmatprep.subr.mxu0 0.0
    %586 = vmatpush1.msra.mxu0 0.0
    %587 = vmatprep.subr.mxu0 0.0
    %588 = vmatpush1.msra.mxu0 0.0
    %589 = vmatprep.subr.mxu0 0.0
    %590 = vmatpush1.msra.mxu0 0.0
    %591 = vmatprep.subr.mxu0 0.0
    %592 = vmatpush1.msra.mxu0 0.0
    %593 = vmatprep.subr.mxu0 0.0
    %594 = vmatpush1.msra.mxu0 0.0
    %595 = vmatprep.subr.mxu0 0.0
    %596 = vmatpush1.msra.mxu0 0.0
    %597 = vmatprep.subr.mxu0 0.0
    %598 = vmatpush1.msra.mxu0 0.0
    %599 = vmatprep.subr.mxu0 0.0
    %600 = vmatpush1.msra.mxu0 0.0
    %601 = vmatprep.subr.mxu0 0.0
    %602 = vmatpush1.msra.mxu0 0.0
    %603 = vmatprep.subr.mxu0 0.0
    %604 = vmatpush1.msra.mxu0 0.0
    %605 = vmatprep.subr.mxu0 0.0
    %606 = vmatpush1.msra.mxu0 0.0
    %607 = vmatprep.subr.mxu0 0.0
    %608 = vmatpush1.msra.mxu0 0.0
    %609 = vmatprep.subr.mxu0 0.0
    %610 = vmatpush1.msra.mxu0 0.0
    %611 = vmatprep.mubr.f32.mxu0 0.0
    %v612 = vand.u32 %v124, 4294901760
    %613 = vmatmul.mubr.f32.gmra.mrb[0].mxu0 %v612
    %v614 = vpop.f32.mrb[0].mxu0
    %v615 = vadd.f32 %v512, %v614
    %v616 = vpop.f32.mrb[0].mxu0
    %617 = vmatprep.mubr.f32.mxu0 0.0
    %v618 = vand.u32 %v127, 4294901760
    %619 = vmatmul.mubr.f32.gmra.mrb[0].mxu0 %v618
    %v620 = vpop.f32.mrb[0].mxu0
    %v621 = vadd.f32 %v520, %v620
    %v622 = vpop.f32.mrb[0].mxu0
    %623 = vdwg.mxu0
    %624 = vmatprep.subr.mxu0 0.0
    %v625 = vand.u32 %v107, 4294901760
    %626 = vmatpush1.msra.mxu0 %v625
    %627 = vmatprep.subr.mxu0 0.0
    %v628 = vand.u32 %v108, 4294901760
    %629 = vmatpush1.msra.mxu0 %v628
    %630 = vmatprep.subr.mxu0 0.0
    %v631 = vand.u32 %v109, 4294901760
    %632 = vmatpush1.msra.mxu0 %v631
    %633 = vmatprep.subr.mxu0 0.0
    %v634 = vand.u32 %v110, 4294901760
    %635 = vmatpush1.msra.mxu0 %v634
    %636 = vmatprep.subr.mxu0 0.0
    %v637 = vand.u32 %v111, 4294901760
    %638 = vmatpush1.msra.mxu0 %v637
    %639 = vmatprep.subr.mxu0 0.0
    %v640 = vand.u32 %v112, 4294901760
    %641 = vmatpush1.msra.mxu0 %v640
    %642 = vmatprep.subr.mxu0 0.0
    %v643 = vand.u32 %v113, 4294901760
    %644 = vmatpush1.msra.mxu0 %v643
    %645 = vmatprep.subr.mxu0 0.0
    %v646 = vand.u32 %v114, 4294901760
    %647 = vmatpush1.msra.mxu0 %v646
    %648 = vmatprep.subr.mxu0 0.0
    %649 = vmatpush1.msra.mxu0 0.0
    %650 = vmatprep.subr.mxu0 0.0
    %651 = vmatpush1.msra.mxu0 0.0
    %652 = vmatprep.subr.mxu0 0.0
    %653 = vmatpush1.msra.mxu0 0.0
    %654 = vmatprep.subr.mxu0 0.0
    %655 = vmatpush1.msra.mxu0 0.0
    %656 = vmatprep.subr.mxu0 0.0
    %657 = vmatpush1.msra.mxu0 0.0
    %658 = vmatprep.subr.mxu0 0.0
    %659 = vmatpush1.msra.mxu0 0.0
    %660 = vmatprep.subr.mxu0 0.0
    %661 = vmatpush1.msra.mxu0 0.0
    %662 = vmatprep.subr.mxu0 0.0
    %663 = vmatpush1.msra.mxu0 0.0
    %664 = vmatprep.subr.mxu0 0.0
    %665 = vmatpush1.msra.mxu0 0.0
    %666 = vmatprep.subr.mxu0 0.0
    %667 = vmatpush1.msra.mxu0 0.0
    %668 = vmatprep.subr.mxu0 0.0
    %669 = vmatpush1.msra.mxu0 0.0
    %670 = vmatprep.subr.mxu0 0.0
    %671 = vmatpush1.msra.mxu0 0.0
    %672 = vmatprep.subr.mxu0 0.0
    %673 = vmatpush1.msra.mxu0 0.0
    %674 = vmatprep.subr.mxu0 0.0
    %675 = vmatpush1.msra.mxu0 0.0
    %676 = vmatprep.subr.mxu0 0.0
    %677 = vmatpush1.msra.mxu0 0.0
    %678 = vmatprep.subr.mxu0 0.0
    %679 = vmatpush1.msra.mxu0 0.0
    %680 = vmatprep.subr.mxu0 0.0
    %681 = vmatpush1.msra.mxu0 0.0
    %682 = vmatprep.subr.mxu0 0.0
    %683 = vmatpush1.msra.mxu0 0.0
    %684 = vmatprep.subr.mxu0 0.0
    %685 = vmatpush1.msra.mxu0 0.0
    %686 = vmatprep.subr.mxu0 0.0
    %687 = vmatpush1.msra.mxu0 0.0
    %688 = vmatprep.subr.mxu0 0.0
    %689 = vmatpush1.msra.mxu0 0.0
    %690 = vmatprep.subr.mxu0 0.0
    %691 = vmatpush1.msra.mxu0 0.0
    %692 = vmatprep.subr.mxu0 0.0
    %693 = vmatpush1.msra.mxu0 0.0
    %694 = vmatprep.subr.mxu0 0.0
    %695 = vmatpush1.msra.mxu0 0.0
    %696 = vmatprep.mubr.f32.mxu0 0.0
    %v697 = vand.u32 %v124, 4294901760
    %698 = vmatmul.mubr.f32.gmra.mrb[0].mxu0 %v697
    %v699 = vpop.f32.mrb[0].mxu0
    %v700 = vadd.f32 %v615, %v699
    %v701 = vpop.f32.mrb[0].mxu0
    %702 = vmatprep.mubr.f32.mxu0 0.0
    %v703 = vand.u32 %v127, 4294901760
    %704 = vmatmul.mubr.f32.gmra.mrb[0].mxu0 %v703
    %v705 = vpop.f32.mrb[0].mxu0
    %v706 = vadd.f32 %v621, %v705
    %v707 = vpop.f32.mrb[0].mxu0
    %708 = vdwg.mxu0
    %v709 = vld [vmem:[%s8] sm:$0xff]
    %v710 = vld [vmem:[%s8 + $0x8] sm:$0xff]
    %v711 = vld [vmem:[%s8 + $0x10] sm:$0xff]
    %v712 = vld [vmem:[%s8 + $0x18] sm:$0xff]
    %v713 = vld [vmem:[%s9] sm:$0x1]
    %v715 = vlaneseq
    %v716 = vshrl.u32 %v715, 7
    %v717 = vsub.s32 0, %v716
    %v718 = vrot.slane %v713, %v717
    %vm720 = vcmask 261120
    %v722 = vsel %vm720, %v700, 0
    %v725 = vsel %vm720, %v706, 0
    %727 = vmatprep.subr.mxu0 0.0
    %v728 = vand.u32 %v709, 4294901760
    %729 = vmatpush1.msra.mxu0 %v728
    %730 = vmatprep.subr.mxu0 0.0
    %v731 = vand.u32 %v710, 4294901760
    %732 = vmatpush1.msra.mxu0 %v731
    %733 = vmatprep.subr.mxu0 0.0
    %v734 = vand.u32 %v711, 4294901760
    %735 = vmatpush1.msra.mxu0 %v734
    %736 = vmatprep.subr.mxu0 0.0
    %v737 = vand.u32 %v712, 4294901760
    %738 = vmatpush1.msra.mxu0 %v737
    %739 = vmatprep.subr.mxu0 0.0
    %740 = vmatpush1.msra.mxu0 0.0
    %741 = vmatprep.subr.mxu0 0.0
    %742 = vmatpush1.msra.mxu0 0.0
    %743 = vmatprep.subr.mxu0 0.0
    %744 = vmatpush1.msra.mxu0 0.0
    %745 = vmatprep.subr.mxu0 0.0
    %746 = vmatpush1.msra.mxu0 0.0
    %747 = vmatprep.subr.mxu0 0.0
    %748 = vmatpush1.msra.mxu0 0.0
    %749 = vmatprep.subr.mxu0 0.0
    %750 = vmatpush1.msra.mxu0 0.0
    %751 = vmatprep.subr.mxu0 0.0
    %752 = vmatpush1.msra.mxu0 0.0
    %753 = vmatprep.subr.mxu0 0.0
    %754 = vmatpush1.msra.mxu0 0.0
    %755 = vmatprep.subr.mxu0 0.0
    %756 = vmatpush1.msra.mxu0 0.0
    %757 = vmatprep.subr.mxu0 0.0
    %758 = vmatpush1.msra.mxu0 0.0
    %759 = vmatprep.subr.mxu0 0.0
    %760 = vmatpush1.msra.mxu0 0.0
    %761 = vmatprep.subr.mxu0 0.0
    %762 = vmatpush1.msra.mxu0 0.0
    %763 = vmatprep.subr.mxu0 0.0
    %764 = vmatpush1.msra.mxu0 0.0
    %765 = vmatprep.subr.mxu0 0.0
    %766 = vmatpush1.msra.mxu0 0.0
    %767 = vmatprep.subr.mxu0 0.0
    %768 = vmatpush1.msra.mxu0 0.0
    %769 = vmatprep.subr.mxu0 0.0
    %770 = vmatpush1.msra.mxu0 0.0
    %771 = vmatprep.subr.mxu0 0.0
    %772 = vmatpush1.msra.mxu0 0.0
    %773 = vmatprep.subr.mxu0 0.0
    %774 = vmatpush1.msra.mxu0 0.0
    %775 = vmatprep.subr.mxu0 0.0
    %776 = vmatpush1.msra.mxu0 0.0
    %777 = vmatprep.subr.mxu0 0.0
    %778 = vmatpush1.msra.mxu0 0.0
    %779 = vmatprep.subr.mxu0 0.0
    %780 = vmatpush1.msra.mxu0 0.0
    %781 = vmatprep.subr.mxu0 0.0
    %782 = vmatpush1.msra.mxu0 0.0
    %783 = vmatprep.subr.mxu0 0.0
    %784 = vmatpush1.msra.mxu0 0.0
    %785 = vmatprep.subr.mxu0 0.0
    %786 = vmatpush1.msra.mxu0 0.0
    %787 = vmatprep.subr.mxu0 0.0
    %788 = vmatpush1.msra.mxu0 0.0
    %789 = vmatprep.subr.mxu0 0.0
    %790 = vmatpush1.msra.mxu0 0.0
    %791 = vmatprep.subr.mxu0 0.0
    %792 = vmatpush1.msra.mxu0 0.0
    %793 = vmatprep.subr.mxu0 0.0
    %794 = vmatpush1.msra.mxu0 0.0
    %795 = vmatprep.mubr.f32.mxu0 0.0
    %v796 = vand.u32 %v722, 4294901760
    %v797 = vsub.f32 %v722, %v796
    %v798 = vand.u32 %v797, 4294901760
    %v799 = vsub.f32 %v797, %v798
    %v800 = vand.u32 %v799, 4294901760
    %801 = vmatmul.mubr.f32.gmra.mrb[0].mxu0 %v800
    %v802 = vpop.f32.mrb[0].mxu0
    %v803 = vadd.f32 %v718, %v802
    %v804 = vpop.f32.mrb[0].mxu0
    %805 = vmatprep.mubr.f32.mxu0 0.0
    %v806 = vand.u32 %v725, 4294901760
    %v807 = vsub.f32 %v725, %v806
    %v808 = vand.u32 %v807, 4294901760
    %v809 = vsub.f32 %v807, %v808
    %v810 = vand.u32 %v809, 4294901760
    %811 = vmatmul.mubr.f32.gmra.mrb[0].mxu0 %v810
    %v812 = vpop.f32.mrb[0].mxu0
    %v813 = vadd.f32 %v718, %v812
    %v814 = vpop.f32.mrb[0].mxu0
    %815 = vdwg.mxu0
    %816 = vmatprep.subr.mxu0 0.0
    %v817 = vand.u32 %v709, 4294901760
    %v818 = vsub.f32 %v709, %v817
    %v819 = vand.u32 %v818, 4294901760
    %v820 = vsub.f32 %v818, %v819
    %v821 = vand.u32 %v820, 4294901760
    %822 = vmatpush1.msra.mxu0 %v821
    %823 = vmatprep.subr.mxu0 0.0
    %v824 = vand.u32 %v710, 4294901760
    %v825 = vsub.f32 %v710, %v824
    %v826 = vand.u32 %v825, 4294901760
    %v827 = vsub.f32 %v825, %v826
    %v828 = vand.u32 %v827, 4294901760
    %829 = vmatpush1.msra.mxu0 %v828
    %830 = vmatprep.subr.mxu0 0.0
    %v831 = vand.u32 %v711, 4294901760
    %v832 = vsub.f32 %v711, %v831
    %v833 = vand.u32 %v832, 4294901760
    %v834 = vsub.f32 %v832, %v833
    %v835 = vand.u32 %v834, 4294901760
    %836 = vmatpush1.msra.mxu0 %v835
    %837 = vmatprep.subr.mxu0 0.0
    %v838 = vand.u32 %v712, 4294901760
    %v839 = vsub.f32 %v712, %v838
    %v840 = vand.u32 %v839, 4294901760
    %v841 = vsub.f32 %v839, %v840
    %v842 = vand.u32 %v841, 4294901760
    %843 = vmatpush1.msra.mxu0 %v842
    %844 = vmatprep.subr.mxu0 0.0
    %845 = vmatpush1.msra.mxu0 0.0
    %846 = vmatprep.subr.mxu0 0.0
    %847 = vmatpush1.msra.mxu0 0.0
    %848 = vmatprep.subr.mxu0 0.0
    %849 = vmatpush1.msra.mxu0 0.0
    %850 = vmatprep.subr.mxu0 0.0
    %851 = vmatpush1.msra.mxu0 0.0
    %852 = vmatprep.subr.mxu0 0.0
    %853 = vmatpush1.msra.mxu0 0.0
    %854 = vmatprep.subr.mxu0 0.0
    %855 = vmatpush1.msra.mxu0 0.0
    %856 = vmatprep.subr.mxu0 0.0
    %857 = vmatpush1.msra.mxu0 0.0
    %858 = vmatprep.subr.mxu0 0.0
    %859 = vmatpush1.msra.mxu0 0.0
    %860 = vmatprep.subr.mxu0 0.0
    %861 = vmatpush1.msra.mxu0 0.0
    %862 = vmatprep.subr.mxu0 0.0
    %863 = vmatpush1.msra.mxu0 0.0
    %864 = vmatprep.subr.mxu0 0.0
    %865 = vmatpush1.msra.mxu0 0.0
    %866 = vmatprep.subr.mxu0 0.0
    %867 = vmatpush1.msra.mxu0 0.0
    %868 = vmatprep.subr.mxu0 0.0
    %869 = vmatpush1.msra.mxu0 0.0
    %870 = vmatprep.subr.mxu0 0.0
    %871 = vmatpush1.msra.mxu0 0.0
    %872 = vmatprep.subr.mxu0 0.0
    %873 = vmatpush1.msra.mxu0 0.0
    %874 = vmatprep.subr.mxu0 0.0
    %875 = vmatpush1.msra.mxu0 0.0
    %876 = vmatprep.subr.mxu0 0.0
    %877 = vmatpush1.msra.mxu0 0.0
    %878 = vmatprep.subr.mxu0 0.0
    %879 = vmatpush1.msra.mxu0 0.0
    %880 = vmatprep.subr.mxu0 0.0
    %881 = vmatpush1.msra.mxu0 0.0
    %882 = vmatprep.subr.mxu0 0.0
    %883 = vmatpush1.msra.mxu0 0.0
    %884 = vmatprep.subr.mxu0 0.0
    %885 = vmatpush1.msra.mxu0 0.0
    %886 = vmatprep.subr.mxu0 0.0
    %887 = vmatpush1.msra.mxu0 0.0
    %888 = vmatprep.subr.mxu0 0.0
    %889 = vmatpush1.msra.mxu0 0.0
    %890 = vmatprep.subr.mxu0 0.0
    %891 = vmatpush1.msra.mxu0 0.0
    %892 = vmatprep.subr.mxu0 0.0
    %893 = vmatpush1.msra.mxu0 0.0
    %894 = vmatprep.subr.mxu0 0.0
    %895 = vmatpush1.msra.mxu0 0.0
    %896 = vmatprep.subr.mxu0 0.0
    %897 = vmatpush1.msra.mxu0 0.0
    %898 = vmatprep.subr.mxu0 0.0
    %899 = vmatpush1.msra.mxu0 0.0
    %900 = vmatprep.mubr.f32.mxu0 0.0
    %v901 = vand.u32 %v722, 4294901760
    %902 = vmatmul.mubr.f32.gmra.mrb[0].mxu0 %v901
    %v903 = vpop.f32.mrb[0].mxu0
    %v904 = vadd.f32 %v803, %v903
    %v905 = vpop.f32.mrb[0].mxu0
    %906 = vmatprep.mubr.f32.mxu0 0.0
    %v907 = vand.u32 %v725, 4294901760
    %908 = vmatmul.mubr.f32.gmra.mrb[0].mxu0 %v907
    %v909 = vpop.f32.mrb[0].mxu0
    %v910 = vadd.f32 %v813, %v909
    %v911 = vpop.f32.mrb[0].mxu0
    %912 = vdwg.mxu0
    %913 = vmatprep.subr.mxu0 0.0
    %v914 = vand.u32 %v709, 4294901760
    %v915 = vsub.f32 %v709, %v914
    %916 = vmatpush1.msra.mxu0 %v915
    %917 = vmatprep.subr.mxu0 0.0
    %v918 = vand.u32 %v710, 4294901760
    %v919 = vsub.f32 %v710, %v918
    %920 = vmatpush1.msra.mxu0 %v919
    %921 = vmatprep.subr.mxu0 0.0
    %v922 = vand.u32 %v711, 4294901760
    %v923 = vsub.f32 %v711, %v922
    %924 = vmatpush1.msra.mxu0 %v923
    %925 = vmatprep.subr.mxu0 0.0
    %v926 = vand.u32 %v712, 4294901760
    %v927 = vsub.f32 %v712, %v926
    %928 = vmatpush1.msra.mxu0 %v927
    %929 = vmatprep.subr.mxu0 0.0
    %930 = vmatpush1.msra.mxu0 0.0
    %931 = vmatprep.subr.mxu0 0.0
    %932 = vmatpush1.msra.mxu0 0.0
    %933 = vmatprep.subr.mxu0 0.0
    %934 = vmatpush1.msra.mxu0 0.0
    %935 = vmatprep.subr.mxu0 0.0
    %936 = vmatpush1.msra.mxu0 0.0
    %937 = vmatprep.subr.mxu0 0.0
    %938 = vmatpush1.msra.mxu0 0.0
    %939 = vmatprep.subr.mxu0 0.0
    %940 = vmatpush1.msra.mxu0 0.0
    %941 = vmatprep.subr.mxu0 0.0
    %942 = vmatpush1.msra.mxu0 0.0
    %943 = vmatprep.subr.mxu0 0.0
    %944 = vmatpush1.msra.mxu0 0.0
    %945 = vmatprep.subr.mxu0 0.0
    %946 = vmatpush1.msra.mxu0 0.0
    %947 = vmatprep.subr.mxu0 0.0
    %948 = vmatpush1.msra.mxu0 0.0
    %949 = vmatprep.subr.mxu0 0.0
    %950 = vmatpush1.msra.mxu0 0.0
    %951 = vmatprep.subr.mxu0 0.0
    %952 = vmatpush1.msra.mxu0 0.0
    %953 = vmatprep.subr.mxu0 0.0
    %954 = vmatpush1.msra.mxu0 0.0
    %955 = vmatprep.subr.mxu0 0.0
    %956 = vmatpush1.msra.mxu0 0.0
    %957 = vmatprep.subr.mxu0 0.0
    %958 = vmatpush1.msra.mxu0 0.0
    %959 = vmatprep.subr.mxu0 0.0
    %960 = vmatpush1.msra.mxu0 0.0
    %961 = vmatprep.subr.mxu0 0.0
    %962 = vmatpush1.msra.mxu0 0.0
    %963 = vmatprep.subr.mxu0 0.0
    %964 = vmatpush1.msra.mxu0 0.0
    %965 = vmatprep.subr.mxu0 0.0
    %966 = vmatpush1.msra.mxu0 0.0
    %967 = vmatprep.subr.mxu0 0.0
    %968 = vmatpush1.msra.mxu0 0.0
    %969 = vmatprep.subr.mxu0 0.0
    %970 = vmatpush1.msra.mxu0 0.0
    %971 = vmatprep.subr.mxu0 0.0
    %972 = vmatpush1.msra.mxu0 0.0
    %973 = vmatprep.subr.mxu0 0.0
    %974 = vmatpush1.msra.mxu0 0.0
    %975 = vmatprep.subr.mxu0 0.0
    %976 = vmatpush1.msra.mxu0 0.0
    %977 = vmatprep.subr.mxu0 0.0
    %978 = vmatpush1.msra.mxu0 0.0
    %979 = vmatprep.subr.mxu0 0.0
    %980 = vmatpush1.msra.mxu0 0.0
    %981 = vmatprep.subr.mxu0 0.0
    %982 = vmatpush1.msra.mxu0 0.0
    %983 = vmatprep.subr.mxu0 0.0
    %984 = vmatpush1.msra.mxu0 0.0
    %985 = vmatprep.mubr.f32.mxu0 0.0
    %v986 = vand.u32 %v722, 4294901760
    %v987 = vsub.f32 %v722, %v986
    %988 = vmatmul.mubr.f32.gmra.mrb[0].mxu0 %v987
    %v989 = vpop.f32.mrb[0].mxu0
    %v990 = vadd.f32 %v904, %v989
    %v991 = vpop.f32.mrb[0].mxu0
    %992 = vmatprep.mubr.f32.mxu0 0.0
    %v993 = vand.u32 %v725, 4294901760
    %v994 = vsub.f32 %v725, %v993
    %995 = vmatmul.mubr.f32.gmra.mrb[0].mxu0 %v994
    %v996 = vpop.f32.mrb[0].mxu0
    %v997 = vadd.f32 %v910, %v996
    %v998 = vpop.f32.mrb[0].mxu0
    %999 = vdwg.mxu0
    %1000 = vmatprep.subr.mxu0 0.0
    %v1001 = vand.u32 %v709, 4294901760
    %1002 = vmatpush1.msra.mxu0 %v1001
    %1003 = vmatprep.subr.mxu0 0.0
    %v1004 = vand.u32 %v710, 4294901760
    %1005 = vmatpush1.msra.mxu0 %v1004
    %1006 = vmatprep.subr.mxu0 0.0
    %v1007 = vand.u32 %v711, 4294901760
    %1008 = vmatpush1.msra.mxu0 %v1007
    %1009 = vmatprep.subr.mxu0 0.0
    %v1010 = vand.u32 %v712, 4294901760
    %1011 = vmatpush1.msra.mxu0 %v1010
    %1012 = vmatprep.subr.mxu0 0.0
    %1013 = vmatpush1.msra.mxu0 0.0
    %1014 = vmatprep.subr.mxu0 0.0
    %1015 = vmatpush1.msra.mxu0 0.0
    %1016 = vmatprep.subr.mxu0 0.0
    %1017 = vmatpush1.msra.mxu0 0.0
    %1018 = vmatprep.subr.mxu0 0.0
    %1019 = vmatpush1.msra.mxu0 0.0
    %1020 = vmatprep.subr.mxu0 0.0
    %1021 = vmatpush1.msra.mxu0 0.0
    %1022 = vmatprep.subr.mxu0 0.0
    %1023 = vmatpush1.msra.mxu0 0.0
    %1024 = vmatprep.subr.mxu0 0.0
    %1025 = vmatpush1.msra.mxu0 0.0
    %1026 = vmatprep.subr.mxu0 0.0
    %1027 = vmatpush1.msra.mxu0 0.0
    %1028 = vmatprep.subr.mxu0 0.0
    %1029 = vmatpush1.msra.mxu0 0.0
    %1030 = vmatprep.subr.mxu0 0.0
    %1031 = vmatpush1.msra.mxu0 0.0
    %1032 = vmatprep.subr.mxu0 0.0
    %1033 = vmatpush1.msra.mxu0 0.0
    %1034 = vmatprep.subr.mxu0 0.0
    %1035 = vmatpush1.msra.mxu0 0.0
    %1036 = vmatprep.subr.mxu0 0.0
    %1037 = vmatpush1.msra.mxu0 0.0
    %1038 = vmatprep.subr.mxu0 0.0
    %1039 = vmatpush1.msra.mxu0 0.0
    %1040 = vmatprep.subr.mxu0 0.0
    %1041 = vmatpush1.msra.mxu0 0.0
    %1042 = vmatprep.subr.mxu0 0.0
    %1043 = vmatpush1.msra.mxu0 0.0
    %1044 = vmatprep.subr.mxu0 0.0
    %1045 = vmatpush1.msra.mxu0 0.0
    %1046 = vmatprep.subr.mxu0 0.0
    %1047 = vmatpush1.msra.mxu0 0.0
    %1048 = vmatprep.subr.mxu0 0.0
    %1049 = vmatpush1.msra.mxu0 0.0
    %1050 = vmatprep.subr.mxu0 0.0
    %1051 = vmatpush1.msra.mxu0 0.0
    %1052 = vmatprep.subr.mxu0 0.0
    %1053 = vmatpush1.msra.mxu0 0.0
    %1054 = vmatprep.subr.mxu0 0.0
    %1055 = vmatpush1.msra.mxu0 0.0
    %1056 = vmatprep.subr.mxu0 0.0
    %1057 = vmatpush1.msra.mxu0 0.0
    %1058 = vmatprep.subr.mxu0 0.0
    %1059 = vmatpush1.msra.mxu0 0.0
    %1060 = vmatprep.subr.mxu0 0.0
    %1061 = vmatpush1.msra.mxu0 0.0
    %1062 = vmatprep.subr.mxu0 0.0
    %1063 = vmatpush1.msra.mxu0 0.0
    %1064 = vmatprep.subr.mxu0 0.0
    %1065 = vmatpush1.msra.mxu0 0.0
    %1066 = vmatprep.subr.mxu0 0.0
    %1067 = vmatpush1.msra.mxu0 0.0
    %1068 = vmatprep.mubr.f32.mxu0 0.0
    %v1069 = vand.u32 %v722, 4294901760
    %v1070 = vsub.f32 %v722, %v1069
    %v1071 = vand.u32 %v1070, 4294901760
    %1072 = vmatmul.mubr.f32.gmra.mrb[0].mxu0 %v1071
    %v1073 = vpop.f32.mrb[0].mxu0
    %v1074 = vadd.f32 %v990, %v1073
    %v1075 = vpop.f32.mrb[0].mxu0
    %1076 = vmatprep.mubr.f32.mxu0 0.0
    %v1077 = vand.u32 %v725, 4294901760
    %v1078 = vsub.f32 %v725, %v1077
    %v1079 = vand.u32 %v1078, 4294901760
    %1080 = vmatmul.mubr.f32.gmra.mrb[0].mxu0 %v1079
    %v1081 = vpop.f32.mrb[0].mxu0
    %v1082 = vadd.f32 %v997, %v1081
    %v1083 = vpop.f32.mrb[0].mxu0
    %1084 = vdwg.mxu0
    %1085 = vmatprep.subr.mxu0 0.0
    %v1086 = vand.u32 %v709, 4294901760
    %v1087 = vsub.f32 %v709, %v1086
    %v1088 = vand.u32 %v1087, 4294901760
    %1089 = vmatpush1.msra.mxu0 %v1088
    %1090 = vmatprep.subr.mxu0 0.0
    %v1091 = vand.u32 %v710, 4294901760
    %v1092 = vsub.f32 %v710, %v1091
    %v1093 = vand.u32 %v1092, 4294901760
    %1094 = vmatpush1.msra.mxu0 %v1093
    %1095 = vmatprep.subr.mxu0 0.0
    %v1096 = vand.u32 %v711, 4294901760
    %v1097 = vsub.f32 %v711, %v1096
    %v1098 = vand.u32 %v1097, 4294901760
    %1099 = vmatpush1.msra.mxu0 %v1098
    %1100 = vmatprep.subr.mxu0 0.0
    %v1101 = vand.u32 %v712, 4294901760
    %v1102 = vsub.f32 %v712, %v1101
    %v1103 = vand.u32 %v1102, 4294901760
    %1104 = vmatpush1.msra.mxu0 %v1103
    %1105 = vmatprep.subr.mxu0 0.0
    %1106 = vmatpush1.msra.mxu0 0.0
    %1107 = vmatprep.subr.mxu0 0.0
    %1108 = vmatpush1.msra.mxu0 0.0
    %1109 = vmatprep.subr.mxu0 0.0
    %1110 = vmatpush1.msra.mxu0 0.0
    %1111 = vmatprep.subr.mxu0 0.0
    %1112 = vmatpush1.msra.mxu0 0.0
    %1113 = vmatprep.subr.mxu0 0.0
    %1114 = vmatpush1.msra.mxu0 0.0
    %1115 = vmatprep.subr.mxu0 0.0
    %1116 = vmatpush1.msra.mxu0 0.0
    %1117 = vmatprep.subr.mxu0 0.0
    %1118 = vmatpush1.msra.mxu0 0.0
    %1119 = vmatprep.subr.mxu0 0.0
    %1120 = vmatpush1.msra.mxu0 0.0
    %1121 = vmatprep.subr.mxu0 0.0
    %1122 = vmatpush1.msra.mxu0 0.0
    %1123 = vmatprep.subr.mxu0 0.0
    %1124 = vmatpush1.msra.mxu0 0.0
    %1125 = vmatprep.subr.mxu0 0.0
    %1126 = vmatpush1.msra.mxu0 0.0
    %1127 = vmatprep.subr.mxu0 0.0
    %1128 = vmatpush1.msra.mxu0 0.0
    %1129 = vmatprep.subr.mxu0 0.0
    %1130 = vmatpush1.msra.mxu0 0.0
    %1131 = vmatprep.subr.mxu0 0.0
    %1132 = vmatpush1.msra.mxu0 0.0
    %1133 = vmatprep.subr.mxu0 0.0
    %1134 = vmatpush1.msra.mxu0 0.0
    %1135 = vmatprep.subr.mxu0 0.0
    %1136 = vmatpush1.msra.mxu0 0.0
    %1137 = vmatprep.subr.mxu0 0.0
    %1138 = vmatpush1.msra.mxu0 0.0
    %1139 = vmatprep.subr.mxu0 0.0
    %1140 = vmatpush1.msra.mxu0 0.0
    %1141 = vmatprep.subr.mxu0 0.0
    %1142 = vmatpush1.msra.mxu0 0.0
    %1143 = vmatprep.subr.mxu0 0.0
    %1144 = vmatpush1.msra.mxu0 0.0
    %1145 = vmatprep.subr.mxu0 0.0
    %1146 = vmatpush1.msra.mxu0 0.0
    %1147 = vmatprep.subr.mxu0 0.0
    %1148 = vmatpush1.msra.mxu0 0.0
    %1149 = vmatprep.subr.mxu0 0.0
    %1150 = vmatpush1.msra.mxu0 0.0
    %1151 = vmatprep.subr.mxu0 0.0
    %1152 = vmatpush1.msra.mxu0 0.0
    %1153 = vmatprep.subr.mxu0 0.0
    %1154 = vmatpush1.msra.mxu0 0.0
    %1155 = vmatprep.subr.mxu0 0.0
    %1156 = vmatpush1.msra.mxu0 0.0
    %1157 = vmatprep.subr.mxu0 0.0
    %1158 = vmatpush1.msra.mxu0 0.0
    %1159 = vmatprep.subr.mxu0 0.0
    %1160 = vmatpush1.msra.mxu0 0.0
    %1161 = vmatprep.mubr.f32.mxu0 0.0
    %v1162 = vand.u32 %v722, 4294901760
    %1163 = vmatmul.mubr.f32.gmra.mrb[0].mxu0 %v1162
    %v1164 = vpop.f32.mrb[0].mxu0
    %v1165 = vadd.f32 %v1074, %v1164
    %v1166 = vpop.f32.mrb[0].mxu0
    %1167 = vmatprep.mubr.f32.mxu0 0.0
    %v1168 = vand.u32 %v725, 4294901760
    %1169 = vmatmul.mubr.f32.gmra.mrb[0].mxu0 %v1168
    %v1170 = vpop.f32.mrb[0].mxu0
    %v1171 = vadd.f32 %v1082, %v1170
    %v1172 = vpop.f32.mrb[0].mxu0
    %1173 = vdwg.mxu0
    %1174 = vmatprep.subr.mxu0 0.0
    %v1175 = vand.u32 %v709, 4294901760
    %1176 = vmatpush1.msra.mxu0 %v1175
    %1177 = vmatprep.subr.mxu0 0.0
    %v1178 = vand.u32 %v710, 4294901760
    %1179 = vmatpush1.msra.mxu0 %v1178
    %1180 = vmatprep.subr.mxu0 0.0
    %v1181 = vand.u32 %v711, 4294901760
    %1182 = vmatpush1.msra.mxu0 %v1181
    %1183 = vmatprep.subr.mxu0 0.0
    %v1184 = vand.u32 %v712, 4294901760
    %1185 = vmatpush1.msra.mxu0 %v1184
    %1186 = vmatprep.subr.mxu0 0.0
    %1187 = vmatpush1.msra.mxu0 0.0
    %1188 = vmatprep.subr.mxu0 0.0
    %1189 = vmatpush1.msra.mxu0 0.0
    %1190 = vmatprep.subr.mxu0 0.0
    %1191 = vmatpush1.msra.mxu0 0.0
    %1192 = vmatprep.subr.mxu0 0.0
    %1193 = vmatpush1.msra.mxu0 0.0
    %1194 = vmatprep.subr.mxu0 0.0
    %1195 = vmatpush1.msra.mxu0 0.0
    %1196 = vmatprep.subr.mxu0 0.0
    %1197 = vmatpush1.msra.mxu0 0.0
    %1198 = vmatprep.subr.mxu0 0.0
    %1199 = vmatpush1.msra.mxu0 0.0
    %1200 = vmatprep.subr.mxu0 0.0
    %1201 = vmatpush1.msra.mxu0 0.0
    %1202 = vmatprep.subr.mxu0 0.0
    %1203 = vmatpush1.msra.mxu0 0.0
    %1204 = vmatprep.subr.mxu0 0.0
    %1205 = vmatpush1.msra.mxu0 0.0
    %1206 = vmatprep.subr.mxu0 0.0
    %1207 = vmatpush1.msra.mxu0 0.0
    %1208 = vmatprep.subr.mxu0 0.0
    %1209 = vmatpush1.msra.mxu0 0.0
    %1210 = vmatprep.subr.mxu0 0.0
    %1211 = vmatpush1.msra.mxu0 0.0
    %1212 = vmatprep.subr.mxu0 0.0
    %1213 = vmatpush1.msra.mxu0 0.0
    %1214 = vmatprep.subr.mxu0 0.0
    %1215 = vmatpush1.msra.mxu0 0.0
    %1216 = vmatprep.subr.mxu0 0.0
    %1217 = vmatpush1.msra.mxu0 0.0
    %1218 = vmatprep.subr.mxu0 0.0
    %1219 = vmatpush1.msra.mxu0 0.0
    %1220 = vmatprep.subr.mxu0 0.0
    %1221 = vmatpush1.msra.mxu0 0.0
    %1222 = vmatprep.subr.mxu0 0.0
    %1223 = vmatpush1.msra.mxu0 0.0
    %1224 = vmatprep.subr.mxu0 0.0
    %1225 = vmatpush1.msra.mxu0 0.0
    %1226 = vmatprep.subr.mxu0 0.0
    %1227 = vmatpush1.msra.mxu0 0.0
    %1228 = vmatprep.subr.mxu0 0.0
    %1229 = vmatpush1.msra.mxu0 0.0
    %1230 = vmatprep.subr.mxu0 0.0
    %1231 = vmatpush1.msra.mxu0 0.0
    %1232 = vmatprep.subr.mxu0 0.0
    %1233 = vmatpush1.msra.mxu0 0.0
    %1234 = vmatprep.subr.mxu0 0.0
    %1235 = vmatpush1.msra.mxu0 0.0
    %1236 = vmatprep.subr.mxu0 0.0
    %1237 = vmatpush1.msra.mxu0 0.0
    %1238 = vmatprep.subr.mxu0 0.0
    %1239 = vmatpush1.msra.mxu0 0.0
    %1240 = vmatprep.subr.mxu0 0.0
    %1241 = vmatpush1.msra.mxu0 0.0
    %1242 = vmatprep.mubr.f32.mxu0 0.0
    %v1243 = vand.u32 %v722, 4294901760
    %1244 = vmatmul.mubr.f32.gmra.mrb[0].mxu0 %v1243
    %v1245 = vpop.f32.mrb[0].mxu0
    %v1246 = vadd.f32 %v1165, %v1245
    %v1247 = vpop.f32.mrb[0].mxu0
    %1248 = vmatprep.mubr.f32.mxu0 0.0
    %v1249 = vand.u32 %v725, 4294901760
    %1250 = vmatmul.mubr.f32.gmra.mrb[0].mxu0 %v1249
    %v1251 = vpop.f32.mrb[0].mxu0
    %v1252 = vadd.f32 %v1171, %v1251
    %v1253 = vpop.f32.mrb[0].mxu0
    %1254 = vdwg.mxu0
    %v1255 = vmax.f32 %v1246, 0.0
    %v1256 = vmax.f32 %v1252, 0.0
    %v1257 = vld [vmem:[%s10] sm:$0x1]
    %v1259 = vlaneseq
    %v1260 = vshrl.u32 %v1259, 7
    %v1261 = vsub.s32 0, %v1260
    %v1262 = vrot.slane %v1257, %v1261
    %v1264 = vmul.f32 %v1255, %v1262
    %v1265 = vmul.f32 %v1256, %v1262
    %v1266 = vsel %vm122, %v1264, 0.0
    %1267 = vadd.xlane.f32.xlu0 %v1266
    %v1268 = vpop.xlane.xlu0 %1267
    %v1269 = vsel %vm122, %v1265, 0.0
    %1270 = vadd.xlane.f32.xlu0 %v1269
    %v1271 = vpop.xlane.xlu0 %1270
    %s1272 = sld [smem:[#allocation3]]
    %v1273 = vstv %s1272
    %v1274 = vadd.f32 %v1268, %v1273
    %v1275 = vadd.f32 %v1271, %v1273
    %v1278 = vlaneseq
    %v1279 = vand.u32 %v1278, 127
    %v1280 = vlaneseq
    %v1281 = vshrl.u32 %v1280, 7
    %v1282 = vsub.s32 %v1279, %v1281
    %v1283 = vrot.slane %v1274, %v1282
    %v1284 = vlaneseq
    %v1285 = vshrl.u32 %v1284, 7
    %v1286 = vsub.s32 %v1279, %v1285
    %v1287 = vrot.slane %v1275, %v1286
    %vm1288 = vcmask 1041409
    %v1289 = vsel %vm1288, %v1287, %v1283
    %vm1291 = vcmask 58368
    %v1292 = vsel %vm1291, %v1289, -inf
    %1293 = vmax.xlane.f32.xlu0 %v1292
    %v1294 = vpop.xlane.xlu0 %1293
    %v1296 = vlaneseq
    %v1297 = vshrl.u32 %v1296, 7
    %v1298 = vsub.s32 0, %v1297
    %v1299 = vrot.slane %v1294, %v1298
    %v1300 = vlaneseq
    %v1301 = vshrl.u32 %v1300, 7
    %v1302 = vsub.s32 1, %v1301
    %v1303 = vrot.slane %v1294, %v1302
    %v1306 = vsub.f32 %v1274, %v1299
    %v1307 = vsub.f32 %v1275, %v1303
    %v1308 = vmul.f32 %v1306, 1.442695
    %v1309 = vpow.pop %v1308
    %v1310 = vmul.f32 %v1307, 1.442695
    %v1311 = vpow.pop %v1310
    %1314 = vset.pattern.permute.xlu0 0
    %1315 = vperm.xlu0 %1314, %v1309
    %v1316 = vpop.permute.xlu0 %1315
    %1317 = vset.pattern.permute.xlu0 0
    %1318 = vperm.xlu0 %1317, %v1311
    %v1319 = vpop.permute.xlu0 %1318
    %v1320 = vlaneseq
    %v1321 = vshrl.u32 %v1320, 7
    %v1322 = vsub.s32 %v1279, %v1321
    %v1323 = vrot.slane %v1316, %v1322
    %v1324 = vlaneseq
    %v1325 = vshrl.u32 %v1324, 7
    %v1326 = vsub.s32 %v1279, %v1325
    %v1327 = vrot.slane %v1319, %v1326
    %v1328 = vsel %vm1288, %v1327, %v1323
    %v1330 = vsel %vm1291, %v1328, 0.0
    %1331 = vadd.xlane.f32.xlu0 %v1330
    %v1332 = vpop.xlane.xlu0 %1331
    %v1334 = vlaneseq
    %v1335 = vshrl.u32 %v1334, 7
    %v1336 = vsub.s32 0, %v1335
    %v1337 = vrot.slane %v1332, %v1336
    %v1338 = vlaneseq
    %v1339 = vshrl.u32 %v1338, 7
    %v1340 = vsub.s32 1, %v1339
    %v1341 = vrot.slane %v1332, %v1340
    %v1344 = vrcp.pop %v1337
    %v1345 = vmul.f32 %v1309, %v1344
    %v1346 = vrcp.pop %v1341
    %v1347 = vmul.f32 %v1311, %v1346
    %1350 = vset.pattern.permute.xlu0 0
    %1351 = vperm.xlu0 %1350, %v1345
    %v1352 = vpop.permute.xlu0 %1351
    %1353 = vset.pattern.permute.xlu0 0
    %1354 = vperm.xlu0 %1353, %v1347
    %v1355 = vpop.permute.xlu0 %1354
    %v1356 = vlaneseq
    %v1357 = vshrl.u32 %v1356, 7
    %v1358 = vsub.s32 %v1279, %v1357
    %v1359 = vrot.slane %v1352, %v1358
    %v1360 = vlaneseq
    %v1361 = vshrl.u32 %v1360, 7
    %v1362 = vsub.s32 %v1279, %v1361
    %v1363 = vrot.slane %v1355, %v1362
    %v1364 = vsel %vm1288, %v1363, %v1359
    %1366 = vst.msk [vmem:[#allocation5] sm:$0x3] %vm1291, %v1364
    %v1367 = vld [vmem:[%s11] sm:$0xff]
    %v1368 = vld [vmem:[%s11 + $0x8] sm:$0xff]
    %v1369 = vld [vmem:[%s11 + $0x10] sm:$0xff]
    %v1370 = vld [vmem:[%s11 + $0x18] sm:$0xff]
    %1371 = vmatprep.subr.mxu0 0.0
    %v1372 = vand.u32 %v1367, 4294901760
    %1373 = vmatpush1.msra.mxu0 %v1372
    %1374 = vmatprep.subr.mxu0 0.0
    %v1375 = vand.u32 %v1368, 4294901760
    %1376 = vmatpush1.msra.mxu0 %v1375
    %1377 = vmatprep.subr.mxu0 0.0
    %v1378 = vand.u32 %v1369, 4294901760
    %1379 = vmatpush1.msra.mxu0 %v1378
    %1380 = vmatprep.subr.mxu0 0.0
    %v1381 = vand.u32 %v1370, 4294901760
    %1382 = vmatpush1.msra.mxu0 %v1381
    %1383 = vmatprep.subr.mxu0 0.0
    %1384 = vmatpush1.msra.mxu0 0.0
    %1385 = vmatprep.subr.mxu0 0.0
    %1386 = vmatpush1.msra.mxu0 0.0
    %1387 = vmatprep.subr.mxu0 0.0
    %1388 = vmatpush1.msra.mxu0 0.0
    %1389 = vmatprep.subr.mxu0 0.0
    %1390 = vmatpush1.msra.mxu0 0.0
    %1391 = vmatprep.subr.mxu0 0.0
    %1392 = vmatpush1.msra.mxu0 0.0
    %1393 = vmatprep.subr.mxu0 0.0
    %1394 = vmatpush1.msra.mxu0 0.0
    %1395 = vmatprep.subr.mxu0 0.0
    %1396 = vmatpush1.msra.mxu0 0.0
    %1397 = vmatprep.subr.mxu0 0.0
    %1398 = vmatpush1.msra.mxu0 0.0
    %1399 = vmatprep.subr.mxu0 0.0
    %1400 = vmatpush1.msra.mxu0 0.0
    %1401 = vmatprep.subr.mxu0 0.0
    %1402 = vmatpush1.msra.mxu0 0.0
    %1403 = vmatprep.subr.mxu0 0.0
    %1404 = vmatpush1.msra.mxu0 0.0
    %1405 = vmatprep.subr.mxu0 0.0
    %1406 = vmatpush1.msra.mxu0 0.0
    %1407 = vmatprep.subr.mxu0 0.0
    %1408 = vmatpush1.msra.mxu0 0.0
    %1409 = vmatprep.subr.mxu0 0.0
    %1410 = vmatpush1.msra.mxu0 0.0
    %1411 = vmatprep.subr.mxu0 0.0
    %1412 = vmatpush1.msra.mxu0 0.0
    %1413 = vmatprep.subr.mxu0 0.0
    %1414 = vmatpush1.msra.mxu0 0.0
    %1415 = vmatprep.subr.mxu0 0.0
    %1416 = vmatpush1.msra.mxu0 0.0
    %1417 = vmatprep.subr.mxu0 0.0
    %1418 = vmatpush1.msra.mxu0 0.0
    %1419 = vmatprep.subr.mxu0 0.0
    %1420 = vmatpush1.msra.mxu0 0.0
    %1421 = vmatprep.subr.mxu0 0.0
    %1422 = vmatpush1.msra.mxu0 0.0
    %1423 = vmatprep.subr.mxu0 0.0
    %1424 = vmatpush1.msra.mxu0 0.0
    %1425 = vmatprep.subr.mxu0 0.0
    %1426 = vmatpush1.msra.mxu0 0.0
    %1427 = vmatprep.subr.mxu0 0.0
    %1428 = vmatpush1.msra.mxu0 0.0
    %1429 = vmatprep.subr.mxu0 0.0
    %1430 = vmatpush1.msra.mxu0 0.0
    %1431 = vmatprep.subr.mxu0 0.0
    %1432 = vmatpush1.msra.mxu0 0.0
    %1433 = vmatprep.subr.mxu0 0.0
    %1434 = vmatpush1.msra.mxu0 0.0
    %1435 = vmatprep.subr.mxu0 0.0
    %1436 = vmatpush1.msra.mxu0 0.0
    %1437 = vmatprep.subr.mxu0 0.0
    %1438 = vmatpush1.msra.mxu0 0.0
    %1439 = vmatprep.mubr.f32.mxu0 0.0
    %v1440 = vand.u32 %v722, 4294901760
    %v1441 = vsub.f32 %v722, %v1440
    %v1442 = vand.u32 %v1441, 4294901760
    %v1443 = vsub.f32 %v1441, %v1442
    %v1444 = vand.u32 %v1443, 4294901760
    %1445 = vmatmul.mubr.f32.gmra.mrb[0].mxu0 %v1444
    %v1446 = vpop.f32.mrb[0].mxu0
    %v1447 = vadd.f32 0.0, %v1446
    %v1448 = vpop.f32.mrb[0].mxu0
    %1449 = vmatprep.mubr.f32.mxu0 0.0
    %v1450 = vand.u32 %v725, 4294901760
    %v1451 = vsub.f32 %v725, %v1450
    %v1452 = vand.u32 %v1451, 4294901760
    %v1453 = vsub.f32 %v1451, %v1452
    %v1454 = vand.u32 %v1453, 4294901760
    %1455 = vmatmul.mubr.f32.gmra.mrb[0].mxu0 %v1454
    %v1456 = vpop.f32.mrb[0].mxu0
    %v1457 = vadd.f32 0.0, %v1456
    %v1458 = vpop.f32.mrb[0].mxu0
    %1459 = vdwg.mxu0
    %1460 = vmatprep.subr.mxu0 0.0
    %v1461 = vand.u32 %v1367, 4294901760
    %v1462 = vsub.f32 %v1367, %v1461
    %v1463 = vand.u32 %v1462, 4294901760
    %v1464 = vsub.f32 %v1462, %v1463
    %v1465 = vand.u32 %v1464, 4294901760
    %1466 = vmatpush1.msra.mxu0 %v1465
    %1467 = vmatprep.subr.mxu0 0.0
    %v1468 = vand.u32 %v1368, 4294901760
    %v1469 = vsub.f32 %v1368, %v1468
    %v1470 = vand.u32 %v1469, 4294901760
    %v1471 = vsub.f32 %v1469, %v1470
    %v1472 = vand.u32 %v1471, 4294901760
    %1473 = vmatpush1.msra.mxu0 %v1472
    %1474 = vmatprep.subr.mxu0 0.0
    %v1475 = vand.u32 %v1369, 4294901760
    %v1476 = vsub.f32 %v1369, %v1475
    %v1477 = vand.u32 %v1476, 4294901760
    %v1478 = vsub.f32 %v1476, %v1477
    %v1479 = vand.u32 %v1478, 4294901760
    %1480 = vmatpush1.msra.mxu0 %v1479
    %1481 = vmatprep.subr.mxu0 0.0
    %v1482 = vand.u32 %v1370, 4294901760
    %v1483 = vsub.f32 %v1370, %v1482
    %v1484 = vand.u32 %v1483, 4294901760
    %v1485 = vsub.f32 %v1483, %v1484
    %v1486 = vand.u32 %v1485, 4294901760
    %1487 = vmatpush1.msra.mxu0 %v1486
    %1488 = vmatprep.subr.mxu0 0.0
    %1489 = vmatpush1.msra.mxu0 0.0
    %1490 = vmatprep.subr.mxu0 0.0
    %1491 = vmatpush1.msra.mxu0 0.0
    %1492 = vmatprep.subr.mxu0 0.0
    %1493 = vmatpush1.msra.mxu0 0.0
    %1494 = vmatprep.subr.mxu0 0.0
    %1495 = vmatpush1.msra.mxu0 0.0
    %1496 = vmatprep.subr.mxu0 0.0
    %1497 = vmatpush1.msra.mxu0 0.0
    %1498 = vmatprep.subr.mxu0 0.0
    %1499 = vmatpush1.msra.mxu0 0.0
    %1500 = vmatprep.subr.mxu0 0.0
    %1501 = vmatpush1.msra.mxu0 0.0
    %1502 = vmatprep.subr.mxu0 0.0
    %1503 = vmatpush1.msra.mxu0 0.0
    %1504 = vmatprep.subr.mxu0 0.0
    %1505 = vmatpush1.msra.mxu0 0.0
    %1506 = vmatprep.subr.mxu0 0.0
    %1507 = vmatpush1.msra.mxu0 0.0
    %1508 = vmatprep.subr.mxu0 0.0
    %1509 = vmatpush1.msra.mxu0 0.0
    %1510 = vmatprep.subr.mxu0 0.0
    %1511 = vmatpush1.msra.mxu0 0.0
    %1512 = vmatprep.subr.mxu0 0.0
    %1513 = vmatpush1.msra.mxu0 0.0
    %1514 = vmatprep.subr.mxu0 0.0
    %1515 = vmatpush1.msra.mxu0 0.0
    %1516 = vmatprep.subr.mxu0 0.0
    %1517 = vmatpush1.msra.mxu0 0.0
    %1518 = vmatprep.subr.mxu0 0.0
    %1519 = vmatpush1.msra.mxu0 0.0
    %1520 = vmatprep.subr.mxu0 0.0
    %1521 = vmatpush1.msra.mxu0 0.0
    %1522 = vmatprep.subr.mxu0 0.0
    %1523 = vmatpush1.msra.mxu0 0.0
    %1524 = vmatprep.subr.mxu0 0.0
    %1525 = vmatpush1.msra.mxu0 0.0
    %1526 = vmatprep.subr.mxu0 0.0
    %1527 = vmatpush1.msra.mxu0 0.0
    %1528 = vmatprep.subr.mxu0 0.0
    %1529 = vmatpush1.msra.mxu0 0.0
    %1530 = vmatprep.subr.mxu0 0.0
    %1531 = vmatpush1.msra.mxu0 0.0
    %1532 = vmatprep.subr.mxu0 0.0
    %1533 = vmatpush1.msra.mxu0 0.0
    %1534 = vmatprep.subr.mxu0 0.0
    %1535 = vmatpush1.msra.mxu0 0.0
    %1536 = vmatprep.subr.mxu0 0.0
    %1537 = vmatpush1.msra.mxu0 0.0
    %1538 = vmatprep.subr.mxu0 0.0
    %1539 = vmatpush1.msra.mxu0 0.0
    %1540 = vmatprep.subr.mxu0 0.0
    %1541 = vmatpush1.msra.mxu0 0.0
    %1542 = vmatprep.subr.mxu0 0.0
    %1543 = vmatpush1.msra.mxu0 0.0
    %1544 = vmatprep.mubr.f32.mxu0 0.0
    %v1545 = vand.u32 %v722, 4294901760
    %1546 = vmatmul.mubr.f32.gmra.mrb[0].mxu0 %v1545
    %v1547 = vpop.f32.mrb[0].mxu0
    %v1548 = vadd.f32 %v1447, %v1547
    %v1549 = vpop.f32.mrb[0].mxu0
    %1550 = vmatprep.mubr.f32.mxu0 0.0
    %v1551 = vand.u32 %v725, 4294901760
    %1552 = vmatmul.mubr.f32.gmra.mrb[0].mxu0 %v1551
    %v1553 = vpop.f32.mrb[0].mxu0
    %v1554 = vadd.f32 %v1457, %v1553
    %v1555 = vpop.f32.mrb[0].mxu0
    %1556 = vdwg.mxu0
    %1557 = vmatprep.subr.mxu0 0.0
    %v1558 = vand.u32 %v1367, 4294901760
    %v1559 = vsub.f32 %v1367, %v1558
    %1560 = vmatpush1.msra.mxu0 %v1559
    %1561 = vmatprep.subr.mxu0 0.0
    %v1562 = vand.u32 %v1368, 4294901760
    %v1563 = vsub.f32 %v1368, %v1562
    %1564 = vmatpush1.msra.mxu0 %v1563
    %1565 = vmatprep.subr.mxu0 0.0
    %v1566 = vand.u32 %v1369, 4294901760
    %v1567 = vsub.f32 %v1369, %v1566
    %1568 = vmatpush1.msra.mxu0 %v1567
    %1569 = vmatprep.subr.mxu0 0.0
    %v1570 = vand.u32 %v1370, 4294901760
    %v1571 = vsub.f32 %v1370, %v1570
    %1572 = vmatpush1.msra.mxu0 %v1571
    %1573 = vmatprep.subr.mxu0 0.0
    %1574 = vmatpush1.msra.mxu0 0.0
    %1575 = vmatprep.subr.mxu0 0.0
    %1576 = vmatpush1.msra.mxu0 0.0
    %1577 = vmatprep.subr.mxu0 0.0
    %1578 = vmatpush1.msra.mxu0 0.0
    %1579 = vmatprep.subr.mxu0 0.0
    %1580 = vmatpush1.msra.mxu0 0.0
    %1581 = vmatprep.subr.mxu0 0.0
    %1582 = vmatpush1.msra.mxu0 0.0
    %1583 = vmatprep.subr.mxu0 0.0
    %1584 = vmatpush1.msra.mxu0 0.0
    %1585 = vmatprep.subr.mxu0 0.0
    %1586 = vmatpush1.msra.mxu0 0.0
    %1587 = vmatprep.subr.mxu0 0.0
    %1588 = vmatpush1.msra.mxu0 0.0
    %1589 = vmatprep.subr.mxu0 0.0
    %1590 = vmatpush1.msra.mxu0 0.0
    %1591 = vmatprep.subr.mxu0 0.0
    %1592 = vmatpush1.msra.mxu0 0.0
    %1593 = vmatprep.subr.mxu0 0.0
    %1594 = vmatpush1.msra.mxu0 0.0
    %1595 = vmatprep.subr.mxu0 0.0
    %1596 = vmatpush1.msra.mxu0 0.0
    %1597 = vmatprep.subr.mxu0 0.0
    %1598 = vmatpush1.msra.mxu0 0.0
    %1599 = vmatprep.subr.mxu0 0.0
    %1600 = vmatpush1.msra.mxu0 0.0
    %1601 = vmatprep.subr.mxu0 0.0
    %1602 = vmatpush1.msra.mxu0 0.0
    %1603 = vmatprep.subr.mxu0 0.0
    %1604 = vmatpush1.msra.mxu0 0.0
    %1605 = vmatprep.subr.mxu0 0.0
    %1606 = vmatpush1.msra.mxu0 0.0
    %1607 = vmatprep.subr.mxu0 0.0
    %1608 = vmatpush1.msra.mxu0 0.0
    %1609 = vmatprep.subr.mxu0 0.0
    %1610 = vmatpush1.msra.mxu0 0.0
    %1611 = vmatprep.subr.mxu0 0.0
    %1612 = vmatpush1.msra.mxu0 0.0
    %1613 = vmatprep.subr.mxu0 0.0
    %1614 = vmatpush1.msra.mxu0 0.0
    %1615 = vmatprep.subr.mxu0 0.0
    %1616 = vmatpush1.msra.mxu0 0.0
    %1617 = vmatprep.subr.mxu0 0.0
    %1618 = vmatpush1.msra.mxu0 0.0
    %1619 = vmatprep.subr.mxu0 0.0
    %1620 = vmatpush1.msra.mxu0 0.0
    %1621 = vmatprep.subr.mxu0 0.0
    %1622 = vmatpush1.msra.mxu0 0.0
    %1623 = vmatprep.subr.mxu0 0.0
    %1624 = vmatpush1.msra.mxu0 0.0
    %1625 = vmatprep.subr.mxu0 0.0
    %1626 = vmatpush1.msra.mxu0 0.0
    %1627 = vmatprep.subr.mxu0 0.0
    %1628 = vmatpush1.msra.mxu0 0.0
    %1629 = vmatprep.mubr.f32.mxu0 0.0
    %v1630 = vand.u32 %v722, 4294901760
    %v1631 = vsub.f32 %v722, %v1630
    %1632 = vmatmul.mubr.f32.gmra.mrb[0].mxu0 %v1631
    %v1633 = vpop.f32.mrb[0].mxu0
    %v1634 = vadd.f32 %v1548, %v1633
    %v1635 = vpop.f32.mrb[0].mxu0
    %1636 = vmatprep.mubr.f32.mxu0 0.0
    %v1637 = vand.u32 %v725, 4294901760
    %v1638 = vsub.f32 %v725, %v1637
    %1639 = vmatmul.mubr.f32.gmra.mrb[0].mxu0 %v1638
    %v1640 = vpop.f32.mrb[0].mxu0
    %v1641 = vadd.f32 %v1554, %v1640
    %v1642 = vpop.f32.mrb[0].mxu0
    %1643 = vdwg.mxu0
    %1644 = vmatprep.subr.mxu0 0.0
    %v1645 = vand.u32 %v1367, 4294901760
    %1646 = vmatpush1.msra.mxu0 %v1645
    %1647 = vmatprep.subr.mxu0 0.0
    %v1648 = vand.u32 %v1368, 4294901760
    %1649 = vmatpush1.msra.mxu0 %v1648
    %1650 = vmatprep.subr.mxu0 0.0
    %v1651 = vand.u32 %v1369, 4294901760
    %1652 = vmatpush1.msra.mxu0 %v1651
    %1653 = vmatprep.subr.mxu0 0.0
    %v1654 = vand.u32 %v1370, 4294901760
    %1655 = vmatpush1.msra.mxu0 %v1654
    %1656 = vmatprep.subr.mxu0 0.0
    %1657 = vmatpush1.msra.mxu0 0.0
    %1658 = vmatprep.subr.mxu0 0.0
    %1659 = vmatpush1.msra.mxu0 0.0
    %1660 = vmatprep.subr.mxu0 0.0
    %1661 = vmatpush1.msra.mxu0 0.0
    %1662 = vmatprep.subr.mxu0 0.0
    %1663 = vmatpush1.msra.mxu0 0.0
    %1664 = vmatprep.subr.mxu0 0.0
    %1665 = vmatpush1.msra.mxu0 0.0
    %1666 = vmatprep.subr.mxu0 0.0
    %1667 = vmatpush1.msra.mxu0 0.0
    %1668 = vmatprep.subr.mxu0 0.0
    %1669 = vmatpush1.msra.mxu0 0.0
    %1670 = vmatprep.subr.mxu0 0.0
    %1671 = vmatpush1.msra.mxu0 0.0
    %1672 = vmatprep.subr.mxu0 0.0
    %1673 = vmatpush1.msra.mxu0 0.0
    %1674 = vmatprep.subr.mxu0 0.0
    %1675 = vmatpush1.msra.mxu0 0.0
    %1676 = vmatprep.subr.mxu0 0.0
    %1677 = vmatpush1.msra.mxu0 0.0
    %1678 = vmatprep.subr.mxu0 0.0
    %1679 = vmatpush1.msra.mxu0 0.0
    %1680 = vmatprep.subr.mxu0 0.0
    %1681 = vmatpush1.msra.mxu0 0.0
    %1682 = vmatprep.subr.mxu0 0.0
    %1683 = vmatpush1.msra.mxu0 0.0
    %1684 = vmatprep.subr.mxu0 0.0
    %1685 = vmatpush1.msra.mxu0 0.0
    %1686 = vmatprep.subr.mxu0 0.0
    %1687 = vmatpush1.msra.mxu0 0.0
    %1688 = vmatprep.subr.mxu0 0.0
    %1689 = vmatpush1.msra.mxu0 0.0
    %1690 = vmatprep.subr.mxu0 0.0
    %1691 = vmatpush1.msra.mxu0 0.0
    %1692 = vmatprep.subr.mxu0 0.0
    %1693 = vmatpush1.msra.mxu0 0.0
    %1694 = vmatprep.subr.mxu0 0.0
    %1695 = vmatpush1.msra.mxu0 0.0
    %1696 = vmatprep.subr.mxu0 0.0
    %1697 = vmatpush1.msra.mxu0 0.0
    %1698 = vmatprep.subr.mxu0 0.0
    %1699 = vmatpush1.msra.mxu0 0.0
    %1700 = vmatprep.subr.mxu0 0.0
    %1701 = vmatpush1.msra.mxu0 0.0
    %1702 = vmatprep.subr.mxu0 0.0
    %1703 = vmatpush1.msra.mxu0 0.0
    %1704 = vmatprep.subr.mxu0 0.0
    %1705 = vmatpush1.msra.mxu0 0.0
    %1706 = vmatprep.subr.mxu0 0.0
    %1707 = vmatpush1.msra.mxu0 0.0
    %1708 = vmatprep.subr.mxu0 0.0
    %1709 = vmatpush1.msra.mxu0 0.0
    %1710 = vmatprep.subr.mxu0 0.0
    %1711 = vmatpush1.msra.mxu0 0.0
    %1712 = vmatprep.mubr.f32.mxu0 0.0
    %v1713 = vand.u32 %v722, 4294901760
    %v1714 = vsub.f32 %v722, %v1713
    %v1715 = vand.u32 %v1714, 4294901760
    %1716 = vmatmul.mubr.f32.gmra.mrb[0].mxu0 %v1715
    %v1717 = vpop.f32.mrb[0].mxu0
    %v1718 = vadd.f32 %v1634, %v1717
    %v1719 = vpop.f32.mrb[0].mxu0
    %1720 = vmatprep.mubr.f32.mxu0 0.0
    %v1721 = vand.u32 %v725, 4294901760
    %v1722 = vsub.f32 %v725, %v1721
    %v1723 = vand.u32 %v1722, 4294901760
    %1724 = vmatmul.mubr.f32.gmra.mrb[0].mxu0 %v1723
    %v1725 = vpop.f32.mrb[0].mxu0
    %v1726 = vadd.f32 %v1641, %v1725
    %v1727 = vpop.f32.mrb[0].mxu0
    %1728 = vdwg.mxu0
    %1729 = vmatprep.subr.mxu0 0.0
    %v1730 = vand.u32 %v1367, 4294901760
    %v1731 = vsub.f32 %v1367, %v1730
    %v1732 = vand.u32 %v1731, 4294901760
    %1733 = vmatpush1.msra.mxu0 %v1732
    %1734 = vmatprep.subr.mxu0 0.0
    %v1735 = vand.u32 %v1368, 4294901760
    %v1736 = vsub.f32 %v1368, %v1735
    %v1737 = vand.u32 %v1736, 4294901760
    %1738 = vmatpush1.msra.mxu0 %v1737
    %1739 = vmatprep.subr.mxu0 0.0
    %v1740 = vand.u32 %v1369, 4294901760
    %v1741 = vsub.f32 %v1369, %v1740
    %v1742 = vand.u32 %v1741, 4294901760
    %1743 = vmatpush1.msra.mxu0 %v1742
    %1744 = vmatprep.subr.mxu0 0.0
    %v1745 = vand.u32 %v1370, 4294901760
    %v1746 = vsub.f32 %v1370, %v1745
    %v1747 = vand.u32 %v1746, 4294901760
    %1748 = vmatpush1.msra.mxu0 %v1747
    %1749 = vmatprep.subr.mxu0 0.0
    %1750 = vmatpush1.msra.mxu0 0.0
    %1751 = vmatprep.subr.mxu0 0.0
    %1752 = vmatpush1.msra.mxu0 0.0
    %1753 = vmatprep.subr.mxu0 0.0
    %1754 = vmatpush1.msra.mxu0 0.0
    %1755 = vmatprep.subr.mxu0 0.0
    %1756 = vmatpush1.msra.mxu0 0.0
    %1757 = vmatprep.subr.mxu0 0.0
    %1758 = vmatpush1.msra.mxu0 0.0
    %1759 = vmatprep.subr.mxu0 0.0
    %1760 = vmatpush1.msra.mxu0 0.0
    %1761 = vmatprep.subr.mxu0 0.0
    %1762 = vmatpush1.msra.mxu0 0.0
    %1763 = vmatprep.subr.mxu0 0.0
    %1764 = vmatpush1.msra.mxu0 0.0
    %1765 = vmatprep.subr.mxu0 0.0
    %1766 = vmatpush1.msra.mxu0 0.0
    %1767 = vmatprep.subr.mxu0 0.0
    %1768 = vmatpush1.msra.mxu0 0.0
    %1769 = vmatprep.subr.mxu0 0.0
    %1770 = vmatpush1.msra.mxu0 0.0
    %1771 = vmatprep.subr.mxu0 0.0
    %1772 = vmatpush1.msra.mxu0 0.0
    %1773 = vmatprep.subr.mxu0 0.0
    %1774 = vmatpush1.msra.mxu0 0.0
    %1775 = vmatprep.subr.mxu0 0.0
    %1776 = vmatpush1.msra.mxu0 0.0
    %1777 = vmatprep.subr.mxu0 0.0
    %1778 = vmatpush1.msra.mxu0 0.0
    %1779 = vmatprep.subr.mxu0 0.0
    %1780 = vmatpush1.msra.mxu0 0.0
    %1781 = vmatprep.subr.mxu0 0.0
    %1782 = vmatpush1.msra.mxu0 0.0
    %1783 = vmatprep.subr.mxu0 0.0
    %1784 = vmatpush1.msra.mxu0 0.0
    %1785 = vmatprep.subr.mxu0 0.0
    %1786 = vmatpush1.msra.mxu0 0.0
    %1787 = vmatprep.subr.mxu0 0.0
    %1788 = vmatpush1.msra.mxu0 0.0
    %1789 = vmatprep.subr.mxu0 0.0
    %1790 = vmatpush1.msra.mxu0 0.0
    %1791 = vmatprep.subr.mxu0 0.0
    %1792 = vmatpush1.msra.mxu0 0.0
    %1793 = vmatprep.subr.mxu0 0.0
    %1794 = vmatpush1.msra.mxu0 0.0
    %1795 = vmatprep.subr.mxu0 0.0
    %1796 = vmatpush1.msra.mxu0 0.0
    %1797 = vmatprep.subr.mxu0 0.0
    %1798 = vmatpush1.msra.mxu0 0.0
    %1799 = vmatprep.subr.mxu0 0.0
    %1800 = vmatpush1.msra.mxu0 0.0
    %1801 = vmatprep.subr.mxu0 0.0
    %1802 = vmatpush1.msra.mxu0 0.0
    %1803 = vmatprep.subr.mxu0 0.0
    %1804 = vmatpush1.msra.mxu0 0.0
    %1805 = vmatprep.mubr.f32.mxu0 0.0
    %v1806 = vand.u32 %v722, 4294901760
    %1807 = vmatmul.mubr.f32.gmra.mrb[0].mxu0 %v1806
    %v1808 = vpop.f32.mrb[0].mxu0
    %v1809 = vadd.f32 %v1718, %v1808
    %v1810 = vpop.f32.mrb[0].mxu0
    %1811 = vmatprep.mubr.f32.mxu0 0.0
    %v1812 = vand.u32 %v725, 4294901760
    %1813 = vmatmul.mubr.f32.gmra.mrb[0].mxu0 %v1812
    %v1814 = vpop.f32.mrb[0].mxu0
    %v1815 = vadd.f32 %v1726, %v1814
    %v1816 = vpop.f32.mrb[0].mxu0
    %1817 = vdwg.mxu0
    %1818 = vmatprep.subr.mxu0 0.0
    %v1819 = vand.u32 %v1367, 4294901760
    %1820 = vmatpush1.msra.mxu0 %v1819
    %1821 = vmatprep.subr.mxu0 0.0
    %v1822 = vand.u32 %v1368, 4294901760
    %1823 = vmatpush1.msra.mxu0 %v1822
    %1824 = vmatprep.subr.mxu0 0.0
    %v1825 = vand.u32 %v1369, 4294901760
    %1826 = vmatpush1.msra.mxu0 %v1825
    %1827 = vmatprep.subr.mxu0 0.0
    %v1828 = vand.u32 %v1370, 4294901760
    %1829 = vmatpush1.msra.mxu0 %v1828
    %1830 = vmatprep.subr.mxu0 0.0
    %1831 = vmatpush1.msra.mxu0 0.0
    %1832 = vmatprep.subr.mxu0 0.0
    %1833 = vmatpush1.msra.mxu0 0.0
    %1834 = vmatprep.subr.mxu0 0.0
    %1835 = vmatpush1.msra.mxu0 0.0
    %1836 = vmatprep.subr.mxu0 0.0
    %1837 = vmatpush1.msra.mxu0 0.0
    %1838 = vmatprep.subr.mxu0 0.0
    %1839 = vmatpush1.msra.mxu0 0.0
    %1840 = vmatprep.subr.mxu0 0.0
    %1841 = vmatpush1.msra.mxu0 0.0
    %1842 = vmatprep.subr.mxu0 0.0
    %1843 = vmatpush1.msra.mxu0 0.0
    %1844 = vmatprep.subr.mxu0 0.0
    %1845 = vmatpush1.msra.mxu0 0.0
    %1846 = vmatprep.subr.mxu0 0.0
    %1847 = vmatpush1.msra.mxu0 0.0
    %1848 = vmatprep.subr.mxu0 0.0
    %1849 = vmatpush1.msra.mxu0 0.0
    %1850 = vmatprep.subr.mxu0 0.0
    %1851 = vmatpush1.msra.mxu0 0.0
    %1852 = vmatprep.subr.mxu0 0.0
    %1853 = vmatpush1.msra.mxu0 0.0
    %1854 = vmatprep.subr.mxu0 0.0
    %1855 = vmatpush1.msra.mxu0 0.0
    %1856 = vmatprep.subr.mxu0 0.0
    %1857 = vmatpush1.msra.mxu0 0.0
    %1858 = vmatprep.subr.mxu0 0.0
    %1859 = vmatpush1.msra.mxu0 0.0
    %1860 = vmatprep.subr.mxu0 0.0
    %1861 = vmatpush1.msra.mxu0 0.0
    %1862 = vmatprep.subr.mxu0 0.0
    %1863 = vmatpush1.msra.mxu0 0.0
    %1864 = vmatprep.subr.mxu0 0.0
    %1865 = vmatpush1.msra.mxu0 0.0
    %1866 = vmatprep.subr.mxu0 0.0
    %1867 = vmatpush1.msra.mxu0 0.0
    %1868 = vmatprep.subr.mxu0 0.0
    %1869 = vmatpush1.msra.mxu0 0.0
    %1870 = vmatprep.subr.mxu0 0.0
    %1871 = vmatpush1.msra.mxu0 0.0
    %1872 = vmatprep.subr.mxu0 0.0
    %1873 = vmatpush1.msra.mxu0 0.0
    %1874 = vmatprep.subr.mxu0 0.0
    %1875 = vmatpush1.msra.mxu0 0.0
    %1876 = vmatprep.subr.mxu0 0.0
    %1877 = vmatpush1.msra.mxu0 0.0
    %1878 = vmatprep.subr.mxu0 0.0
    %1879 = vmatpush1.msra.mxu0 0.0
    %1880 = vmatprep.subr.mxu0 0.0
    %1881 = vmatpush1.msra.mxu0 0.0
    %1882 = vmatprep.subr.mxu0 0.0
    %1883 = vmatpush1.msra.mxu0 0.0
    %1884 = vmatprep.subr.mxu0 0.0
    %1885 = vmatpush1.msra.mxu0 0.0
    %1886 = vmatprep.mubr.f32.mxu0 0.0
    %v1887 = vand.u32 %v722, 4294901760
    %1888 = vmatmul.mubr.f32.gmra.mrb[0].mxu0 %v1887
    %v1889 = vpop.f32.mrb[0].mxu0
    %v1890 = vadd.f32 %v1809, %v1889
    %v1891 = vpop.f32.mrb[0].mxu0
    %1892 = vmatprep.mubr.f32.mxu0 0.0
    %v1893 = vand.u32 %v725, 4294901760
    %1894 = vmatmul.mubr.f32.gmra.mrb[0].mxu0 %v1893
    %v1895 = vpop.f32.mrb[0].mxu0
    %v1896 = vadd.f32 %v1815, %v1895
    %v1897 = vpop.f32.mrb[0].mxu0
    %1898 = vdwg.mxu0
    %1899 = vst.msk [vmem:[#allocation2] sm:$0xff] %vm122, %v1890
    %1900 = vst.msk [vmem:[#allocation2 + $0x8] sm:$0xff] %vm122, %v1896
    %v1901 = vld [vmem:[%s12] sm:$0xff]
    %v1902 = vld [vmem:[%s12 + $0x8] sm:$0xff]
    %v1903 = vld [vmem:[%s12 + $0x10] sm:$0xff]
    %v1904 = vld [vmem:[%s12 + $0x18] sm:$0xff]
    %1905 = vmatprep.subr.mxu0 0.0
    %v1906 = vand.u32 %v1901, 4294901760
    %1907 = vmatpush1.msra.mxu0 %v1906
    %1908 = vmatprep.subr.mxu0 0.0
    %v1909 = vand.u32 %v1902, 4294901760
    %1910 = vmatpush1.msra.mxu0 %v1909
    %1911 = vmatprep.subr.mxu0 0.0
    %v1912 = vand.u32 %v1903, 4294901760
    %1913 = vmatpush1.msra.mxu0 %v1912
    %1914 = vmatprep.subr.mxu0 0.0
    %v1915 = vand.u32 %v1904, 4294901760
    %1916 = vmatpush1.msra.mxu0 %v1915
    %1917 = vmatprep.subr.mxu0 0.0
    %1918 = vmatpush1.msra.mxu0 0.0
    %1919 = vmatprep.subr.mxu0 0.0
    %1920 = vmatpush1.msra.mxu0 0.0
    %1921 = vmatprep.subr.mxu0 0.0
    %1922 = vmatpush1.msra.mxu0 0.0
    %1923 = vmatprep.subr.mxu0 0.0
    %1924 = vmatpush1.msra.mxu0 0.0
    %1925 = vmatprep.subr.mxu0 0.0
    %1926 = vmatpush1.msra.mxu0 0.0
    %1927 = vmatprep.subr.mxu0 0.0
    %1928 = vmatpush1.msra.mxu0 0.0
    %1929 = vmatprep.subr.mxu0 0.0
    %1930 = vmatpush1.msra.mxu0 0.0
    %1931 = vmatprep.subr.mxu0 0.0
    %1932 = vmatpush1.msra.mxu0 0.0
    %1933 = vmatprep.subr.mxu0 0.0
    %1934 = vmatpush1.msra.mxu0 0.0
    %1935 = vmatprep.subr.mxu0 0.0
    %1936 = vmatpush1.msra.mxu0 0.0
    %1937 = vmatprep.subr.mxu0 0.0
    %1938 = vmatpush1.msra.mxu0 0.0
    %1939 = vmatprep.subr.mxu0 0.0
    %1940 = vmatpush1.msra.mxu0 0.0
    %1941 = vmatprep.subr.mxu0 0.0
    %1942 = vmatpush1.msra.mxu0 0.0
    %1943 = vmatprep.subr.mxu0 0.0
    %1944 = vmatpush1.msra.mxu0 0.0
    %1945 = vmatprep.subr.mxu0 0.0
    %1946 = vmatpush1.msra.mxu0 0.0
    %1947 = vmatprep.subr.mxu0 0.0
    %1948 = vmatpush1.msra.mxu0 0.0
    %1949 = vmatprep.subr.mxu0 0.0
    %1950 = vmatpush1.msra.mxu0 0.0
    %1951 = vmatprep.subr.mxu0 0.0
    %1952 = vmatpush1.msra.mxu0 0.0
    %1953 = vmatprep.subr.mxu0 0.0
    %1954 = vmatpush1.msra.mxu0 0.0
    %1955 = vmatprep.subr.mxu0 0.0
    %1956 = vmatpush1.msra.mxu0 0.0
    %1957 = vmatprep.subr.mxu0 0.0
    %1958 = vmatpush1.msra.mxu0 0.0
    %1959 = vmatprep.subr.mxu0 0.0
    %1960 = vmatpush1.msra.mxu0 0.0
    %1961 = vmatprep.subr.mxu0 0.0
    %1962 = vmatpush1.msra.mxu0 0.0
    %1963 = vmatprep.subr.mxu0 0.0
    %1964 = vmatpush1.msra.mxu0 0.0
    %1965 = vmatprep.subr.mxu0 0.0
    %1966 = vmatpush1.msra.mxu0 0.0
    %1967 = vmatprep.subr.mxu0 0.0
    %1968 = vmatpush1.msra.mxu0 0.0
    %1969 = vmatprep.subr.mxu0 0.0
    %1970 = vmatpush1.msra.mxu0 0.0
    %1971 = vmatprep.subr.mxu0 0.0
    %1972 = vmatpush1.msra.mxu0 0.0
    %1973 = vmatprep.mubr.f32.mxu0 0.0
    %v1974 = vand.u32 %v722, 4294901760
    %v1975 = vsub.f32 %v722, %v1974
    %v1976 = vand.u32 %v1975, 4294901760
    %v1977 = vsub.f32 %v1975, %v1976
    %v1978 = vand.u32 %v1977, 4294901760
    %1979 = vmatmul.mubr.f32.gmra.mrb[0].mxu0 %v1978
    %v1980 = vpop.f32.mrb[0].mxu0
    %v1981 = vadd.f32 0.0, %v1980
    %v1982 = vpop.f32.mrb[0].mxu0
    %1983 = vmatprep.mubr.f32.mxu0 0.0
    %v1984 = vand.u32 %v725, 4294901760
    %v1985 = vsub.f32 %v725, %v1984
    %v1986 = vand.u32 %v1985, 4294901760
    %v1987 = vsub.f32 %v1985, %v1986
    %v1988 = vand.u32 %v1987, 4294901760
    %1989 = vmatmul.mubr.f32.gmra.mrb[0].mxu0 %v1988
    %v1990 = vpop.f32.mrb[0].mxu0
    %v1991 = vadd.f32 0.0, %v1990
    %v1992 = vpop.f32.mrb[0].mxu0
    %1993 = vdwg.mxu0
    %1994 = vmatprep.subr.mxu0 0.0
    %v1995 = vand.u32 %v1901, 4294901760
    %v1996 = vsub.f32 %v1901, %v1995
    %v1997 = vand.u32 %v1996, 4294901760
    %v1998 = vsub.f32 %v1996, %v1997
    %v1999 = vand.u32 %v1998, 4294901760
    %2000 = vmatpush1.msra.mxu0 %v1999
    %2001 = vmatprep.subr.mxu0 0.0
    %v2002 = vand.u32 %v1902, 4294901760
    %v2003 = vsub.f32 %v1902, %v2002
    %v2004 = vand.u32 %v2003, 4294901760
    %v2005 = vsub.f32 %v2003, %v2004
    %v2006 = vand.u32 %v2005, 4294901760
    %2007 = vmatpush1.msra.mxu0 %v2006
    %2008 = vmatprep.subr.mxu0 0.0
    %v2009 = vand.u32 %v1903, 4294901760
    %v2010 = vsub.f32 %v1903, %v2009
    %v2011 = vand.u32 %v2010, 4294901760
    %v2012 = vsub.f32 %v2010, %v2011
    %v2013 = vand.u32 %v2012, 4294901760
    %2014 = vmatpush1.msra.mxu0 %v2013
    %2015 = vmatprep.subr.mxu0 0.0
    %v2016 = vand.u32 %v1904, 4294901760
    %v2017 = vsub.f32 %v1904, %v2016
    %v2018 = vand.u32 %v2017, 4294901760
    %v2019 = vsub.f32 %v2017, %v2018
    %v2020 = vand.u32 %v2019, 4294901760
    %2021 = vmatpush1.msra.mxu0 %v2020
    %2022 = vmatprep.subr.mxu0 0.0
    %2023 = vmatpush1.msra.mxu0 0.0
    %2024 = vmatprep.subr.mxu0 0.0
    %2025 = vmatpush1.msra.mxu0 0.0
    %2026 = vmatprep.subr.mxu0 0.0
    %2027 = vmatpush1.msra.mxu0 0.0
    %2028 = vmatprep.subr.mxu0 0.0
    %2029 = vmatpush1.msra.mxu0 0.0
    %2030 = vmatprep.subr.mxu0 0.0
    %2031 = vmatpush1.msra.mxu0 0.0
    %2032 = vmatprep.subr.mxu0 0.0
    %2033 = vmatpush1.msra.mxu0 0.0
    %2034 = vmatprep.subr.mxu0 0.0
    %2035 = vmatpush1.msra.mxu0 0.0
    %2036 = vmatprep.subr.mxu0 0.0
    %2037 = vmatpush1.msra.mxu0 0.0
    %2038 = vmatprep.subr.mxu0 0.0
    %2039 = vmatpush1.msra.mxu0 0.0
    %2040 = vmatprep.subr.mxu0 0.0
    %2041 = vmatpush1.msra.mxu0 0.0
    %2042 = vmatprep.subr.mxu0 0.0
    %2043 = vmatpush1.msra.mxu0 0.0
    %2044 = vmatprep.subr.mxu0 0.0
    %2045 = vmatpush1.msra.mxu0 0.0
    %2046 = vmatprep.subr.mxu0 0.0
    %2047 = vmatpush1.msra.mxu0 0.0
    %2048 = vmatprep.subr.mxu0 0.0
    %2049 = vmatpush1.msra.mxu0 0.0
    %2050 = vmatprep.subr.mxu0 0.0
    %2051 = vmatpush1.msra.mxu0 0.0
    %2052 = vmatprep.subr.mxu0 0.0
    %2053 = vmatpush1.msra.mxu0 0.0
    %2054 = vmatprep.subr.mxu0 0.0
    %2055 = vmatpush1.msra.mxu0 0.0
    %2056 = vmatprep.subr.mxu0 0.0
    %2057 = vmatpush1.msra.mxu0 0.0
    %2058 = vmatprep.subr.mxu0 0.0
    %2059 = vmatpush1.msra.mxu0 0.0
    %2060 = vmatprep.subr.mxu0 0.0
    %2061 = vmatpush1.msra.mxu0 0.0
    %2062 = vmatprep.subr.mxu0 0.0
    %2063 = vmatpush1.msra.mxu0 0.0
    %2064 = vmatprep.subr.mxu0 0.0
    %2065 = vmatpush1.msra.mxu0 0.0
    %2066 = vmatprep.subr.mxu0 0.0
    %2067 = vmatpush1.msra.mxu0 0.0
    %2068 = vmatprep.subr.mxu0 0.0
    %2069 = vmatpush1.msra.mxu0 0.0
    %2070 = vmatprep.subr.mxu0 0.0
    %2071 = vmatpush1.msra.mxu0 0.0
    %2072 = vmatprep.subr.mxu0 0.0
    %2073 = vmatpush1.msra.mxu0 0.0
    %2074 = vmatprep.subr.mxu0 0.0
    %2075 = vmatpush1.msra.mxu0 0.0
    %2076 = vmatprep.subr.mxu0 0.0
    %2077 = vmatpush1.msra.mxu0 0.0
    %2078 = vmatprep.mubr.f32.mxu0 0.0
    %v2079 = vand.u32 %v722, 4294901760
    %2080 = vmatmul.mubr.f32.gmra.mrb[0].mxu0 %v2079
    %v2081 = vpop.f32.mrb[0].mxu0
    %v2082 = vadd.f32 %v1981, %v2081
    %v2083 = vpop.f32.mrb[0].mxu0
    %2084 = vmatprep.mubr.f32.mxu0 0.0
    %v2085 = vand.u32 %v725, 4294901760
    %2086 = vmatmul.mubr.f32.gmra.mrb[0].mxu0 %v2085
    %v2087 = vpop.f32.mrb[0].mxu0
    %v2088 = vadd.f32 %v1991, %v2087
    %v2089 = vpop.f32.mrb[0].mxu0
    %2090 = vdwg.mxu0
    %2091 = vmatprep.subr.mxu0 0.0
    %v2092 = vand.u32 %v1901, 4294901760
    %v2093 = vsub.f32 %v1901, %v2092
    %2094 = vmatpush1.msra.mxu0 %v2093
    %2095 = vmatprep.subr.mxu0 0.0
    %v2096 = vand.u32 %v1902, 4294901760
    %v2097 = vsub.f32 %v1902, %v2096
    %2098 = vmatpush1.msra.mxu0 %v2097
    %2099 = vmatprep.subr.mxu0 0.0
    %v2100 = vand.u32 %v1903, 4294901760
    %v2101 = vsub.f32 %v1903, %v2100
    %2102 = vmatpush1.msra.mxu0 %v2101
    %2103 = vmatprep.subr.mxu0 0.0
    %v2104 = vand.u32 %v1904, 4294901760
    %v2105 = vsub.f32 %v1904, %v2104
    %2106 = vmatpush1.msra.mxu0 %v2105
    %2107 = vmatprep.subr.mxu0 0.0
    %2108 = vmatpush1.msra.mxu0 0.0
    %2109 = vmatprep.subr.mxu0 0.0
    %2110 = vmatpush1.msra.mxu0 0.0
    %2111 = vmatprep.subr.mxu0 0.0
    %2112 = vmatpush1.msra.mxu0 0.0
    %2113 = vmatprep.subr.mxu0 0.0
    %2114 = vmatpush1.msra.mxu0 0.0
    %2115 = vmatprep.subr.mxu0 0.0
    %2116 = vmatpush1.msra.mxu0 0.0
    %2117 = vmatprep.subr.mxu0 0.0
    %2118 = vmatpush1.msra.mxu0 0.0
    %2119 = vmatprep.subr.mxu0 0.0
    %2120 = vmatpush1.msra.mxu0 0.0
    %2121 = vmatprep.subr.mxu0 0.0
    %2122 = vmatpush1.msra.mxu0 0.0
    %2123 = vmatprep.subr.mxu0 0.0
    %2124 = vmatpush1.msra.mxu0 0.0
    %2125 = vmatprep.subr.mxu0 0.0
    %2126 = vmatpush1.msra.mxu0 0.0
    %2127 = vmatprep.subr.mxu0 0.0
    %2128 = vmatpush1.msra.mxu0 0.0
    %2129 = vmatprep.subr.mxu0 0.0
    %2130 = vmatpush1.msra.mxu0 0.0
    %2131 = vmatprep.subr.mxu0 0.0
    %2132 = vmatpush1.msra.mxu0 0.0
    %2133 = vmatprep.subr.mxu0 0.0
    %2134 = vmatpush1.msra.mxu0 0.0
    %2135 = vmatprep.subr.mxu0 0.0
    %2136 = vmatpush1.msra.mxu0 0.0
    %2137 = vmatprep.subr.mxu0 0.0
    %2138 = vmatpush1.msra.mxu0 0.0
    %2139 = vmatprep.subr.mxu0 0.0
    %2140 = vmatpush1.msra.mxu0 0.0
    %2141 = vmatprep.subr.mxu0 0.0
    %2142 = vmatpush1.msra.mxu0 0.0
    %2143 = vmatprep.subr.mxu0 0.0
    %2144 = vmatpush1.msra.mxu0 0.0
    %2145 = vmatprep.subr.mxu0 0.0
    %2146 = vmatpush1.msra.mxu0 0.0
    %2147 = vmatprep.subr.mxu0 0.0
    %2148 = vmatpush1.msra.mxu0 0.0
    %2149 = vmatprep.subr.mxu0 0.0
    %2150 = vmatpush1.msra.mxu0 0.0
    %2151 = vmatprep.subr.mxu0 0.0
    %2152 = vmatpush1.msra.mxu0 0.0
    %2153 = vmatprep.subr.mxu0 0.0
    %2154 = vmatpush1.msra.mxu0 0.0
    %2155 = vmatprep.subr.mxu0 0.0
    %2156 = vmatpush1.msra.mxu0 0.0
    %2157 = vmatprep.subr.mxu0 0.0
    %2158 = vmatpush1.msra.mxu0 0.0
    %2159 = vmatprep.subr.mxu0 0.0
    %2160 = vmatpush1.msra.mxu0 0.0
    %2161 = vmatprep.subr.mxu0 0.0
    %2162 = vmatpush1.msra.mxu0 0.0
    %2163 = vmatprep.mubr.f32.mxu0 0.0
    %v2164 = vand.u32 %v722, 4294901760
    %v2165 = vsub.f32 %v722, %v2164
    %2166 = vmatmul.mubr.f32.gmra.mrb[0].mxu0 %v2165
    %v2167 = vpop.f32.mrb[0].mxu0
    %v2168 = vadd.f32 %v2082, %v2167
    %v2169 = vpop.f32.mrb[0].mxu0
    %2170 = vmatprep.mubr.f32.mxu0 0.0
    %v2171 = vand.u32 %v725, 4294901760
    %v2172 = vsub.f32 %v725, %v2171
    %2173 = vmatmul.mubr.f32.gmra.mrb[0].mxu0 %v2172
    %v2174 = vpop.f32.mrb[0].mxu0
    %v2175 = vadd.f32 %v2088, %v2174
    %v2176 = vpop.f32.mrb[0].mxu0
    %2177 = vdwg.mxu0
    %2178 = vmatprep.subr.mxu0 0.0
    %v2179 = vand.u32 %v1901, 4294901760
    %2180 = vmatpush1.msra.mxu0 %v2179
    %2181 = vmatprep.subr.mxu0 0.0
    %v2182 = vand.u32 %v1902, 4294901760
    %2183 = vmatpush1.msra.mxu0 %v2182
    %2184 = vmatprep.subr.mxu0 0.0
    %v2185 = vand.u32 %v1903, 4294901760
    %2186 = vmatpush1.msra.mxu0 %v2185
    %2187 = vmatprep.subr.mxu0 0.0
    %v2188 = vand.u32 %v1904, 4294901760
    %2189 = vmatpush1.msra.mxu0 %v2188
    %2190 = vmatprep.subr.mxu0 0.0
    %2191 = vmatpush1.msra.mxu0 0.0
    %2192 = vmatprep.subr.mxu0 0.0
    %2193 = vmatpush1.msra.mxu0 0.0
    %2194 = vmatprep.subr.mxu0 0.0
    %2195 = vmatpush1.msra.mxu0 0.0
    %2196 = vmatprep.subr.mxu0 0.0
    %2197 = vmatpush1.msra.mxu0 0.0
    %2198 = vmatprep.subr.mxu0 0.0
    %2199 = vmatpush1.msra.mxu0 0.0
    %2200 = vmatprep.subr.mxu0 0.0
    %2201 = vmatpush1.msra.mxu0 0.0
    %2202 = vmatprep.subr.mxu0 0.0
    %2203 = vmatpush1.msra.mxu0 0.0
    %2204 = vmatprep.subr.mxu0 0.0
    %2205 = vmatpush1.msra.mxu0 0.0
    %2206 = vmatprep.subr.mxu0 0.0
    %2207 = vmatpush1.msra.mxu0 0.0
    %2208 = vmatprep.subr.mxu0 0.0
    %2209 = vmatpush1.msra.mxu0 0.0
    %2210 = vmatprep.subr.mxu0 0.0
    %2211 = vmatpush1.msra.mxu0 0.0
    %2212 = vmatprep.subr.mxu0 0.0
    %2213 = vmatpush1.msra.mxu0 0.0
    %2214 = vmatprep.subr.mxu0 0.0
    %2215 = vmatpush1.msra.mxu0 0.0
    %2216 = vmatprep.subr.mxu0 0.0
    %2217 = vmatpush1.msra.mxu0 0.0
    %2218 = vmatprep.subr.mxu0 0.0
    %2219 = vmatpush1.msra.mxu0 0.0
    %2220 = vmatprep.subr.mxu0 0.0
    %2221 = vmatpush1.msra.mxu0 0.0
    %2222 = vmatprep.subr.mxu0 0.0
    %2223 = vmatpush1.msra.mxu0 0.0
    %2224 = vmatprep.subr.mxu0 0.0
    %2225 = vmatpush1.msra.mxu0 0.0
    %2226 = vmatprep.subr.mxu0 0.0
    %2227 = vmatpush1.msra.mxu0 0.0
    %2228 = vmatprep.subr.mxu0 0.0
    %2229 = vmatpush1.msra.mxu0 0.0
    %2230 = vmatprep.subr.mxu0 0.0
    %2231 = vmatpush1.msra.mxu0 0.0
    %2232 = vmatprep.subr.mxu0 0.0
    %2233 = vmatpush1.msra.mxu0 0.0
    %2234 = vmatprep.subr.mxu0 0.0
    %2235 = vmatpush1.msra.mxu0 0.0
    %2236 = vmatprep.subr.mxu0 0.0
    %2237 = vmatpush1.msra.mxu0 0.0
    %2238 = vmatprep.subr.mxu0 0.0
    %2239 = vmatpush1.msra.mxu0 0.0
    %2240 = vmatprep.subr.mxu0 0.0
    %2241 = vmatpush1.msra.mxu0 0.0
    %2242 = vmatprep.subr.mxu0 0.0
    %2243 = vmatpush1.msra.mxu0 0.0
    %2244 = vmatprep.subr.mxu0 0.0
    %2245 = vmatpush1.msra.mxu0 0.0
    %2246 = vmatprep.mubr.f32.mxu0 0.0
    %v2247 = vand.u32 %v722, 4294901760
    %v2248 = vsub.f32 %v722, %v2247
    %v2249 = vand.u32 %v2248, 4294901760
    %2250 = vmatmul.mubr.f32.gmra.mrb[0].mxu0 %v2249
    %v2251 = vpop.f32.mrb[0].mxu0
    %v2252 = vadd.f32 %v2168, %v2251
    %v2253 = vpop.f32.mrb[0].mxu0
    %2254 = vmatprep.mubr.f32.mxu0 0.0
    %v2255 = vand.u32 %v725, 4294901760
    %v2256 = vsub.f32 %v725, %v2255
    %v2257 = vand.u32 %v2256, 4294901760
    %2258 = vmatmul.mubr.f32.gmra.mrb[0].mxu0 %v2257
    %v2259 = vpop.f32.mrb[0].mxu0
    %v2260 = vadd.f32 %v2175, %v2259
    %v2261 = vpop.f32.mrb[0].mxu0
    %2262 = vdwg.mxu0
    %2263 = vmatprep.subr.mxu0 0.0
    %v2264 = vand.u32 %v1901, 4294901760
    %v2265 = vsub.f32 %v1901, %v2264
    %v2266 = vand.u32 %v2265, 4294901760
    %2267 = vmatpush1.msra.mxu0 %v2266
    %2268 = vmatprep.subr.mxu0 0.0
    %v2269 = vand.u32 %v1902, 4294901760
    %v2270 = vsub.f32 %v1902, %v2269
    %v2271 = vand.u32 %v2270, 4294901760
    %2272 = vmatpush1.msra.mxu0 %v2271
    %2273 = vmatprep.subr.mxu0 0.0
    %v2274 = vand.u32 %v1903, 4294901760
    %v2275 = vsub.f32 %v1903, %v2274
    %v2276 = vand.u32 %v2275, 4294901760
    %2277 = vmatpush1.msra.mxu0 %v2276
    %2278 = vmatprep.subr.mxu0 0.0
    %v2279 = vand.u32 %v1904, 4294901760
    %v2280 = vsub.f32 %v1904, %v2279
    %v2281 = vand.u32 %v2280, 4294901760
    %2282 = vmatpush1.msra.mxu0 %v2281
    %2283 = vmatprep.subr.mxu0 0.0
    %2284 = vmatpush1.msra.mxu0 0.0
    %2285 = vmatprep.subr.mxu0 0.0
    %2286 = vmatpush1.msra.mxu0 0.0
    %2287 = vmatprep.subr.mxu0 0.0
    %2288 = vmatpush1.msra.mxu0 0.0
    %2289 = vmatprep.subr.mxu0 0.0
    %2290 = vmatpush1.msra.mxu0 0.0
    %2291 = vmatprep.subr.mxu0 0.0
    %2292 = vmatpush1.msra.mxu0 0.0
    %2293 = vmatprep.subr.mxu0 0.0
    %2294 = vmatpush1.msra.mxu0 0.0
    %2295 = vmatprep.subr.mxu0 0.0
    %2296 = vmatpush1.msra.mxu0 0.0
    %2297 = vmatprep.subr.mxu0 0.0
    %2298 = vmatpush1.msra.mxu0 0.0
    %2299 = vmatprep.subr.mxu0 0.0
    %2300 = vmatpush1.msra.mxu0 0.0
    %2301 = vmatprep.subr.mxu0 0.0
    %2302 = vmatpush1.msra.mxu0 0.0
    %2303 = vmatprep.subr.mxu0 0.0
    %2304 = vmatpush1.msra.mxu0 0.0
    %2305 = vmatprep.subr.mxu0 0.0
    %2306 = vmatpush1.msra.mxu0 0.0
    %2307 = vmatprep.subr.mxu0 0.0
    %2308 = vmatpush1.msra.mxu0 0.0
    %2309 = vmatprep.subr.mxu0 0.0
    %2310 = vmatpush1.msra.mxu0 0.0
    %2311 = vmatprep.subr.mxu0 0.0
    %2312 = vmatpush1.msra.mxu0 0.0
    %2313 = vmatprep.subr.mxu0 0.0
    %2314 = vmatpush1.msra.mxu0 0.0
    %2315 = vmatprep.subr.mxu0 0.0
    %2316 = vmatpush1.msra.mxu0 0.0
    %2317 = vmatprep.subr.mxu0 0.0
    %2318 = vmatpush1.msra.mxu0 0.0
    %2319 = vmatprep.subr.mxu0 0.0
    %2320 = vmatpush1.msra.mxu0 0.0
    %2321 = vmatprep.subr.mxu0 0.0
    %2322 = vmatpush1.msra.mxu0 0.0
    %2323 = vmatprep.subr.mxu0 0.0
    %2324 = vmatpush1.msra.mxu0 0.0
    %2325 = vmatprep.subr.mxu0 0.0
    %2326 = vmatpush1.msra.mxu0 0.0
    %2327 = vmatprep.subr.mxu0 0.0
    %2328 = vmatpush1.msra.mxu0 0.0
    %2329 = vmatprep.subr.mxu0 0.0
    %2330 = vmatpush1.msra.mxu0 0.0
    %2331 = vmatprep.subr.mxu0 0.0
    %2332 = vmatpush1.msra.mxu0 0.0
    %2333 = vmatprep.subr.mxu0 0.0
    %2334 = vmatpush1.msra.mxu0 0.0
    %2335 = vmatprep.subr.mxu0 0.0
    %2336 = vmatpush1.msra.mxu0 0.0
    %2337 = vmatprep.subr.mxu0 0.0
    %2338 = vmatpush1.msra.mxu0 0.0
    %2339 = vmatprep.mubr.f32.mxu0 0.0
    %v2340 = vand.u32 %v722, 4294901760
    %2341 = vmatmul.mubr.f32.gmra.mrb[0].mxu0 %v2340
    %v2342 = vpop.f32.mrb[0].mxu0
    %v2343 = vadd.f32 %v2252, %v2342
    %v2344 = vpop.f32.mrb[0].mxu0
    %2345 = vmatprep.mubr.f32.mxu0 0.0
    %v2346 = vand.u32 %v725, 4294901760
    %2347 = vmatmul.mubr.f32.gmra.mrb[0].mxu0 %v2346
    %v2348 = vpop.f32.mrb[0].mxu0
    %v2349 = vadd.f32 %v2260, %v2348
    %v2350 = vpop.f32.mrb[0].mxu0
    %2351 = vdwg.mxu0
    %2352 = vmatprep.subr.mxu0 0.0
    %v2353 = vand.u32 %v1901, 4294901760
    %2354 = vmatpush1.msra.mxu0 %v2353
    %2355 = vmatprep.subr.mxu0 0.0
    %v2356 = vand.u32 %v1902, 4294901760
    %2357 = vmatpush1.msra.mxu0 %v2356
    %2358 = vmatprep.subr.mxu0 0.0
    %v2359 = vand.u32 %v1903, 4294901760
    %2360 = vmatpush1.msra.mxu0 %v2359
    %2361 = vmatprep.subr.mxu0 0.0
    %v2362 = vand.u32 %v1904, 4294901760
    %2363 = vmatpush1.msra.mxu0 %v2362
    %2364 = vmatprep.subr.mxu0 0.0
    %2365 = vmatpush1.msra.mxu0 0.0
    %2366 = vmatprep.subr.mxu0 0.0
    %2367 = vmatpush1.msra.mxu0 0.0
    %2368 = vmatprep.subr.mxu0 0.0
    %2369 = vmatpush1.msra.mxu0 0.0
    %2370 = vmatprep.subr.mxu0 0.0
    %2371 = vmatpush1.msra.mxu0 0.0
    %2372 = vmatprep.subr.mxu0 0.0
    %2373 = vmatpush1.msra.mxu0 0.0
    %2374 = vmatprep.subr.mxu0 0.0
    %2375 = vmatpush1.msra.mxu0 0.0
    %2376 = vmatprep.subr.mxu0 0.0
    %2377 = vmatpush1.msra.mxu0 0.0
    %2378 = vmatprep.subr.mxu0 0.0
    %2379 = vmatpush1.msra.mxu0 0.0
    %2380 = vmatprep.subr.mxu0 0.0
    %2381 = vmatpush1.msra.mxu0 0.0
    %2382 = vmatprep.subr.mxu0 0.0
    %2383 = vmatpush1.msra.mxu0 0.0
    %2384 = vmatprep.subr.mxu0 0.0
    %2385 = vmatpush1.msra.mxu0 0.0
    %2386 = vmatprep.subr.mxu0 0.0
    %2387 = vmatpush1.msra.mxu0 0.0
    %2388 = vmatprep.subr.mxu0 0.0
    %2389 = vmatpush1.msra.mxu0 0.0
    %2390 = vmatprep.subr.mxu0 0.0
    %2391 = vmatpush1.msra.mxu0 0.0
    %2392 = vmatprep.subr.mxu0 0.0
    %2393 = vmatpush1.msra.mxu0 0.0
    %2394 = vmatprep.subr.mxu0 0.0
    %2395 = vmatpush1.msra.mxu0 0.0
    %2396 = vmatprep.subr.mxu0 0.0
    %2397 = vmatpush1.msra.mxu0 0.0
    %2398 = vmatprep.subr.mxu0 0.0
    %2399 = vmatpush1.msra.mxu0 0.0
    %2400 = vmatprep.subr.mxu0 0.0
    %2401 = vmatpush1.msra.mxu0 0.0
    %2402 = vmatprep.subr.mxu0 0.0
    %2403 = vmatpush1.msra.mxu0 0.0
    %2404 = vmatprep.subr.mxu0 0.0
    %2405 = vmatpush1.msra.mxu0 0.0
    %2406 = vmatprep.subr.mxu0 0.0
    %2407 = vmatpush1.msra.mxu0 0.0
    %2408 = vmatprep.subr.mxu0 0.0
    %2409 = vmatpush1.msra.mxu0 0.0
    %2410 = vmatprep.subr.mxu0 0.0
    %2411 = vmatpush1.msra.mxu0 0.0
    %2412 = vmatprep.subr.mxu0 0.0
    %2413 = vmatpush1.msra.mxu0 0.0
    %2414 = vmatprep.subr.mxu0 0.0
    %2415 = vmatpush1.msra.mxu0 0.0
    %2416 = vmatprep.subr.mxu0 0.0
    %2417 = vmatpush1.msra.mxu0 0.0
    %2418 = vmatprep.subr.mxu0 0.0
    %2419 = vmatpush1.msra.mxu0 0.0
    %2420 = vmatprep.mubr.f32.mxu0 0.0
    %v2421 = vand.u32 %v722, 4294901760
    %2422 = vmatmul.mubr.f32.gmra.mrb[0].mxu0 %v2421
    %v2423 = vpop.f32.mrb[0].mxu0
    %v2424 = vadd.f32 %v2343, %v2423
    %v2425 = vpop.f32.mrb[0].mxu0
    %2426 = vmatprep.mubr.f32.mxu0 0.0
    %v2427 = vand.u32 %v725, 4294901760
    %2428 = vmatmul.mubr.f32.gmra.mrb[0].mxu0 %v2427
    %v2429 = vpop.f32.mrb[0].mxu0
    %v2430 = vadd.f32 %v2349, %v2429
    %v2431 = vpop.f32.mrb[0].mxu0
    %2432 = vdwg.mxu0
    %v2433 = vld [vmem:[%s13] sm:$0x1]
    %v2434 = vld [vmem:[%s14] sm:$0x1]
    %s2435 = sld [smem:[#allocation4]]
    %v2436 = vld [vmem:[#allocation2] sm:$0xff]
    %v2437 = vld [vmem:[#allocation2 + $0x8] sm:$0xff]
    %v2440 = vcombine.high %v2436, %v2436
    %v2442 = vunpack.c.l.s4 1966171168
    %v2443 = vunpack.c.0.s8 %v2442
    %v2444 = vlaneseq
    %v2445 = vshrl.u32 %v2444, 7
    %v2446 = vsub.s32 %v2443, %v2445
    %v2447 = vrot.slane %v2436, %v2446
    %v2449 = vunpack.c.l.s4 1966171168
    %v2450 = vunpack.c.0.s8 %v2449
    %v2451 = vlaneseq
    %v2452 = vshrl.u32 %v2451, 7
    %v2453 = vsub.s32 %v2450, %v2452
    %v2454 = vrot.slane %v2440, %v2453
    %v2455 = vcombine.high %v2447, %v2447
    %v2456 = vcombine.high %v2454, %v2454
    %v2458 = vunpack.c.l.s4 1966171168
    %v2459 = vunpack.c.0.s8 %v2458
    %v2460 = vlaneseq
    %v2461 = vshrl.u32 %v2460, 7
    %v2462 = vsub.s32 %v2459, %v2461
    %v2463 = vrot.slane %v2447, %v2462
    %v2465 = vunpack.c.l.s4 1966171168
    %v2466 = vunpack.c.0.s8 %v2465
    %v2467 = vlaneseq
    %v2468 = vshrl.u32 %v2467, 7
    %v2469 = vsub.s32 %v2466, %v2468
    %v2470 = vrot.slane %v2454, %v2469
    %v2472 = vunpack.c.l.s4 1966171168
    %v2473 = vunpack.c.0.s8 %v2472
    %v2474 = vlaneseq
    %v2475 = vshrl.u32 %v2474, 7
    %v2476 = vsub.s32 %v2473, %v2475
    %v2477 = vrot.slane %v2455, %v2476
    %v2479 = vunpack.c.l.s4 1966171168
    %v2480 = vunpack.c.0.s8 %v2479
    %v2481 = vlaneseq
    %v2482 = vshrl.u32 %v2481, 7
    %v2483 = vsub.s32 %v2480, %v2482
    %v2484 = vrot.slane %v2456, %v2483
    %v2485 = vcombine.high %v2463, %v2463
    %v2486 = vcombine.high %v2470, %v2470
    %v2487 = vcombine.high %v2477, %v2477
    %v2488 = vcombine.high %v2484, %v2484
    %v2489 = vcombine.high %v2437, %v2437
    %v2491 = vunpack.c.l.s4 1966171168
    %v2492 = vunpack.c.0.s8 %v2491
    %v2493 = vlaneseq
    %v2494 = vshrl.u32 %v2493, 7
    %v2495 = vsub.s32 %v2492, %v2494
    %v2496 = vrot.slane %v2437, %v2495
    %v2498 = vunpack.c.l.s4 1966171168
    %v2499 = vunpack.c.0.s8 %v2498
    %v2500 = vlaneseq
    %v2501 = vshrl.u32 %v2500, 7
    %v2502 = vsub.s32 %v2499, %v2501
    %v2503 = vrot.slane %v2489, %v2502
    %v2504 = vcombine.high %v2496, %v2496
    %v2505 = vcombine.high %v2503, %v2503
    %v2507 = vunpack.c.l.s4 1966171168
    %v2508 = vunpack.c.0.s8 %v2507
    %v2509 = vlaneseq
    %v2510 = vshrl.u32 %v2509, 7
    %v2511 = vsub.s32 %v2508, %v2510
    %v2512 = vrot.slane %v2496, %v2511
    %v2514 = vunpack.c.l.s4 1966171168
    %v2515 = vunpack.c.0.s8 %v2514
    %v2516 = vlaneseq
    %v2517 = vshrl.u32 %v2516, 7
    %v2518 = vsub.s32 %v2515, %v2517
    %v2519 = vrot.slane %v2503, %v2518
    %v2521 = vunpack.c.l.s4 1966171168
    %v2522 = vunpack.c.0.s8 %v2521
    %v2523 = vlaneseq
    %v2524 = vshrl.u32 %v2523, 7
    %v2525 = vsub.s32 %v2522, %v2524
    %v2526 = vrot.slane %v2504, %v2525
    %v2528 = vunpack.c.l.s4 1966171168
    %v2529 = vunpack.c.0.s8 %v2528
    %v2530 = vlaneseq
    %v2531 = vshrl.u32 %v2530, 7
    %v2532 = vsub.s32 %v2529, %v2531
    %v2533 = vrot.slane %v2505, %v2532
    %v2534 = vcombine.high %v2512, %v2512
    %v2535 = vcombine.high %v2519, %v2519
    %v2536 = vcombine.high %v2526, %v2526
    %v2537 = vcombine.high %v2533, %v2533
    %v2538 = vlaneseq
    %v2539 = vshrl.u32 %v2538, 7
    %v2540 = vsub.s32 0, %v2539
    %v2541 = vrot.slane %v2463, %v2540
    %v2542 = vlaneseq
    %v2543 = vshrl.u32 %v2542, 7
    %v2544 = vsub.s32 0, %v2543
    %v2545 = vrot.slane %v2477, %v2544
    %v2546 = vlaneseq
    %v2547 = vshrl.u32 %v2546, 7
    %v2548 = vsub.s32 0, %v2547
    %v2549 = vrot.slane %v2485, %v2548
    %v2550 = vlaneseq
    %v2551 = vshrl.u32 %v2550, 7
    %v2552 = vsub.s32 0, %v2551
    %v2553 = vrot.slane %v2487, %v2552
    %v2554 = vlaneseq
    %v2555 = vshrl.u32 %v2554, 7
    %v2556 = vsub.s32 0, %v2555
    %v2557 = vrot.slane %v2470, %v2556
    %v2558 = vlaneseq
    %v2559 = vshrl.u32 %v2558, 7
    %v2560 = vsub.s32 0, %v2559
    %v2561 = vrot.slane %v2484, %v2560
    %v2562 = vlaneseq
    %v2563 = vshrl.u32 %v2562, 7
    %v2564 = vsub.s32 0, %v2563
    %v2565 = vrot.slane %v2486, %v2564
    %v2566 = vlaneseq
    %v2567 = vshrl.u32 %v2566, 7
    %v2568 = vsub.s32 0, %v2567
    %v2569 = vrot.slane %v2488, %v2568
    %v2570 = vlaneseq
    %v2571 = vshrl.u32 %v2570, 7
    %v2572 = vsub.s32 0, %v2571
    %v2573 = vrot.slane %v2512, %v2572
    %v2574 = vlaneseq
    %v2575 = vshrl.u32 %v2574, 7
    %v2576 = vsub.s32 0, %v2575
    %v2577 = vrot.slane %v2526, %v2576
    %v2578 = vlaneseq
    %v2579 = vshrl.u32 %v2578, 7
    %v2580 = vsub.s32 0, %v2579
    %v2581 = vrot.slane %v2534, %v2580
    %v2582 = vlaneseq
    %v2583 = vshrl.u32 %v2582, 7
    %v2584 = vsub.s32 0, %v2583
    %v2585 = vrot.slane %v2536, %v2584
    %v2586 = vlaneseq
    %v2587 = vshrl.u32 %v2586, 7
    %v2588 = vsub.s32 0, %v2587
    %v2589 = vrot.slane %v2519, %v2588
    %v2590 = vlaneseq
    %v2591 = vshrl.u32 %v2590, 7
    %v2592 = vsub.s32 0, %v2591
    %v2593 = vrot.slane %v2533, %v2592
    %v2594 = vlaneseq
    %v2595 = vshrl.u32 %v2594, 7
    %v2596 = vsub.s32 0, %v2595
    %v2597 = vrot.slane %v2535, %v2596
    %v2598 = vlaneseq
    %v2599 = vshrl.u32 %v2598, 7
    %v2600 = vsub.s32 0, %v2599
    %v2601 = vrot.slane %v2537, %v2600
    %v2618 = vadd.f32 %v2541, %v2424
    %v2619 = vadd.f32 %v2545, %v2424
    %v2620 = vadd.f32 %v2549, %v2424
    %v2621 = vadd.f32 %v2553, %v2424
    %v2622 = vadd.f32 %v2557, %v2424
    %v2623 = vadd.f32 %v2561, %v2424
    %v2624 = vadd.f32 %v2565, %v2424
    %v2625 = vadd.f32 %v2569, %v2424
    %v2626 = vadd.f32 %v2573, %v2430
    %v2627 = vadd.f32 %v2577, %v2430
    %v2628 = vadd.f32 %v2581, %v2430
    %v2629 = vadd.f32 %v2585, %v2430
    %v2630 = vadd.f32 %v2589, %v2430
    %v2631 = vadd.f32 %v2593, %v2430
    %v2632 = vadd.f32 %v2597, %v2430
    %v2633 = vadd.f32 %v2601, %v2430
    %v2635 = vlaneseq
    %v2636 = vshrl.u32 %v2635, 7
    %v2637 = vsub.s32 0, %v2636
    %v2638 = vrot.slane %v2433, %v2637
    %v2640 = vadd.f32 %v2618, %v2638
    %v2641 = vadd.f32 %v2619, %v2638
    %v2642 = vadd.f32 %v2620, %v2638
    %v2643 = vadd.f32 %v2621, %v2638
    %v2644 = vadd.f32 %v2622, %v2638
    %v2645 = vadd.f32 %v2623, %v2638
    %v2646 = vadd.f32 %v2624, %v2638
    %v2647 = vadd.f32 %v2625, %v2638
    %v2648 = vadd.f32 %v2626, %v2638
    %v2649 = vadd.f32 %v2627, %v2638
    %v2650 = vadd.f32 %v2628, %v2638
    %v2651 = vadd.f32 %v2629, %v2638
    %v2652 = vadd.f32 %v2630, %v2638
    %v2653 = vadd.f32 %v2631, %v2638
    %v2654 = vadd.f32 %v2632, %v2638
    %v2655 = vadd.f32 %v2633, %v2638
    %v2656 = vmax.f32 %v2640, 0.0
    %v2657 = vmax.f32 %v2641, 0.0
    %v2658 = vmax.f32 %v2642, 0.0
    %v2659 = vmax.f32 %v2643, 0.0
    %v2660 = vmax.f32 %v2644, 0.0
    %v2661 = vmax.f32 %v2645, 0.0
    %v2662 = vmax.f32 %v2646, 0.0
    %v2663 = vmax.f32 %v2647, 0.0
    %v2664 = vmax.f32 %v2648, 0.0
    %v2665 = vmax.f32 %v2649, 0.0
    %v2666 = vmax.f32 %v2650, 0.0
    %v2667 = vmax.f32 %v2651, 0.0
    %v2668 = vmax.f32 %v2652, 0.0
    %v2669 = vmax.f32 %v2653, 0.0
    %v2670 = vmax.f32 %v2654, 0.0
    %v2671 = vmax.f32 %v2655, 0.0
    %v2673 = vlaneseq
    %v2674 = vshrl.u32 %v2673, 7
    %v2675 = vsub.s32 0, %v2674
    %v2676 = vrot.slane %v2434, %v2675
    %v2678 = vmul.f32 %v2656, %v2676
    %v2679 = vmul.f32 %v2657, %v2676
    %v2680 = vmul.f32 %v2658, %v2676
    %v2681 = vmul.f32 %v2659, %v2676
    %v2682 = vmul.f32 %v2660, %v2676
    %v2683 = vmul.f32 %v2661, %v2676
    %v2684 = vmul.f32 %v2662, %v2676
    %v2685 = vmul.f32 %v2663, %v2676
    %v2686 = vmul.f32 %v2664, %v2676
    %v2687 = vmul.f32 %v2665, %v2676
    %v2688 = vmul.f32 %v2666, %v2676
    %v2689 = vmul.f32 %v2667, %v2676
    %v2690 = vmul.f32 %v2668, %v2676
    %v2691 = vmul.f32 %v2669, %v2676
    %v2692 = vmul.f32 %v2670, %v2676
    %v2693 = vmul.f32 %v2671, %v2676
    %v2694 = vsel %vm122, %v2678, 0.0
    %2695 = vadd.xlane.f32.xlu0 %v2694
    %v2696 = vpop.xlane.xlu0 %2695
    %v2697 = vsel %vm122, %v2679, 0.0
    %2698 = vadd.xlane.f32.xlu0 %v2697
    %v2699 = vpop.xlane.xlu0 %2698
    %v2700 = vsel %vm122, %v2680, 0.0
    %2701 = vadd.xlane.f32.xlu0 %v2700
    %v2702 = vpop.xlane.xlu0 %2701
    %v2703 = vsel %vm122, %v2681, 0.0
    %2704 = vadd.xlane.f32.xlu0 %v2703
    %v2705 = vpop.xlane.xlu0 %2704
    %v2706 = vsel %vm122, %v2682, 0.0
    %2707 = vadd.xlane.f32.xlu0 %v2706
    %v2708 = vpop.xlane.xlu0 %2707
    %v2709 = vsel %vm122, %v2683, 0.0
    %2710 = vadd.xlane.f32.xlu0 %v2709
    %v2711 = vpop.xlane.xlu0 %2710
    %v2712 = vsel %vm122, %v2684, 0.0
    %2713 = vadd.xlane.f32.xlu0 %v2712
    %v2714 = vpop.xlane.xlu0 %2713
    %v2715 = vsel %vm122, %v2685, 0.0
    %2716 = vadd.xlane.f32.xlu0 %v2715
    %v2717 = vpop.xlane.xlu0 %2716
    %v2718 = vsel %vm122, %v2686, 0.0
    %2719 = vadd.xlane.f32.xlu0 %v2718
    %v2720 = vpop.xlane.xlu0 %2719
    %v2721 = vsel %vm122, %v2687, 0.0
    %2722 = vadd.xlane.f32.xlu0 %v2721
    %v2723 = vpop.xlane.xlu0 %2722
    %v2724 = vsel %vm122, %v2688, 0.0
    %2725 = vadd.xlane.f32.xlu0 %v2724
    %v2726 = vpop.xlane.xlu0 %2725
    %v2727 = vsel %vm122, %v2689, 0.0
    %2728 = vadd.xlane.f32.xlu0 %v2727
    %v2729 = vpop.xlane.xlu0 %2728
    %v2730 = vsel %vm122, %v2690, 0.0
    %2731 = vadd.xlane.f32.xlu0 %v2730
    %v2732 = vpop.xlane.xlu0 %2731
    %v2733 = vsel %vm122, %v2691, 0.0
    %2734 = vadd.xlane.f32.xlu0 %v2733
    %v2735 = vpop.xlane.xlu0 %2734
    %v2736 = vsel %vm122, %v2692, 0.0
    %2737 = vadd.xlane.f32.xlu0 %v2736
    %v2738 = vpop.xlane.xlu0 %2737
    %v2739 = vsel %vm122, %v2693, 0.0
    %2740 = vadd.xlane.f32.xlu0 %v2739
    %v2741 = vpop.xlane.xlu0 %2740
    %v2742 = vstv %s2435
    %v2743 = vadd.f32 %v2696, %v2742
    %v2744 = vadd.f32 %v2699, %v2742
    %v2745 = vadd.f32 %v2702, %v2742
    %v2746 = vadd.f32 %v2705, %v2742
    %v2747 = vadd.f32 %v2708, %v2742
    %v2748 = vadd.f32 %v2711, %v2742
    %v2749 = vadd.f32 %v2714, %v2742
    %v2750 = vadd.f32 %v2717, %v2742
    %v2751 = vadd.f32 %v2720, %v2742
    %v2752 = vadd.f32 %v2723, %v2742
    %v2753 = vadd.f32 %v2726, %v2742
    %v2754 = vadd.f32 %v2729, %v2742
    %v2755 = vadd.f32 %v2732, %v2742
    %v2756 = vadd.f32 %v2735, %v2742
    %v2757 = vadd.f32 %v2738, %v2742
    %v2758 = vadd.f32 %v2741, %v2742
    %v2759 = vsub.f32 0.0, %v2743
    %v2760 = vsub.f32 0.0, %v2744
    %v2761 = vsub.f32 0.0, %v2745
    %v2762 = vsub.f32 0.0, %v2746
    %v2763 = vsub.f32 0.0, %v2747
    %v2764 = vsub.f32 0.0, %v2748
    %v2765 = vsub.f32 0.0, %v2749
    %v2766 = vsub.f32 0.0, %v2750
    %v2767 = vsub.f32 0.0, %v2751
    %v2768 = vsub.f32 0.0, %v2752
    %v2769 = vsub.f32 0.0, %v2753
    %v2770 = vsub.f32 0.0, %v2754
    %v2771 = vsub.f32 0.0, %v2755
    %v2772 = vsub.f32 0.0, %v2756
    %v2773 = vsub.f32 0.0, %v2757
    %v2774 = vsub.f32 0.0, %v2758
    %v2775 = vmul.f32 %v2759, 1.442695
    %v2776 = vpow.pop %v2775
    %v2777 = vmul.f32 %v2760, 1.442695
    %v2778 = vpow.pop %v2777
    %v2779 = vmul.f32 %v2761, 1.442695
    %v2780 = vpow.pop %v2779
    %v2781 = vmul.f32 %v2762, 1.442695
    %v2782 = vpow.pop %v2781
    %v2783 = vmul.f32 %v2763, 1.442695
    %v2784 = vpow.pop %v2783
    %v2785 = vmul.f32 %v2764, 1.442695
    %v2786 = vpow.pop %v2785
    %v2787 = vmul.f32 %v2765, 1.442695
    %v2788 = vpow.pop %v2787
    %v2789 = vmul.f32 %v2766, 1.442695
    %v2790 = vpow.pop %v2789
    %v2791 = vmul.f32 %v2767, 1.442695
    %v2792 = vpow.pop %v2791
    %v2793 = vmul.f32 %v2768, 1.442695
    %v2794 = vpow.pop %v2793
    %v2795 = vmul.f32 %v2769, 1.442695
    %v2796 = vpow.pop %v2795
    %v2797 = vmul.f32 %v2770, 1.442695
    %v2798 = vpow.pop %v2797
    %v2799 = vmul.f32 %v2771, 1.442695
    %v2800 = vpow.pop %v2799
    %v2801 = vmul.f32 %v2772, 1.442695
    %v2802 = vpow.pop %v2801
    %v2803 = vmul.f32 %v2773, 1.442695
    %v2804 = vpow.pop %v2803
    %v2805 = vmul.f32 %v2774, 1.442695
    %v2806 = vpow.pop %v2805
    %v2807 = vadd.f32 %v2776, 1.0
    %v2808 = vadd.f32 %v2778, 1.0
    %v2809 = vadd.f32 %v2780, 1.0
    %v2810 = vadd.f32 %v2782, 1.0
    %v2811 = vadd.f32 %v2784, 1.0
    %v2812 = vadd.f32 %v2786, 1.0
    %v2813 = vadd.f32 %v2788, 1.0
    %v2814 = vadd.f32 %v2790, 1.0
    %v2815 = vadd.f32 %v2792, 1.0
    %v2816 = vadd.f32 %v2794, 1.0
    %v2817 = vadd.f32 %v2796, 1.0
    %v2818 = vadd.f32 %v2798, 1.0
    %v2819 = vadd.f32 %v2800, 1.0
    %v2820 = vadd.f32 %v2802, 1.0
    %v2821 = vadd.f32 %v2804, 1.0
    %v2822 = vadd.f32 %v2806, 1.0
    %v2823 = vrcp.pop %v2807
    %v2824 = vmul.f32 1.0, %v2823
    %v2825 = vrcp.pop %v2808
    %v2826 = vmul.f32 1.0, %v2825
    %v2827 = vrcp.pop %v2809
    %v2828 = vmul.f32 1.0, %v2827
    %v2829 = vrcp.pop %v2810
    %v2830 = vmul.f32 1.0, %v2829
    %v2831 = vrcp.pop %v2811
    %v2832 = vmul.f32 1.0, %v2831
    %v2833 = vrcp.pop %v2812
    %v2834 = vmul.f32 1.0, %v2833
    %v2835 = vrcp.pop %v2813
    %v2836 = vmul.f32 1.0, %v2835
    %v2837 = vrcp.pop %v2814
    %v2838 = vmul.f32 1.0, %v2837
    %v2839 = vrcp.pop %v2815
    %v2840 = vmul.f32 1.0, %v2839
    %v2841 = vrcp.pop %v2816
    %v2842 = vmul.f32 1.0, %v2841
    %v2843 = vrcp.pop %v2817
    %v2844 = vmul.f32 1.0, %v2843
    %v2845 = vrcp.pop %v2818
    %v2846 = vmul.f32 1.0, %v2845
    %v2847 = vrcp.pop %v2819
    %v2848 = vmul.f32 1.0, %v2847
    %v2849 = vrcp.pop %v2820
    %v2850 = vmul.f32 1.0, %v2849
    %v2851 = vrcp.pop %v2821
    %v2852 = vmul.f32 1.0, %v2851
    %v2853 = vrcp.pop %v2822
    %v2854 = vmul.f32 1.0, %v2853
    %v2855 = vlaneseq
    %v2856 = vshrl.u32 %v2855, 7
    %vm2857 = vcmp.eq.s32.totalorder %v2856, %v1279
    %v2874 = vlaneseq
    %v2875 = vshrl.u32 %v2874, 7
    %v2876 = vsub.s32 %v1279, %v2875
    %v2877 = vrot.slane %v2824, %v2876
    %v2878 = vlaneseq
    %v2879 = vshrl.u32 %v2878, 7
    %v2880 = vsub.s32 %v1279, %v2879
    %v2881 = vrot.slane %v2826, %v2880
    %v2882 = vlaneseq
    %v2883 = vshrl.u32 %v2882, 7
    %v2884 = vsub.s32 %v1279, %v2883
    %v2885 = vrot.slane %v2828, %v2884
    %v2886 = vlaneseq
    %v2887 = vshrl.u32 %v2886, 7
    %v2888 = vsub.s32 %v1279, %v2887
    %v2889 = vrot.slane %v2830, %v2888
    %v2890 = vlaneseq
    %v2891 = vshrl.u32 %v2890, 7
    %v2892 = vsub.s32 %v1279, %v2891
    %v2893 = vrot.slane %v2832, %v2892
    %v2894 = vlaneseq
    %v2895 = vshrl.u32 %v2894, 7
    %v2896 = vsub.s32 %v1279, %v2895
    %v2897 = vrot.slane %v2834, %v2896
    %v2898 = vlaneseq
    %v2899 = vshrl.u32 %v2898, 7
    %v2900 = vsub.s32 %v1279, %v2899
    %v2901 = vrot.slane %v2836, %v2900
    %v2902 = vlaneseq
    %v2903 = vshrl.u32 %v2902, 7
    %v2904 = vsub.s32 %v1279, %v2903
    %v2905 = vrot.slane %v2838, %v2904
    %v2906 = vlaneseq
    %v2907 = vshrl.u32 %v2906, 7
    %v2908 = vsub.s32 %v1279, %v2907
    %v2909 = vrot.slane %v2840, %v2908
    %v2910 = vlaneseq
    %v2911 = vshrl.u32 %v2910, 7
    %v2912 = vsub.s32 %v1279, %v2911
    %v2913 = vrot.slane %v2842, %v2912
    %v2914 = vlaneseq
    %v2915 = vshrl.u32 %v2914, 7
    %v2916 = vsub.s32 %v1279, %v2915
    %v2917 = vrot.slane %v2844, %v2916
    %v2918 = vlaneseq
    %v2919 = vshrl.u32 %v2918, 7
    %v2920 = vsub.s32 %v1279, %v2919
    %v2921 = vrot.slane %v2846, %v2920
    %v2922 = vlaneseq
    %v2923 = vshrl.u32 %v2922, 7
    %v2924 = vsub.s32 %v1279, %v2923
    %v2925 = vrot.slane %v2848, %v2924
    %v2926 = vlaneseq
    %v2927 = vshrl.u32 %v2926, 7
    %v2928 = vsub.s32 %v1279, %v2927
    %v2929 = vrot.slane %v2850, %v2928
    %v2930 = vlaneseq
    %v2931 = vshrl.u32 %v2930, 7
    %v2932 = vsub.s32 %v1279, %v2931
    %v2933 = vrot.slane %v2852, %v2932
    %v2934 = vlaneseq
    %v2935 = vshrl.u32 %v2934, 7
    %v2936 = vsub.s32 %v1279, %v2935
    %v2937 = vrot.slane %v2854, %v2936
    %v2938 = vsel %vm1288, %v2881, %v2877
    %vm2939 = vcmask 1042434
    %v2940 = vsel %vm2939, %v2885, %v2938
    %vm2941 = vcmask 1043459
    %v2942 = vsel %vm2941, %v2889, %v2940
    %vm2943 = vcmask 1044484
    %v2944 = vsel %vm2943, %v2893, %v2942
    %vm2945 = vcmask 1045509
    %v2946 = vsel %vm2945, %v2897, %v2944
    %vm2947 = vcmask 1046534
    %v2948 = vsel %vm2947, %v2901, %v2946
    %vm2949 = vcmask 1047559
    %v2950 = vsel %vm2949, %v2905, %v2948
    %v2951 = vsel %vm1288, %v2913, %v2909
    %v2952 = vsel %vm2939, %v2917, %v2951
    %v2953 = vsel %vm2941, %v2921, %v2952
    %v2954 = vsel %vm2943, %v2925, %v2953
    %v2955 = vsel %vm2945, %v2929, %v2954
    %v2956 = vsel %vm2947, %v2933, %v2955
    %v2957 = vsel %vm2949, %v2937, %v2956
    %v2960 = vsel %vm2857, 0.0, %v2950
    %v2961 = vsel %vm2857, 0.0, %v2957
    %vm2962 = vcmask 64512
    %2963 = vst.msk [vmem:[#allocation7] sm:$0xff] %vm2962, %v2960
    %2964 = vst.msk [vmem:[#allocation7 + $0x8] sm:$0xff] %vm2962, %v2961
    // Predicated region
    $region62: #{tpu_custom_call.1} parent=1 // pred_check
      _
    $region63: #{tpu_custom_call.1} parent=1 // pred_check_branch
      %2966 = sbr.rel (0) target = $region65
    $region64: #{tpu_custom_call.1} parent=1 // pred_region
      %s2968 = ssub.s32 32, 32
      %2969 = vsyncadd [#allocation6], %s2968
      %s2971 = sshll.u32 [#allocation5], 4
      %s2972 = int_to_ptr.vmem [resolvable:$true] %s2971
      %2974 = dma.vmem_to_hbm [thread:$0]  %s2972, 32, %s15, [#allocation6]
    $region65: #{tpu_custom_call.1} parent=1 // pred_fallthru
      _
    // Predicated region
    $region66: #{tpu_custom_call.1} parent=1 // pred_check
      _
    $region67: #{tpu_custom_call.1} parent=1 // pred_check_branch
      %2976 = sbr.rel (0) target = $region69
    $region68: #{tpu_custom_call.1} parent=1 // pred_region
      %s2978 = ssub.s32 256, 256
      %2979 = vsyncadd [#allocation8], %s2978
      %s2980 = sshll.u32 [#allocation7], 4
      %s2981 = int_to_ptr.vmem [resolvable:$true] %s2980
      %2986 = dma.vmem_to_hbm [thread:$0]  %s2981, 256, %s16, [#allocation8], 128, 128, 8
    $region69: #{tpu_custom_call.1} parent=1 // pred_fallthru
      _
    // Predicated region
    $region70: #{tpu_custom_call.1} parent=1 // pred_check
      _
    $region71: #{tpu_custom_call.1} parent=1 // pred_check_branch
      %2988 = sbr.rel (0) target = $region73
    $region72: #{tpu_custom_call.1} parent=1 // pred_region
      %2989 = dma.done [#allocation6], 32
    $region73: #{tpu_custom_call.1} parent=1 // pred_fallthru
      _
    // Predicated region
    $region74: #{tpu_custom_call.1} parent=1 // pred_check
      _
    $region75: #{tpu_custom_call.1} parent=1 // pred_check_branch
      %2991 = sbr.rel (0) target = $region77
    $region76: #{tpu_custom_call.1} parent=1 // pred_region
      %2992 = dma.done [#allocation8], 256
    $region77: #{tpu_custom_call.1} parent=1 // pred_fallthru
      _
    %2993 = vsyncpa [#allocation6], 1
    %2994 = vsyncpa [#allocation8], 1

</llo_original>
